<compile_context>
chip_gen: v7x
topology: tpu7x:2x2x1
jax: 0.10.0
libtpu: 0.0.40
codegen_flags: <defaults>
</compile_context>

<pallas_src>
import functools

import jax
import jax.numpy as jnp
from jax import lax
from jax.experimental import pallas as pl
from jax.experimental.pallas import tpu as pltpu


# ---------------------------------------------------------------------------
# Fully fused kernel: 3 x (GCNConv+ReLU -> SAG score -> top-k -> gate ->
# max/add pool) -> 3-layer MLP head.
# ---------------------------------------------------------------------------

def hiernet_kernel(a0_ref, x_ref, member_ref, membert_ref, same_ref, hls_ref,
                   cw0_ref, cb0_ref, cw1_ref, cb1_ref, cw2_ref, cb2_ref,
                   pw0_ref, pw1_ref, pw2_ref,
                   w0m_ref, w0a_ref, w0h_ref, b0_ref,
                   w1_ref, b1_ref, w2_ref,
                   scal_ref,
                   out_ref, *, ratio, num_graphs):
    f32 = jnp.float32
    bf16 = jnp.bfloat16
    n = x_ref.shape[0]
    nb = num_graphs
    hidden = cw0_ref.shape[1]

    # loaded once, reused by all 3 layers
    a0 = a0_ref[...]                                   # (N,N) f32, unmasked
    a0_b = a0.astype(bf16)
    same = same_ref[...]                               # (N,N) 0/1
    member = member_ref[...]                           # (B,N) 0/1
    member_b = member.astype(bf16)
    membert = membert_ref[...]                         # (N,B) 0/1

    row_i = lax.broadcasted_iota(jnp.int32, (n, n), 0)
    col_i = lax.broadcasted_iota(jnp.int32, (n, n), 1)
    tie = col_i < row_i                                # j < i  (index tie-break)
    g_iota = lax.broadcasted_iota(jnp.int32, (nb, 1), 0)
    ones_col = jnp.ones((n, 1), f32)
    neg = jnp.float32(-1e30)

    x = x_ref[...]                                     # carried state, f32
    act = jnp.ones((n, 1), f32)                        # active-node mask
    max_sum = jnp.zeros((nb, hidden), f32)
    add_sum = jnp.zeros((nb, hidden), f32)

    conv_refs = ((cw0_ref, cb0_ref), (cw1_ref, cb1_ref), (cw2_ref, cb2_ref))
    pool_refs = (pw0_ref, pw1_ref, pw2_ref)

    for li in range(3):                                # static unroll
        w_ref, b_ref = conv_refs[li]
        p_ref = pool_refs[li]

        # ---- gcn_norm degrees on the act-masked graph (+1 self loop/active) ----
        deg = act * (jnp.dot(a0, act, preferred_element_type=f32) + 1.0)   # f32 exact
        dinv = jnp.where(deg > 0.0, lax.rsqrt(jnp.maximum(deg, 1.0)), 0.0)  # (N,1)

        # ---- GCNConv + ReLU:  relu(A_hat @ (x @ W) + b), factored (no (N,N) temps)
        xw = jnp.dot(x.astype(bf16), w_ref[...].astype(bf16),
                     preferred_element_type=f32)                            # (N,H)
        u = dinv * xw
        neigh = jnp.dot(a0_b, u.astype(bf16), preferred_element_type=f32)
        h = jnp.maximum(dinv * (neigh + u) + b_ref[...], 0.0)               # (N,H)

        # ---- SAG scoring GraphConv(H->1), merged [wrel | wroot] -> (N,2) ----
        xp = jnp.dot(h.astype(bf16), p_ref[...].astype(bf16),
                     preferred_element_type=f32)
        xr = xp[:, 0:1]
        xroot = xp[:, 1:2]
        sneigh = jnp.dot(a0_b, (act * xr).astype(bf16),
                         preferred_element_type=f32)
        score = jnp.tanh(act * sneigh + scal_ref[li] + xroot)               # (N,1) f32

        # ---- per-graph top-k keep mask (exact f32 rank logic) ----
        s_row = jnp.broadcast_to(score, (n, n))                             # [i,j]=s_i
        # column broadcast s_col[i,j]=s_j via rank-1 MXU outer product (O(N^2), exact)
        s_col = lax.dot_general(ones_col, score,
                                dimension_numbers=(((1,), (1,)), ((), ())),
                                preferred_element_type=f32)
        better = ((s_col > s_row) | ((s_col == s_row) & tie)).astype(f32)
        rank = jnp.dot(same * better, act, preferred_element_type=f32)      # (N,1)
        n_per = jnp.dot(same, act, preferred_element_type=f32)              # |graph(i)|
        keep = ((act > 0.0) & (rank < jnp.ceil(ratio * n_per))).astype(f32)

        # ---- gate: x' = h * tanh(score) * keep ----
        x = h * score * keep                                                # (N,H)

        # ---- global add / max pool over kept nodes per graph ----
        add_p = jnp.dot(member_b, x.astype(bf16), preferred_element_type=f32)  # (B,H)
        mgs = membert * keep                                                # (N,B), hoisted
        max_p = jnp.zeros((nb, hidden), f32)
        for g in range(nb):                                                 # static, tiny
            xm = jnp.where(mgs[:, g:g + 1] > 0.0, x, neg)
            rmax = jnp.max(xm, axis=0, keepdims=True)                       # (1,H)
            max_p = jnp.where(g_iota == g,
                              jnp.broadcast_to(rmax, (nb, hidden)), max_p)
        kept_cnt = jnp.dot(member, keep, preferred_element_type=f32)        # (B,1)
        max_p = jnp.where(kept_cnt > 0.0, max_p, 0.0)                       # clamp empty

        max_sum = max_sum + max_p
        add_sum = add_sum + add_p
        act = keep

    # ---- MLP head: first layer split [max|add|hls] to avoid in-kernel concat ----
    t = (jnp.dot(max_sum.astype(bf16), w0m_ref[...].astype(bf16),
                 preferred_element_type=f32)
         + jnp.dot(add_sum.astype(bf16), w0a_ref[...].astype(bf16),
                   preferred_element_type=f32)
         + jnp.dot(hls_ref[...].astype(bf16), w0h_ref[...].astype(bf16),
                   preferred_element_type=f32)
         + b0_ref[...])
    t = jnp.maximum(t, 0.0)
    t = jnp.maximum(jnp.dot(t.astype(bf16), w1_ref[...].astype(bf16),
                            preferred_element_type=f32) + b1_ref[...], 0.0)
    out_ref[...] = jnp.dot(t.astype(bf16), w2_ref[...].astype(bf16),
                           preferred_element_type=f32) + scal_ref[3]


# ---------------------------------------------------------------------------
# Wrapper: one scatter for the dense adjacency, one pallas_call for everything
# ---------------------------------------------------------------------------

_VMEM = pl.BlockSpec()
_SMEM = pl.BlockSpec(memory_space=pltpu.MemorySpace.SMEM)


def hiernet_forward(params, x, edge_index, batch, hls_attr, *,
                    num_graphs, pool_ratio=0.5):
    n = x.shape[0]
    nb = num_graphs
    hidden = params["conv0_w"].shape[1]
    x = x.astype(jnp.float32)

    # dense plain adjacency A0[dst, src] += 1 (duplicates accumulate), built ONCE
    src, dst = edge_index[0], edge_index[1]
    a0 = jnp.zeros((n, n), jnp.float32).at[dst, src].add(1.0)

    graph_ids = jnp.arange(nb, dtype=batch.dtype)
    member = (batch[None, :] == graph_ids[:, None]).astype(jnp.float32)   # (B,N)
    membert = member.T                                                    # (N,B)
    same = (batch[:, None] == batch[None, :]).astype(jnp.float32)         # (N,N)

    # merged SAG scoring weights [wrel | wroot] -> (H,2)
    poolw = [jnp.concatenate([params[f"pool{i}_wrel"], params[f"pool{i}_wroot"]],
                             axis=1) for i in range(3)]
    # true scalars packed for SMEM: [brel0, brel1, brel2, mlp2_b]
    scal = jnp.stack([params["pool0_brel"][0, 0], params["pool1_brel"][0, 0],
                      params["pool2_brel"][0, 0], params["mlp2_b"][0, 0]]
                     ).astype(jnp.float32)
    # split first MLP weight into [max | add | hls] blocks (trace-time slices)
    w0 = params["mlp0_w"]
    w0m, w0a, w0h = w0[:hidden], w0[hidden:2 * hidden], w0[2 * hidden:]

    kern = functools.partial(hiernet_kernel, ratio=pool_ratio, num_graphs=nb)
    # TODO(synk): for large N switch to CSR + scalar-prefetch gather with a
    # node-tiled grid (dimension_semantics=("parallel",...)) and set an explicit
    # pltpu.CompilerParams(vmem_limit_bytes=...) budget (v7x: 64 MiB physical).
    return pl.pallas_call(
        kern,
        out_shape=jax.ShapeDtypeStruct((nb, 1), jnp.float32),
        in_specs=[_VMEM] * 22 + [_SMEM],
    )(a0, x, member, membert, same, hls_attr.astype(jnp.float32),
      params["conv0_w"], params["conv0_b"],
      params["conv1_w"], params["conv1_b"],
      params["conv2_w"], params["conv2_b"],
      poolw[0], poolw[1], poolw[2],
      w0m, w0a, w0h, params["mlp0_b"],
      params["mlp1_w"], params["mlp1_b"], params["mlp2_w"],
      scal)


# ---------------------------------------------------------------------------
# Deterministic parameter init (shapes per HierNet.__init__)
# ---------------------------------------------------------------------------

def init_params(key, in_channels, hidden, hls_dim, num_layers=3):
    params = {}

    def nxt():
        nonlocal key
        key, sub = jax.random.split(key)
        return sub

    for i in range(num_layers):
        cin = in_channels if i == 0 else hidden
        params[f"conv{i}_w"] = 0.2 * jax.random.normal(nxt(), (cin, hidden), jnp.float32)
        params[f"conv{i}_b"] = 0.1 * jax.random.normal(nxt(), (1, hidden), jnp.float32)
        # SAGPooling scoring GraphConv(hidden -> 1): lin_rel (bias) + lin_root (no bias)
        params[f"pool{i}_wrel"] = 0.2 * jax.random.normal(nxt(), (hidden, 1), jnp.float32)
        params[f"pool{i}_brel"] = 0.1 * jax.random.normal(nxt(), (1, 1), jnp.float32)
        params[f"pool{i}_wroot"] = 0.2 * jax.random.normal(nxt(), (hidden, 1), jnp.float32)

    dims = [2 * hidden + hls_dim, 64, 64, 1]
    for i in range(3):
        params[f"mlp{i}_w"] = 0.2 * jax.random.normal(nxt(), (dims[i], dims[i + 1]), jnp.float32)
        params[f"mlp{i}_b"] = 0.1 * jax.random.normal(nxt(), (1, dims[i + 1]), jnp.float32)
    return params


# ---------------------------------------------------------------------------
# Main
# ---------------------------------------------------------------------------

if __name__ == "__main__":
    in_channels, hidden, hls_dim = 4, 32, 8
    num_graphs = 2
    nodes_per_graph = 8
    edges_per_graph = 20
    N = num_graphs * nodes_per_graph

    # deterministic inputs
    key = jax.random.PRNGKey(0)
    key, kx, kh = jax.random.split(key, 3)
    x = jax.random.normal(kx, (N, in_channels), jnp.float32)
    hls_attr = jax.random.normal(kh, (num_graphs, hls_dim), jnp.float32)

    # deterministic edge_index: edges within each graph, no self-loops
    ek = jax.random.PRNGKey(1)
    edge_blocks = []
    for g in range(num_graphs):
        ek, k1, k2 = jax.random.split(ek, 3)
        s = jax.random.randint(k1, (edges_per_graph,), 0, nodes_per_graph)
        d = jax.random.randint(k2, (edges_per_graph,), 0, nodes_per_graph)
        d = jnp.where(d == s, (d + 1) % nodes_per_graph, d)
        base = g * nodes_per_graph
        edge_blocks.append(jnp.stack([s + base, d + base]))
    edge_index = jnp.concatenate(edge_blocks, axis=1).astype(jnp.int32)
    batch = jnp.repeat(jnp.arange(num_graphs, dtype=jnp.int32), nodes_per_graph)

    params = init_params(jax.random.PRNGKey(42), in_channels, hidden, hls_dim)

    fwd = jax.jit(functools.partial(hiernet_forward, num_graphs=num_graphs,
                                    pool_ratio=0.5))
    out = jax.block_until_ready(fwd(params, x, edge_index, batch, hls_attr))
    assert out.shape == (num_graphs, 1) and out.dtype == jnp.float32
    print("KERNEL_OK")
</pallas_src>

<mosaic_0001>
module attributes {stable_mosaic.version = 11 : i64} {
  func.func @hiernet_kernel(%arg0: memref<16x16xf32, #tpu.memory_space<vmem>>, %arg1: memref<16x4xf32, #tpu.memory_space<vmem>>, %arg2: memref<2x16xf32, #tpu.memory_space<vmem>>, %arg3: memref<16x2xf32, #tpu.memory_space<vmem>>, %arg4: memref<16x16xf32, #tpu.memory_space<vmem>>, %arg5: memref<2x8xf32, #tpu.memory_space<vmem>>, %arg6: memref<4x32xf32, #tpu.memory_space<vmem>>, %arg7: memref<1x32xf32, #tpu.memory_space<vmem>>, %arg8: memref<32x32xf32, #tpu.memory_space<vmem>>, %arg9: memref<1x32xf32, #tpu.memory_space<vmem>>, %arg10: memref<32x32xf32, #tpu.memory_space<vmem>>, %arg11: memref<1x32xf32, #tpu.memory_space<vmem>>, %arg12: memref<32x2xf32, #tpu.memory_space<vmem>>, %arg13: memref<32x2xf32, #tpu.memory_space<vmem>>, %arg14: memref<32x2xf32, #tpu.memory_space<vmem>>, %arg15: memref<32x64xf32, #tpu.memory_space<vmem>>, %arg16: memref<32x64xf32, #tpu.memory_space<vmem>>, %arg17: memref<8x64xf32, #tpu.memory_space<vmem>>, %arg18: memref<1x64xf32, #tpu.memory_space<vmem>>, %arg19: memref<64x64xf32, #tpu.memory_space<vmem>>, %arg20: memref<1x64xf32, #tpu.memory_space<vmem>>, %arg21: memref<64x1xf32, #tpu.memory_space<vmem>>, %arg22: memref<4xf32, #tpu.memory_space<smem>>, %arg23: memref<2x1xf32, #tpu.memory_space<vmem>>) attributes {dimension_semantics = [], scalar_prefetch = 0 : i64, scratch_operands = 0 : i64, tpu.core_type = #tpu.core_type<tc>} {
    %c0 = arith.constant 0 : index
    %c0_0 = arith.constant 0 : index
    %0 = vector.load %arg0[%c0, %c0_0] : memref<16x16xf32, #tpu.memory_space<vmem>>, vector<16x16xf32>
    %1 = arith.truncf %0 : vector<16x16xf32> to vector<16x16xbf16>
    %c0_1 = arith.constant 0 : index
    %c0_2 = arith.constant 0 : index
    %2 = vector.load %arg4[%c0_1, %c0_2] : memref<16x16xf32, #tpu.memory_space<vmem>>, vector<16x16xf32>
    %c0_3 = arith.constant 0 : index
    %c0_4 = arith.constant 0 : index
    %3 = vector.load %arg2[%c0_3, %c0_4] : memref<2x16xf32, #tpu.memory_space<vmem>>, vector<2x16xf32>
    %4 = arith.truncf %3 : vector<2x16xf32> to vector<2x16xbf16>
    %c0_5 = arith.constant 0 : index
    %c0_6 = arith.constant 0 : index
    %5 = vector.load %arg3[%c0_5, %c0_6] : memref<16x2xf32, #tpu.memory_space<vmem>>, vector<16x2xf32>
    %6 = tpu.iota {dimensions = array<i32: 0>} : vector<16x16xi32>
    %7 = tpu.iota {dimensions = array<i32: 1>} : vector<16x16xi32>
    %8 = arith.cmpi slt, %7, %6 : vector<16x16xi32>
    %9 = tpu.iota {dimensions = array<i32: 0>} : vector<2x1xi32>
    %cst = arith.constant 1.000000e+00 : f32
    %10 = vector.broadcast %cst : f32 to vector<16x1xf32>
    %c0_7 = arith.constant 0 : index
    %c0_8 = arith.constant 0 : index
    %11 = vector.load %arg1[%c0_7, %c0_8] : memref<16x4xf32, #tpu.memory_space<vmem>>, vector<16x4xf32>
    %cst_9 = arith.constant 1.000000e+00 : f32
    %12 = vector.broadcast %cst_9 : f32 to vector<16x1xf32>
    %cst_10 = arith.constant 0.000000e+00 : f32
    %13 = vector.broadcast %cst_10 : f32 to vector<2x32xf32>
    %cst_11 = arith.constant 0.000000e+00 : f32
    %14 = vector.broadcast %cst_11 : f32 to vector<2x32xf32>
    %cst_12 = arith.constant dense<0.000000e+00> : vector<16x1xf32>
    %15 = tpu.matmul %0, %12, %cst_12 {dimension_numbers = #tpu.dot_dimension_numbers<[1], [0], [0], [1], [0, 0, 1, 1], [], []>} : vector<16x16xf32>, vector<16x1xf32>, vector<16x1xf32> -> vector<16x1xf32>
    %cst_13 = arith.constant 1.000000e+00 : f32
    %16 = vector.broadcast %cst_13 : f32 to vector<16x1xf32>
    %17 = arith.addf %15, %16 : vector<16x1xf32>
    %18 = arith.mulf %12, %17 : vector<16x1xf32>
    %cst_14 = arith.constant 0.000000e+00 : f32
    %19 = vector.broadcast %cst_14 : f32 to vector<16x1xf32>
    %20 = arith.cmpf ogt, %18, %19 : vector<16x1xf32>
    %cst_15 = arith.constant 1.000000e+00 : f32
    %21 = vector.broadcast %cst_15 : f32 to vector<16x1xf32>
    %22 = arith.maximumf %18, %21 : vector<16x1xf32>
    %23 = math.rsqrt %22 : vector<16x1xf32>
    %cst_16 = arith.constant 0.000000e+00 : f32
    %24 = vector.broadcast %cst_16 : f32 to vector<16x1xf32>
    %25 = arith.select %20, %23, %24 : vector<16x1xi1>, vector<16x1xf32>
    %26 = arith.truncf %11 : vector<16x4xf32> to vector<16x4xbf16>
    %c0_17 = arith.constant 0 : index
    %c0_18 = arith.constant 0 : index
    %27 = vector.load %arg6[%c0_17, %c0_18] : memref<4x32xf32, #tpu.memory_space<vmem>>, vector<4x32xf32>
    %28 = arith.truncf %27 : vector<4x32xf32> to vector<4x32xbf16>
    %cst_19 = arith.constant dense<0.000000e+00> : vector<16x32xf32>
    %29 = tpu.matmul %26, %28, %cst_19 {dimension_numbers = #tpu.dot_dimension_numbers<[1], [0], [0], [1], [0, 0, 1, 1], [], []>} : vector<16x4xbf16>, vector<4x32xbf16>, vector<16x32xf32> -> vector<16x32xf32>
    %30 = vector.broadcast %25 : vector<16x1xf32> to vector<16x32xf32>
    %31 = arith.mulf %30, %29 : vector<16x32xf32>
    %32 = arith.truncf %31 : vector<16x32xf32> to vector<16x32xbf16>
    %cst_20 = arith.constant dense<0.000000e+00> : vector<16x32xf32>
    %33 = tpu.matmul %1, %32, %cst_20 {dimension_numbers = #tpu.dot_dimension_numbers<[1], [0], [0], [1], [0, 0, 1, 1], [], []>} : vector<16x16xbf16>, vector<16x32xbf16>, vector<16x32xf32> -> vector<16x32xf32>
    %34 = arith.addf %33, %31 : vector<16x32xf32>
    %35 = vector.broadcast %25 : vector<16x1xf32> to vector<16x32xf32>
    %36 = arith.mulf %35, %34 : vector<16x32xf32>
    %c0_21 = arith.constant 0 : index
    %c0_22 = arith.constant 0 : index
    %37 = vector.load %arg7[%c0_21, %c0_22] : memref<1x32xf32, #tpu.memory_space<vmem>>, vector<1x32xf32>
    %38 = vector.broadcast %37 : vector<1x32xf32> to vector<16x32xf32>
    %39 = arith.addf %36, %38 : vector<16x32xf32>
    %cst_23 = arith.constant 0.000000e+00 : f32
    %40 = vector.broadcast %cst_23 : f32 to vector<16x32xf32>
    %41 = arith.maximumf %39, %40 : vector<16x32xf32>
    %42 = arith.truncf %41 : vector<16x32xf32> to vector<16x32xbf16>
    %c0_24 = arith.constant 0 : index
    %c0_25 = arith.constant 0 : index
    %43 = vector.load %arg12[%c0_24, %c0_25] : memref<32x2xf32, #tpu.memory_space<vmem>>, vector<32x2xf32>
    %44 = arith.truncf %43 : vector<32x2xf32> to vector<32x2xbf16>
    %cst_26 = arith.constant dense<0.000000e+00> : vector<16x2xf32>
    %45 = tpu.matmul %42, %44, %cst_26 {dimension_numbers = #tpu.dot_dimension_numbers<[1], [0], [0], [1], [0, 0, 1, 1], [], []>} : vector<16x32xbf16>, vector<32x2xbf16>, vector<16x2xf32> -> vector<16x2xf32>
    %46 = vector.extract_strided_slice %45 {offsets = [0, 0], sizes = [16, 1], strides = [1, 1]} : vector<16x2xf32> to vector<16x1xf32>
    %47 = vector.extract_strided_slice %45 {offsets = [0, 1], sizes = [16, 1], strides = [1, 1]} : vector<16x2xf32> to vector<16x1xf32>
    %48 = arith.mulf %12, %46 : vector<16x1xf32>
    %49 = arith.truncf %48 : vector<16x1xf32> to vector<16x1xbf16>
    %cst_27 = arith.constant dense<0.000000e+00> : vector<16x1xf32>
    %50 = tpu.matmul %1, %49, %cst_27 {dimension_numbers = #tpu.dot_dimension_numbers<[1], [0], [0], [1], [0, 0, 1, 1], [], []>} : vector<16x16xbf16>, vector<16x1xbf16>, vector<16x1xf32> -> vector<16x1xf32>
    %51 = arith.mulf %12, %50 : vector<16x1xf32>
    %c0_28 = arith.constant 0 : index
    %52 = memref.load %arg22[%c0_28] : memref<4xf32, #tpu.memory_space<smem>>
    %53 = vector.broadcast %52 : f32 to vector<16x1xf32>
    %54 = arith.addf %51, %53 : vector<16x1xf32>
    %55 = arith.addf %54, %47 : vector<16x1xf32>
    %56 = math.tanh %55 : vector<16x1xf32>
    %57 = vector.shape_cast %56 : vector<16x1xf32> to vector<16x1xf32>
    %58 = vector.broadcast %57 : vector<16x1xf32> to vector<16x16xf32>
    %cst_29 = arith.constant dense<0.000000e+00> : vector<16x16xf32>
    %59 = tpu.matmul %10, %56, %cst_29 {dimension_numbers = #tpu.dot_dimension_numbers<[1], [1], [0], [0], [0, 0, 1, 0], [], []>} : vector<16x1xf32>, vector<16x1xf32>, vector<16x16xf32> -> vector<16x16xf32>
    %60 = arith.cmpf ogt, %59, %58 : vector<16x16xf32>
    %61 = arith.cmpf oeq, %59, %58 : vector<16x16xf32>
    %62 = arith.andi %61, %8 : vector<16x16xi1>
    %63 = arith.ori %60, %62 : vector<16x16xi1>
    %64 = arith.extui %63 : vector<16x16xi1> to vector<16x16xi32>
    %65 = arith.sitofp %64 : vector<16x16xi32> to vector<16x16xf32>
    %66 = arith.mulf %2, %65 : vector<16x16xf32>
    %cst_30 = arith.constant dense<0.000000e+00> : vector<16x1xf32>
    %67 = tpu.matmul %66, %12, %cst_30 {dimension_numbers = #tpu.dot_dimension_numbers<[1], [0], [0], [1], [0, 0, 1, 1], [], []>} : vector<16x16xf32>, vector<16x1xf32>, vector<16x1xf32> -> vector<16x1xf32>
    %cst_31 = arith.constant dense<0.000000e+00> : vector<16x1xf32>
    %68 = tpu.matmul %2, %12, %cst_31 {dimension_numbers = #tpu.dot_dimension_numbers<[1], [0], [0], [1], [0, 0, 1, 1], [], []>} : vector<16x16xf32>, vector<16x1xf32>, vector<16x1xf32> -> vector<16x1xf32>
    %cst_32 = arith.constant 0.000000e+00 : f32
    %69 = vector.broadcast %cst_32 : f32 to vector<16x1xf32>
    %70 = arith.cmpf ogt, %12, %69 : vector<16x1xf32>
    %cst_33 = arith.constant 5.000000e-01 : f32
    %71 = vector.broadcast %cst_33 : f32 to vector<16x1xf32>
    %72 = arith.mulf %71, %68 : vector<16x1xf32>
    %73 = math.ceil %72 : vector<16x1xf32>
    %74 = arith.cmpf olt, %67, %73 : vector<16x1xf32>
    %75 = arith.andi %70, %74 : vector<16x1xi1>
    %76 = arith.extui %75 : vector<16x1xi1> to vector<16x1xi32>
    %77 = arith.sitofp %76 : vector<16x1xi32> to vector<16x1xf32>
    %78 = vector.broadcast %56 : vector<16x1xf32> to vector<16x32xf32>
    %79 = arith.mulf %41, %78 : vector<16x32xf32>
    %80 = vector.broadcast %77 : vector<16x1xf32> to vector<16x32xf32>
    %81 = arith.mulf %79, %80 : vector<16x32xf32>
    %82 = arith.truncf %81 : vector<16x32xf32> to vector<16x32xbf16>
    %cst_34 = arith.constant dense<0.000000e+00> : vector<2x32xf32>
    %83 = tpu.matmul %4, %82, %cst_34 {dimension_numbers = #tpu.dot_dimension_numbers<[1], [0], [0], [1], [0, 0, 1, 1], [], []>} : vector<2x16xbf16>, vector<16x32xbf16>, vector<2x32xf32> -> vector<2x32xf32>
    %84 = vector.broadcast %77 : vector<16x1xf32> to vector<16x2xf32>
    %85 = arith.mulf %5, %84 : vector<16x2xf32>
    %cst_35 = arith.constant 0.000000e+00 : f32
    %86 = vector.broadcast %cst_35 : f32 to vector<2x32xf32>
    %87 = vector.extract_strided_slice %85 {offsets = [0, 0], sizes = [16, 1], strides = [1, 1]} : vector<16x2xf32> to vector<16x1xf32>
    %cst_36 = arith.constant 0.000000e+00 : f32
    %88 = vector.broadcast %cst_36 : f32 to vector<16x1xf32>
    %89 = arith.cmpf ogt, %87, %88 : vector<16x1xf32>
    %cst_37 = arith.constant -1.000000e+30 : f32
    %90 = vector.shape_cast %89 : vector<16x1xi1> to vector<16x1xi1>
    %91 = vector.broadcast %90 : vector<16x1xi1> to vector<16x32xi1>
    %92 = vector.broadcast %cst_37 : f32 to vector<16x32xf32>
    %93 = arith.select %91, %81, %92 : vector<16x32xi1>, vector<16x32xf32>
    %cst_38 = arith.constant dense<0xFF800000> : vector<32xf32>
    %94 = vector.multi_reduction <maximumf>, %93, %cst_38 [0] : vector<16x32xf32> to vector<32xf32>
    %95 = vector.shape_cast %94 : vector<32xf32> to vector<1x32xf32>
    %c0_i32 = arith.constant 0 : i32
    %96 = vector.broadcast %c0_i32 : i32 to vector<2x1xi32>
    %97 = arith.cmpi eq, %9, %96 : vector<2x1xi32>
    %98 = vector.shape_cast %95 : vector<1x32xf32> to vector<1x32xf32>
    %99 = vector.broadcast %98 : vector<1x32xf32> to vector<2x32xf32>
    %100 = vector.shape_cast %97 : vector<2x1xi1> to vector<2x1xi1>
    %101 = vector.broadcast %100 : vector<2x1xi1> to vector<2x32xi1>
    %102 = arith.select %101, %99, %86 : vector<2x32xi1>, vector<2x32xf32>
    %103 = vector.extract_strided_slice %85 {offsets = [0, 1], sizes = [16, 1], strides = [1, 1]} : vector<16x2xf32> to vector<16x1xf32>
    %cst_39 = arith.constant 0.000000e+00 : f32
    %104 = vector.broadcast %cst_39 : f32 to vector<16x1xf32>
    %105 = arith.cmpf ogt, %103, %104 : vector<16x1xf32>
    %cst_40 = arith.constant -1.000000e+30 : f32
    %106 = vector.shape_cast %105 : vector<16x1xi1> to vector<16x1xi1>
    %107 = vector.broadcast %106 : vector<16x1xi1> to vector<16x32xi1>
    %108 = vector.broadcast %cst_40 : f32 to vector<16x32xf32>
    %109 = arith.select %107, %81, %108 : vector<16x32xi1>, vector<16x32xf32>
    %cst_41 = arith.constant dense<0xFF800000> : vector<32xf32>
    %110 = vector.multi_reduction <maximumf>, %109, %cst_41 [0] : vector<16x32xf32> to vector<32xf32>
    %111 = vector.shape_cast %110 : vector<32xf32> to vector<1x32xf32>
    %c1_i32 = arith.constant 1 : i32
    %112 = vector.broadcast %c1_i32 : i32 to vector<2x1xi32>
    %113 = arith.cmpi eq, %9, %112 : vector<2x1xi32>
    %114 = vector.shape_cast %111 : vector<1x32xf32> to vector<1x32xf32>
    %115 = vector.broadcast %114 : vector<1x32xf32> to vector<2x32xf32>
    %116 = vector.shape_cast %113 : vector<2x1xi1> to vector<2x1xi1>
    %117 = vector.broadcast %116 : vector<2x1xi1> to vector<2x32xi1>
    %118 = arith.select %117, %115, %102 : vector<2x32xi1>, vector<2x32xf32>
    %cst_42 = arith.constant dense<0.000000e+00> : vector<2x1xf32>
    %119 = tpu.matmul %3, %77, %cst_42 {dimension_numbers = #tpu.dot_dimension_numbers<[1], [0], [0], [1], [0, 0, 1, 1], [], []>} : vector<2x16xf32>, vector<16x1xf32>, vector<2x1xf32> -> vector<2x1xf32>
    %cst_43 = arith.constant 0.000000e+00 : f32
    %120 = vector.broadcast %cst_43 : f32 to vector<2x1xf32>
    %121 = arith.cmpf ogt, %119, %120 : vector<2x1xf32>
    %cst_44 = arith.constant 0.000000e+00 : f32
    %122 = vector.shape_cast %121 : vector<2x1xi1> to vector<2x1xi1>
    %123 = vector.broadcast %122 : vector<2x1xi1> to vector<2x32xi1>
    %124 = vector.broadcast %cst_44 : f32 to vector<2x32xf32>
    %125 = arith.select %123, %118, %124 : vector<2x32xi1>, vector<2x32xf32>
    %126 = arith.addf %13, %125 : vector<2x32xf32>
    %127 = arith.addf %14, %83 : vector<2x32xf32>
    %cst_45 = arith.constant dense<0.000000e+00> : vector<16x1xf32>
    %128 = tpu.matmul %0, %77, %cst_45 {dimension_numbers = #tpu.dot_dimension_numbers<[1], [0], [0], [1], [0, 0, 1, 1], [], []>} : vector<16x16xf32>, vector<16x1xf32>, vector<16x1xf32> -> vector<16x1xf32>
    %cst_46 = arith.constant 1.000000e+00 : f32
    %129 = vector.broadcast %cst_46 : f32 to vector<16x1xf32>
    %130 = arith.addf %128, %129 : vector<16x1xf32>
    %131 = arith.mulf %77, %130 : vector<16x1xf32>
    %cst_47 = arith.constant 0.000000e+00 : f32
    %132 = vector.broadcast %cst_47 : f32 to vector<16x1xf32>
    %133 = arith.cmpf ogt, %131, %132 : vector<16x1xf32>
    %cst_48 = arith.constant 1.000000e+00 : f32
    %134 = vector.broadcast %cst_48 : f32 to vector<16x1xf32>
    %135 = arith.maximumf %131, %134 : vector<16x1xf32>
    %136 = math.rsqrt %135 : vector<16x1xf32>
    %cst_49 = arith.constant 0.000000e+00 : f32
    %137 = vector.broadcast %cst_49 : f32 to vector<16x1xf32>
    %138 = arith.select %133, %136, %137 : vector<16x1xi1>, vector<16x1xf32>
    %139 = arith.truncf %81 : vector<16x32xf32> to vector<16x32xbf16>
    %c0_50 = arith.constant 0 : index
    %c0_51 = arith.constant 0 : index
    %140 = vector.load %arg8[%c0_50, %c0_51] : memref<32x32xf32, #tpu.memory_space<vmem>>, vector<32x32xf32>
    %141 = arith.truncf %140 : vector<32x32xf32> to vector<32x32xbf16>
    %cst_52 = arith.constant dense<0.000000e+00> : vector<16x32xf32>
    %142 = tpu.matmul %139, %141, %cst_52 {dimension_numbers = #tpu.dot_dimension_numbers<[1], [0], [0], [1], [0, 0, 1, 1], [], []>} : vector<16x32xbf16>, vector<32x32xbf16>, vector<16x32xf32> -> vector<16x32xf32>
    %143 = vector.broadcast %138 : vector<16x1xf32> to vector<16x32xf32>
    %144 = arith.mulf %143, %142 : vector<16x32xf32>
    %145 = arith.truncf %144 : vector<16x32xf32> to vector<16x32xbf16>
    %cst_53 = arith.constant dense<0.000000e+00> : vector<16x32xf32>
    %146 = tpu.matmul %1, %145, %cst_53 {dimension_numbers = #tpu.dot_dimension_numbers<[1], [0], [0], [1], [0, 0, 1, 1], [], []>} : vector<16x16xbf16>, vector<16x32xbf16>, vector<16x32xf32> -> vector<16x32xf32>
    %147 = arith.addf %146, %144 : vector<16x32xf32>
    %148 = vector.broadcast %138 : vector<16x1xf32> to vector<16x32xf32>
    %149 = arith.mulf %148, %147 : vector<16x32xf32>
    %c0_54 = arith.constant 0 : index
    %c0_55 = arith.constant 0 : index
    %150 = vector.load %arg9[%c0_54, %c0_55] : memref<1x32xf32, #tpu.memory_space<vmem>>, vector<1x32xf32>
    %151 = vector.broadcast %150 : vector<1x32xf32> to vector<16x32xf32>
    %152 = arith.addf %149, %151 : vector<16x32xf32>
    %cst_56 = arith.constant 0.000000e+00 : f32
    %153 = vector.broadcast %cst_56 : f32 to vector<16x32xf32>
    %154 = arith.maximumf %152, %153 : vector<16x32xf32>
    %155 = arith.truncf %154 : vector<16x32xf32> to vector<16x32xbf16>
    %c0_57 = arith.constant 0 : index
    %c0_58 = arith.constant 0 : index
    %156 = vector.load %arg13[%c0_57, %c0_58] : memref<32x2xf32, #tpu.memory_space<vmem>>, vector<32x2xf32>
    %157 = arith.truncf %156 : vector<32x2xf32> to vector<32x2xbf16>
    %cst_59 = arith.constant dense<0.000000e+00> : vector<16x2xf32>
    %158 = tpu.matmul %155, %157, %cst_59 {dimension_numbers = #tpu.dot_dimension_numbers<[1], [0], [0], [1], [0, 0, 1, 1], [], []>} : vector<16x32xbf16>, vector<32x2xbf16>, vector<16x2xf32> -> vector<16x2xf32>
    %159 = vector.extract_strided_slice %158 {offsets = [0, 0], sizes = [16, 1], strides = [1, 1]} : vector<16x2xf32> to vector<16x1xf32>
    %160 = vector.extract_strided_slice %158 {offsets = [0, 1], sizes = [16, 1], strides = [1, 1]} : vector<16x2xf32> to vector<16x1xf32>
    %161 = arith.mulf %77, %159 : vector<16x1xf32>
    %162 = arith.truncf %161 : vector<16x1xf32> to vector<16x1xbf16>
    %cst_60 = arith.constant dense<0.000000e+00> : vector<16x1xf32>
    %163 = tpu.matmul %1, %162, %cst_60 {dimension_numbers = #tpu.dot_dimension_numbers<[1], [0], [0], [1], [0, 0, 1, 1], [], []>} : vector<16x16xbf16>, vector<16x1xbf16>, vector<16x1xf32> -> vector<16x1xf32>
    %164 = arith.mulf %77, %163 : vector<16x1xf32>
    %c1 = arith.constant 1 : index
    %165 = memref.load %arg22[%c1] : memref<4xf32, #tpu.memory_space<smem>>
    %166 = vector.broadcast %165 : f32 to vector<16x1xf32>
    %167 = arith.addf %164, %166 : vector<16x1xf32>
    %168 = arith.addf %167, %160 : vector<16x1xf32>
    %169 = math.tanh %168 : vector<16x1xf32>
    %170 = vector.shape_cast %169 : vector<16x1xf32> to vector<16x1xf32>
    %171 = vector.broadcast %170 : vector<16x1xf32> to vector<16x16xf32>
    %cst_61 = arith.constant dense<0.000000e+00> : vector<16x16xf32>
    %172 = tpu.matmul %10, %169, %cst_61 {dimension_numbers = #tpu.dot_dimension_numbers<[1], [1], [0], [0], [0, 0, 1, 0], [], []>} : vector<16x1xf32>, vector<16x1xf32>, vector<16x16xf32> -> vector<16x16xf32>
    %173 = arith.cmpf ogt, %172, %171 : vector<16x16xf32>
    %174 = arith.cmpf oeq, %172, %171 : vector<16x16xf32>
    %175 = arith.andi %174, %8 : vector<16x16xi1>
    %176 = arith.ori %173, %175 : vector<16x16xi1>
    %177 = arith.extui %176 : vector<16x16xi1> to vector<16x16xi32>
    %178 = arith.sitofp %177 : vector<16x16xi32> to vector<16x16xf32>
    %179 = arith.mulf %2, %178 : vector<16x16xf32>
    %cst_62 = arith.constant dense<0.000000e+00> : vector<16x1xf32>
    %180 = tpu.matmul %179, %77, %cst_62 {dimension_numbers = #tpu.dot_dimension_numbers<[1], [0], [0], [1], [0, 0, 1, 1], [], []>} : vector<16x16xf32>, vector<16x1xf32>, vector<16x1xf32> -> vector<16x1xf32>
    %cst_63 = arith.constant dense<0.000000e+00> : vector<16x1xf32>
    %181 = tpu.matmul %2, %77, %cst_63 {dimension_numbers = #tpu.dot_dimension_numbers<[1], [0], [0], [1], [0, 0, 1, 1], [], []>} : vector<16x16xf32>, vector<16x1xf32>, vector<16x1xf32> -> vector<16x1xf32>
    %cst_64 = arith.constant 0.000000e+00 : f32
    %182 = vector.broadcast %cst_64 : f32 to vector<16x1xf32>
    %183 = arith.cmpf ogt, %77, %182 : vector<16x1xf32>
    %cst_65 = arith.constant 5.000000e-01 : f32
    %184 = vector.broadcast %cst_65 : f32 to vector<16x1xf32>
    %185 = arith.mulf %184, %181 : vector<16x1xf32>
    %186 = math.ceil %185 : vector<16x1xf32>
    %187 = arith.cmpf olt, %180, %186 : vector<16x1xf32>
    %188 = arith.andi %183, %187 : vector<16x1xi1>
    %189 = arith.extui %188 : vector<16x1xi1> to vector<16x1xi32>
    %190 = arith.sitofp %189 : vector<16x1xi32> to vector<16x1xf32>
    %191 = vector.broadcast %169 : vector<16x1xf32> to vector<16x32xf32>
    %192 = arith.mulf %154, %191 : vector<16x32xf32>
    %193 = vector.broadcast %190 : vector<16x1xf32> to vector<16x32xf32>
    %194 = arith.mulf %192, %193 : vector<16x32xf32>
    %195 = arith.truncf %194 : vector<16x32xf32> to vector<16x32xbf16>
    %cst_66 = arith.constant dense<0.000000e+00> : vector<2x32xf32>
    %196 = tpu.matmul %4, %195, %cst_66 {dimension_numbers = #tpu.dot_dimension_numbers<[1], [0], [0], [1], [0, 0, 1, 1], [], []>} : vector<2x16xbf16>, vector<16x32xbf16>, vector<2x32xf32> -> vector<2x32xf32>
    %197 = vector.broadcast %190 : vector<16x1xf32> to vector<16x2xf32>
    %198 = arith.mulf %5, %197 : vector<16x2xf32>
    %cst_67 = arith.constant 0.000000e+00 : f32
    %199 = vector.broadcast %cst_67 : f32 to vector<2x32xf32>
    %200 = vector.extract_strided_slice %198 {offsets = [0, 0], sizes = [16, 1], strides = [1, 1]} : vector<16x2xf32> to vector<16x1xf32>
    %cst_68 = arith.constant 0.000000e+00 : f32
    %201 = vector.broadcast %cst_68 : f32 to vector<16x1xf32>
    %202 = arith.cmpf ogt, %200, %201 : vector<16x1xf32>
    %cst_69 = arith.constant -1.000000e+30 : f32
    %203 = vector.shape_cast %202 : vector<16x1xi1> to vector<16x1xi1>
    %204 = vector.broadcast %203 : vector<16x1xi1> to vector<16x32xi1>
    %205 = vector.broadcast %cst_69 : f32 to vector<16x32xf32>
    %206 = arith.select %204, %194, %205 : vector<16x32xi1>, vector<16x32xf32>
    %cst_70 = arith.constant dense<0xFF800000> : vector<32xf32>
    %207 = vector.multi_reduction <maximumf>, %206, %cst_70 [0] : vector<16x32xf32> to vector<32xf32>
    %208 = vector.shape_cast %207 : vector<32xf32> to vector<1x32xf32>
    %c0_i32_71 = arith.constant 0 : i32
    %209 = vector.broadcast %c0_i32_71 : i32 to vector<2x1xi32>
    %210 = arith.cmpi eq, %9, %209 : vector<2x1xi32>
    %211 = vector.shape_cast %208 : vector<1x32xf32> to vector<1x32xf32>
    %212 = vector.broadcast %211 : vector<1x32xf32> to vector<2x32xf32>
    %213 = vector.shape_cast %210 : vector<2x1xi1> to vector<2x1xi1>
    %214 = vector.broadcast %213 : vector<2x1xi1> to vector<2x32xi1>
    %215 = arith.select %214, %212, %199 : vector<2x32xi1>, vector<2x32xf32>
    %216 = vector.extract_strided_slice %198 {offsets = [0, 1], sizes = [16, 1], strides = [1, 1]} : vector<16x2xf32> to vector<16x1xf32>
    %cst_72 = arith.constant 0.000000e+00 : f32
    %217 = vector.broadcast %cst_72 : f32 to vector<16x1xf32>
    %218 = arith.cmpf ogt, %216, %217 : vector<16x1xf32>
    %cst_73 = arith.constant -1.000000e+30 : f32
    %219 = vector.shape_cast %218 : vector<16x1xi1> to vector<16x1xi1>
    %220 = vector.broadcast %219 : vector<16x1xi1> to vector<16x32xi1>
    %221 = vector.broadcast %cst_73 : f32 to vector<16x32xf32>
    %222 = arith.select %220, %194, %221 : vector<16x32xi1>, vector<16x32xf32>
    %cst_74 = arith.constant dense<0xFF800000> : vector<32xf32>
    %223 = vector.multi_reduction <maximumf>, %222, %cst_74 [0] : vector<16x32xf32> to vector<32xf32>
    %224 = vector.shape_cast %223 : vector<32xf32> to vector<1x32xf32>
    %c1_i32_75 = arith.constant 1 : i32
    %225 = vector.broadcast %c1_i32_75 : i32 to vector<2x1xi32>
    %226 = arith.cmpi eq, %9, %225 : vector<2x1xi32>
    %227 = vector.shape_cast %224 : vector<1x32xf32> to vector<1x32xf32>
    %228 = vector.broadcast %227 : vector<1x32xf32> to vector<2x32xf32>
    %229 = vector.shape_cast %226 : vector<2x1xi1> to vector<2x1xi1>
    %230 = vector.broadcast %229 : vector<2x1xi1> to vector<2x32xi1>
    %231 = arith.select %230, %228, %215 : vector<2x32xi1>, vector<2x32xf32>
    %cst_76 = arith.constant dense<0.000000e+00> : vector<2x1xf32>
    %232 = tpu.matmul %3, %190, %cst_76 {dimension_numbers = #tpu.dot_dimension_numbers<[1], [0], [0], [1], [0, 0, 1, 1], [], []>} : vector<2x16xf32>, vector<16x1xf32>, vector<2x1xf32> -> vector<2x1xf32>
    %cst_77 = arith.constant 0.000000e+00 : f32
    %233 = vector.broadcast %cst_77 : f32 to vector<2x1xf32>
    %234 = arith.cmpf ogt, %232, %233 : vector<2x1xf32>
    %cst_78 = arith.constant 0.000000e+00 : f32
    %235 = vector.shape_cast %234 : vector<2x1xi1> to vector<2x1xi1>
    %236 = vector.broadcast %235 : vector<2x1xi1> to vector<2x32xi1>
    %237 = vector.broadcast %cst_78 : f32 to vector<2x32xf32>
    %238 = arith.select %236, %231, %237 : vector<2x32xi1>, vector<2x32xf32>
    %239 = arith.addf %126, %238 : vector<2x32xf32>
    %240 = arith.addf %127, %196 : vector<2x32xf32>
    %cst_79 = arith.constant dense<0.000000e+00> : vector<16x1xf32>
    %241 = tpu.matmul %0, %190, %cst_79 {dimension_numbers = #tpu.dot_dimension_numbers<[1], [0], [0], [1], [0, 0, 1, 1], [], []>} : vector<16x16xf32>, vector<16x1xf32>, vector<16x1xf32> -> vector<16x1xf32>
    %cst_80 = arith.constant 1.000000e+00 : f32
    %242 = vector.broadcast %cst_80 : f32 to vector<16x1xf32>
    %243 = arith.addf %241, %242 : vector<16x1xf32>
    %244 = arith.mulf %190, %243 : vector<16x1xf32>
    %cst_81 = arith.constant 0.000000e+00 : f32
    %245 = vector.broadcast %cst_81 : f32 to vector<16x1xf32>
    %246 = arith.cmpf ogt, %244, %245 : vector<16x1xf32>
    %cst_82 = arith.constant 1.000000e+00 : f32
    %247 = vector.broadcast %cst_82 : f32 to vector<16x1xf32>
    %248 = arith.maximumf %244, %247 : vector<16x1xf32>
    %249 = math.rsqrt %248 : vector<16x1xf32>
    %cst_83 = arith.constant 0.000000e+00 : f32
    %250 = vector.broadcast %cst_83 : f32 to vector<16x1xf32>
    %251 = arith.select %246, %249, %250 : vector<16x1xi1>, vector<16x1xf32>
    %252 = arith.truncf %194 : vector<16x32xf32> to vector<16x32xbf16>
    %c0_84 = arith.constant 0 : index
    %c0_85 = arith.constant 0 : index
    %253 = vector.load %arg10[%c0_84, %c0_85] : memref<32x32xf32, #tpu.memory_space<vmem>>, vector<32x32xf32>
    %254 = arith.truncf %253 : vector<32x32xf32> to vector<32x32xbf16>
    %cst_86 = arith.constant dense<0.000000e+00> : vector<16x32xf32>
    %255 = tpu.matmul %252, %254, %cst_86 {dimension_numbers = #tpu.dot_dimension_numbers<[1], [0], [0], [1], [0, 0, 1, 1], [], []>} : vector<16x32xbf16>, vector<32x32xbf16>, vector<16x32xf32> -> vector<16x32xf32>
    %256 = vector.broadcast %251 : vector<16x1xf32> to vector<16x32xf32>
    %257 = arith.mulf %256, %255 : vector<16x32xf32>
    %258 = arith.truncf %257 : vector<16x32xf32> to vector<16x32xbf16>
    %cst_87 = arith.constant dense<0.000000e+00> : vector<16x32xf32>
    %259 = tpu.matmul %1, %258, %cst_87 {dimension_numbers = #tpu.dot_dimension_numbers<[1], [0], [0], [1], [0, 0, 1, 1], [], []>} : vector<16x16xbf16>, vector<16x32xbf16>, vector<16x32xf32> -> vector<16x32xf32>
    %260 = arith.addf %259, %257 : vector<16x32xf32>
    %261 = vector.broadcast %251 : vector<16x1xf32> to vector<16x32xf32>
    %262 = arith.mulf %261, %260 : vector<16x32xf32>
    %c0_88 = arith.constant 0 : index
    %c0_89 = arith.constant 0 : index
    %263 = vector.load %arg11[%c0_88, %c0_89] : memref<1x32xf32, #tpu.memory_space<vmem>>, vector<1x32xf32>
    %264 = vector.broadcast %263 : vector<1x32xf32> to vector<16x32xf32>
    %265 = arith.addf %262, %264 : vector<16x32xf32>
    %cst_90 = arith.constant 0.000000e+00 : f32
    %266 = vector.broadcast %cst_90 : f32 to vector<16x32xf32>
    %267 = arith.maximumf %265, %266 : vector<16x32xf32>
    %268 = arith.truncf %267 : vector<16x32xf32> to vector<16x32xbf16>
    %c0_91 = arith.constant 0 : index
    %c0_92 = arith.constant 0 : index
    %269 = vector.load %arg14[%c0_91, %c0_92] : memref<32x2xf32, #tpu.memory_space<vmem>>, vector<32x2xf32>
    %270 = arith.truncf %269 : vector<32x2xf32> to vector<32x2xbf16>
    %cst_93 = arith.constant dense<0.000000e+00> : vector<16x2xf32>
    %271 = tpu.matmul %268, %270, %cst_93 {dimension_numbers = #tpu.dot_dimension_numbers<[1], [0], [0], [1], [0, 0, 1, 1], [], []>} : vector<16x32xbf16>, vector<32x2xbf16>, vector<16x2xf32> -> vector<16x2xf32>
    %272 = vector.extract_strided_slice %271 {offsets = [0, 0], sizes = [16, 1], strides = [1, 1]} : vector<16x2xf32> to vector<16x1xf32>
    %273 = vector.extract_strided_slice %271 {offsets = [0, 1], sizes = [16, 1], strides = [1, 1]} : vector<16x2xf32> to vector<16x1xf32>
    %274 = arith.mulf %190, %272 : vector<16x1xf32>
    %275 = arith.truncf %274 : vector<16x1xf32> to vector<16x1xbf16>
    %cst_94 = arith.constant dense<0.000000e+00> : vector<16x1xf32>
    %276 = tpu.matmul %1, %275, %cst_94 {dimension_numbers = #tpu.dot_dimension_numbers<[1], [0], [0], [1], [0, 0, 1, 1], [], []>} : vector<16x16xbf16>, vector<16x1xbf16>, vector<16x1xf32> -> vector<16x1xf32>
    %277 = arith.mulf %190, %276 : vector<16x1xf32>
    %c2 = arith.constant 2 : index
    %278 = memref.load %arg22[%c2] : memref<4xf32, #tpu.memory_space<smem>>
    %279 = vector.broadcast %278 : f32 to vector<16x1xf32>
    %280 = arith.addf %277, %279 : vector<16x1xf32>
    %281 = arith.addf %280, %273 : vector<16x1xf32>
    %282 = math.tanh %281 : vector<16x1xf32>
    %283 = vector.shape_cast %282 : vector<16x1xf32> to vector<16x1xf32>
    %284 = vector.broadcast %283 : vector<16x1xf32> to vector<16x16xf32>
    %cst_95 = arith.constant dense<0.000000e+00> : vector<16x16xf32>
    %285 = tpu.matmul %10, %282, %cst_95 {dimension_numbers = #tpu.dot_dimension_numbers<[1], [1], [0], [0], [0, 0, 1, 0], [], []>} : vector<16x1xf32>, vector<16x1xf32>, vector<16x16xf32> -> vector<16x16xf32>
    %286 = arith.cmpf ogt, %285, %284 : vector<16x16xf32>
    %287 = arith.cmpf oeq, %285, %284 : vector<16x16xf32>
    %288 = arith.andi %287, %8 : vector<16x16xi1>
    %289 = arith.ori %286, %288 : vector<16x16xi1>
    %290 = arith.extui %289 : vector<16x16xi1> to vector<16x16xi32>
    %291 = arith.sitofp %290 : vector<16x16xi32> to vector<16x16xf32>
    %292 = arith.mulf %2, %291 : vector<16x16xf32>
    %cst_96 = arith.constant dense<0.000000e+00> : vector<16x1xf32>
    %293 = tpu.matmul %292, %190, %cst_96 {dimension_numbers = #tpu.dot_dimension_numbers<[1], [0], [0], [1], [0, 0, 1, 1], [], []>} : vector<16x16xf32>, vector<16x1xf32>, vector<16x1xf32> -> vector<16x1xf32>
    %cst_97 = arith.constant dense<0.000000e+00> : vector<16x1xf32>
    %294 = tpu.matmul %2, %190, %cst_97 {dimension_numbers = #tpu.dot_dimension_numbers<[1], [0], [0], [1], [0, 0, 1, 1], [], []>} : vector<16x16xf32>, vector<16x1xf32>, vector<16x1xf32> -> vector<16x1xf32>
    %cst_98 = arith.constant 0.000000e+00 : f32
    %295 = vector.broadcast %cst_98 : f32 to vector<16x1xf32>
    %296 = arith.cmpf ogt, %190, %295 : vector<16x1xf32>
    %cst_99 = arith.constant 5.000000e-01 : f32
    %297 = vector.broadcast %cst_99 : f32 to vector<16x1xf32>
    %298 = arith.mulf %297, %294 : vector<16x1xf32>
    %299 = math.ceil %298 : vector<16x1xf32>
    %300 = arith.cmpf olt, %293, %299 : vector<16x1xf32>
    %301 = arith.andi %296, %300 : vector<16x1xi1>
    %302 = arith.extui %301 : vector<16x1xi1> to vector<16x1xi32>
    %303 = arith.sitofp %302 : vector<16x1xi32> to vector<16x1xf32>
    %304 = vector.broadcast %282 : vector<16x1xf32> to vector<16x32xf32>
    %305 = arith.mulf %267, %304 : vector<16x32xf32>
    %306 = vector.broadcast %303 : vector<16x1xf32> to vector<16x32xf32>
    %307 = arith.mulf %305, %306 : vector<16x32xf32>
    %308 = arith.truncf %307 : vector<16x32xf32> to vector<16x32xbf16>
    %cst_100 = arith.constant dense<0.000000e+00> : vector<2x32xf32>
    %309 = tpu.matmul %4, %308, %cst_100 {dimension_numbers = #tpu.dot_dimension_numbers<[1], [0], [0], [1], [0, 0, 1, 1], [], []>} : vector<2x16xbf16>, vector<16x32xbf16>, vector<2x32xf32> -> vector<2x32xf32>
    %310 = vector.broadcast %303 : vector<16x1xf32> to vector<16x2xf32>
    %311 = arith.mulf %5, %310 : vector<16x2xf32>
    %cst_101 = arith.constant 0.000000e+00 : f32
    %312 = vector.broadcast %cst_101 : f32 to vector<2x32xf32>
    %313 = vector.extract_strided_slice %311 {offsets = [0, 0], sizes = [16, 1], strides = [1, 1]} : vector<16x2xf32> to vector<16x1xf32>
    %cst_102 = arith.constant 0.000000e+00 : f32
    %314 = vector.broadcast %cst_102 : f32 to vector<16x1xf32>
    %315 = arith.cmpf ogt, %313, %314 : vector<16x1xf32>
    %cst_103 = arith.constant -1.000000e+30 : f32
    %316 = vector.shape_cast %315 : vector<16x1xi1> to vector<16x1xi1>
    %317 = vector.broadcast %316 : vector<16x1xi1> to vector<16x32xi1>
    %318 = vector.broadcast %cst_103 : f32 to vector<16x32xf32>
    %319 = arith.select %317, %307, %318 : vector<16x32xi1>, vector<16x32xf32>
    %cst_104 = arith.constant dense<0xFF800000> : vector<32xf32>
    %320 = vector.multi_reduction <maximumf>, %319, %cst_104 [0] : vector<16x32xf32> to vector<32xf32>
    %321 = vector.shape_cast %320 : vector<32xf32> to vector<1x32xf32>
    %c0_i32_105 = arith.constant 0 : i32
    %322 = vector.broadcast %c0_i32_105 : i32 to vector<2x1xi32>
    %323 = arith.cmpi eq, %9, %322 : vector<2x1xi32>
    %324 = vector.shape_cast %321 : vector<1x32xf32> to vector<1x32xf32>
    %325 = vector.broadcast %324 : vector<1x32xf32> to vector<2x32xf32>
    %326 = vector.shape_cast %323 : vector<2x1xi1> to vector<2x1xi1>
    %327 = vector.broadcast %326 : vector<2x1xi1> to vector<2x32xi1>
    %328 = arith.select %327, %325, %312 : vector<2x32xi1>, vector<2x32xf32>
    %329 = vector.extract_strided_slice %311 {offsets = [0, 1], sizes = [16, 1], strides = [1, 1]} : vector<16x2xf32> to vector<16x1xf32>
    %cst_106 = arith.constant 0.000000e+00 : f32
    %330 = vector.broadcast %cst_106 : f32 to vector<16x1xf32>
    %331 = arith.cmpf ogt, %329, %330 : vector<16x1xf32>
    %cst_107 = arith.constant -1.000000e+30 : f32
    %332 = vector.shape_cast %331 : vector<16x1xi1> to vector<16x1xi1>
    %333 = vector.broadcast %332 : vector<16x1xi1> to vector<16x32xi1>
    %334 = vector.broadcast %cst_107 : f32 to vector<16x32xf32>
    %335 = arith.select %333, %307, %334 : vector<16x32xi1>, vector<16x32xf32>
    %cst_108 = arith.constant dense<0xFF800000> : vector<32xf32>
    %336 = vector.multi_reduction <maximumf>, %335, %cst_108 [0] : vector<16x32xf32> to vector<32xf32>
    %337 = vector.shape_cast %336 : vector<32xf32> to vector<1x32xf32>
    %c1_i32_109 = arith.constant 1 : i32
    %338 = vector.broadcast %c1_i32_109 : i32 to vector<2x1xi32>
    %339 = arith.cmpi eq, %9, %338 : vector<2x1xi32>
    %340 = vector.shape_cast %337 : vector<1x32xf32> to vector<1x32xf32>
    %341 = vector.broadcast %340 : vector<1x32xf32> to vector<2x32xf32>
    %342 = vector.shape_cast %339 : vector<2x1xi1> to vector<2x1xi1>
    %343 = vector.broadcast %342 : vector<2x1xi1> to vector<2x32xi1>
    %344 = arith.select %343, %341, %328 : vector<2x32xi1>, vector<2x32xf32>
    %cst_110 = arith.constant dense<0.000000e+00> : vector<2x1xf32>
    %345 = tpu.matmul %3, %303, %cst_110 {dimension_numbers = #tpu.dot_dimension_numbers<[1], [0], [0], [1], [0, 0, 1, 1], [], []>} : vector<2x16xf32>, vector<16x1xf32>, vector<2x1xf32> -> vector<2x1xf32>
    %cst_111 = arith.constant 0.000000e+00 : f32
    %346 = vector.broadcast %cst_111 : f32 to vector<2x1xf32>
    %347 = arith.cmpf ogt, %345, %346 : vector<2x1xf32>
    %cst_112 = arith.constant 0.000000e+00 : f32
    %348 = vector.shape_cast %347 : vector<2x1xi1> to vector<2x1xi1>
    %349 = vector.broadcast %348 : vector<2x1xi1> to vector<2x32xi1>
    %350 = vector.broadcast %cst_112 : f32 to vector<2x32xf32>
    %351 = arith.select %349, %344, %350 : vector<2x32xi1>, vector<2x32xf32>
    %352 = arith.addf %239, %351 : vector<2x32xf32>
    %353 = arith.addf %240, %309 : vector<2x32xf32>
    %354 = arith.truncf %352 : vector<2x32xf32> to vector<2x32xbf16>
    %c0_113 = arith.constant 0 : index
    %c0_114 = arith.constant 0 : index
    %355 = vector.load %arg15[%c0_113, %c0_114] : memref<32x64xf32, #tpu.memory_space<vmem>>, vector<32x64xf32>
    %356 = arith.truncf %355 : vector<32x64xf32> to vector<32x64xbf16>
    %cst_115 = arith.constant dense<0.000000e+00> : vector<2x64xf32>
    %357 = tpu.matmul %354, %356, %cst_115 {dimension_numbers = #tpu.dot_dimension_numbers<[1], [0], [0], [1], [0, 0, 1, 1], [], []>} : vector<2x32xbf16>, vector<32x64xbf16>, vector<2x64xf32> -> vector<2x64xf32>
    %358 = arith.truncf %353 : vector<2x32xf32> to vector<2x32xbf16>
    %c0_116 = arith.constant 0 : index
    %c0_117 = arith.constant 0 : index
    %359 = vector.load %arg16[%c0_116, %c0_117] : memref<32x64xf32, #tpu.memory_space<vmem>>, vector<32x64xf32>
    %360 = arith.truncf %359 : vector<32x64xf32> to vector<32x64xbf16>
    %cst_118 = arith.constant dense<0.000000e+00> : vector<2x64xf32>
    %361 = tpu.matmul %358, %360, %cst_118 {dimension_numbers = #tpu.dot_dimension_numbers<[1], [0], [0], [1], [0, 0, 1, 1], [], []>} : vector<2x32xbf16>, vector<32x64xbf16>, vector<2x64xf32> -> vector<2x64xf32>
    %362 = arith.addf %357, %361 : vector<2x64xf32>
    %c0_119 = arith.constant 0 : index
    %c0_120 = arith.constant 0 : index
    %363 = vector.load %arg5[%c0_119, %c0_120] : memref<2x8xf32, #tpu.memory_space<vmem>>, vector<2x8xf32>
    %364 = arith.truncf %363 : vector<2x8xf32> to vector<2x8xbf16>
    %c0_121 = arith.constant 0 : index
    %c0_122 = arith.constant 0 : index
    %365 = vector.load %arg17[%c0_121, %c0_122] : memref<8x64xf32, #tpu.memory_space<vmem>>, vector<8x64xf32>
    %366 = arith.truncf %365 : vector<8x64xf32> to vector<8x64xbf16>
    %cst_123 = arith.constant dense<0.000000e+00> : vector<2x64xf32>
    %367 = tpu.matmul %364, %366, %cst_123 {dimension_numbers = #tpu.dot_dimension_numbers<[1], [0], [0], [1], [0, 0, 1, 1], [], []>} : vector<2x8xbf16>, vector<8x64xbf16>, vector<2x64xf32> -> vector<2x64xf32>
    %368 = arith.addf %362, %367 : vector<2x64xf32>
    %c0_124 = arith.constant 0 : index
    %c0_125 = arith.constant 0 : index
    %369 = vector.load %arg18[%c0_124, %c0_125] : memref<1x64xf32, #tpu.memory_space<vmem>>, vector<1x64xf32>
    %370 = vector.broadcast %369 : vector<1x64xf32> to vector<2x64xf32>
    %371 = arith.addf %368, %370 : vector<2x64xf32>
    %cst_126 = arith.constant 0.000000e+00 : f32
    %372 = vector.broadcast %cst_126 : f32 to vector<2x64xf32>
    %373 = arith.maximumf %371, %372 : vector<2x64xf32>
    %374 = arith.truncf %373 : vector<2x64xf32> to vector<2x64xbf16>
    %c0_127 = arith.constant 0 : index
    %c0_128 = arith.constant 0 : index
    %375 = vector.load %arg19[%c0_127, %c0_128] : memref<64x64xf32, #tpu.memory_space<vmem>>, vector<64x64xf32>
    %376 = arith.truncf %375 : vector<64x64xf32> to vector<64x64xbf16>
    %cst_129 = arith.constant dense<0.000000e+00> : vector<2x64xf32>
    %377 = tpu.matmul %374, %376, %cst_129 {dimension_numbers = #tpu.dot_dimension_numbers<[1], [0], [0], [1], [0, 0, 1, 1], [], []>} : vector<2x64xbf16>, vector<64x64xbf16>, vector<2x64xf32> -> vector<2x64xf32>
    %c0_130 = arith.constant 0 : index
    %c0_131 = arith.constant 0 : index
    %378 = vector.load %arg20[%c0_130, %c0_131] : memref<1x64xf32, #tpu.memory_space<vmem>>, vector<1x64xf32>
    %379 = vector.broadcast %378 : vector<1x64xf32> to vector<2x64xf32>
    %380 = arith.addf %377, %379 : vector<2x64xf32>
    %cst_132 = arith.constant 0.000000e+00 : f32
    %381 = vector.broadcast %cst_132 : f32 to vector<2x64xf32>
    %382 = arith.maximumf %380, %381 : vector<2x64xf32>
    %383 = arith.truncf %382 : vector<2x64xf32> to vector<2x64xbf16>
    %c0_133 = arith.constant 0 : index
    %c0_134 = arith.constant 0 : index
    %384 = vector.load %arg21[%c0_133, %c0_134] : memref<64x1xf32, #tpu.memory_space<vmem>>, vector<64x1xf32>
    %385 = arith.truncf %384 : vector<64x1xf32> to vector<64x1xbf16>
    %cst_135 = arith.constant dense<0.000000e+00> : vector<2x1xf32>
    %386 = tpu.matmul %383, %385, %cst_135 {dimension_numbers = #tpu.dot_dimension_numbers<[1], [0], [0], [1], [0, 0, 1, 1], [], []>} : vector<2x64xbf16>, vector<64x1xbf16>, vector<2x1xf32> -> vector<2x1xf32>
    %c3 = arith.constant 3 : index
    %387 = memref.load %arg22[%c3] : memref<4xf32, #tpu.memory_space<smem>>
    %388 = vector.broadcast %387 : f32 to vector<2x1xf32>
    %389 = arith.addf %386, %388 : vector<2x1xf32>
    %c0_136 = arith.constant 0 : index
    %c0_137 = arith.constant 0 : index
    %390 = vector.load %arg23[%c0_136, %c0_137] : memref<2x1xf32, #tpu.memory_space<vmem>>, vector<2x1xf32>
    tpu.vector_store %arg23[%c0_136, %c0_137], %389 {strides = array<i32>} : memref<2x1xf32, #tpu.memory_space<vmem>>, vector<2x1xf32>,
    return
  }
}

</mosaic_0001>

<llo_original>
// kernel: hiernet_forward.1
$region0: #{hiernet_forward.1}
  #allocation0 [shape = 'u32[]', space=smem, size = 0x4, offset = 0x4, fixed_abs, tag = 'smem constant byte address 0x4 - core index']
  #allocation1 [shape = 'u32[144,128]{1,0:T(1,128)}', space=vmem, size = 0x12000, scoped, tag = 'internal scratch']
  %s0 = inlined_call_operand.vmem [shape: f32[16,16], index: 0, kind: input, shape index: {}]
  %s1 = inlined_call_operand.vmem [shape: f32[16,4], index: 1, kind: input, shape index: {}]
  %s2 = inlined_call_operand.vmem [shape: f32[2,16], index: 2, kind: input, shape index: {}]
  %s3 = inlined_call_operand.vmem [shape: f32[16,2], index: 3, kind: input, shape index: {}]
  %s4 = inlined_call_operand.vmem [shape: f32[16,16], index: 4, kind: input, shape index: {}]
  %s5 = inlined_call_operand.vmem [shape: f32[2,8], index: 5, kind: input, shape index: {}]
  %s6 = inlined_call_operand.vmem [shape: f32[4,32], index: 6, kind: input, shape index: {}]
  %s7 = inlined_call_operand.vmem [shape: f32[1,32], index: 7, kind: input, shape index: {}]
  %s8 = inlined_call_operand.vmem [shape: f32[32,32], index: 8, kind: input, shape index: {}]
  %s9 = inlined_call_operand.vmem [shape: f32[1,32], index: 9, kind: input, shape index: {}]
  %s10 = inlined_call_operand.vmem [shape: f32[32,32], index: 10, kind: input, shape index: {}]
  %s11 = inlined_call_operand.vmem [shape: f32[1,32], index: 11, kind: input, shape index: {}]
  %s12 = inlined_call_operand.vmem [shape: f32[32,2], index: 12, kind: input, shape index: {}]
  %s13 = inlined_call_operand.vmem [shape: f32[32,2], index: 13, kind: input, shape index: {}]
  %s14 = inlined_call_operand.vmem [shape: f32[32,2], index: 14, kind: input, shape index: {}]
  %s15 = inlined_call_operand.vmem [shape: f32[32,64], index: 15, kind: input, shape index: {}]
  %s16 = inlined_call_operand.vmem [shape: f32[32,64], index: 16, kind: input, shape index: {}]
  %s17 = inlined_call_operand.vmem [shape: f32[8,64], index: 17, kind: input, shape index: {}]
  %s18 = inlined_call_operand.vmem [shape: f32[1,64], index: 18, kind: input, shape index: {}]
  %s19 = inlined_call_operand.vmem [shape: f32[64,64], index: 19, kind: input, shape index: {}]
  %s20 = inlined_call_operand.vmem [shape: f32[1,64], index: 20, kind: input, shape index: {}]
  %s21 = inlined_call_operand.vmem [shape: f32[64,1], index: 21, kind: input, shape index: {}]
  %s22 = inlined_call_operand.vmem [shape: f32[4], index: 22, kind: input, shape index: {}]
  %s23 = inlined_call_operand.vmem [shape: f32[2,1], index: 23, kind: output, shape index: {}]
  %s24 = sld [smem:[#allocation0]]
  $region106: #{hiernet_forward.1} parent=0
    _
  %s26 = ssub.s32 1, %s24
  %s27 = scalar_select 0, %s26, %s24
  $region1: #{hiernet_forward.1} parent=0
    #allocation2 [shape = 'u8[512]{0}', space=smem, size = 0x200, scoped, tag = 'input window, operand 22, single buffered']
    #allocation3 [shape = 's32[1]{0}', space=sflag, size = 0x4, scoped, tag = 'scoped memory for hiernet_forward.1']
    %28 = vsyncpa [#allocation3], 0
    // Predicated region
    $region2: #{hiernet_forward.1} parent=1 // pred_check
      _
    $region3: #{hiernet_forward.1} parent=1 // pred_check_branch
      %30 = sbr.rel (0) target = $region5
    $region4: #{hiernet_forward.1} parent=1 // pred_region
      _
    $region5: #{hiernet_forward.1} parent=1 // pred_fallthru
      _
    // Predicated region
    $region6: #{hiernet_forward.1} parent=1 // pred_check
      _
    $region7: #{hiernet_forward.1} parent=1 // pred_check_branch
      %32 = sbr.rel (0) target = $region9
    $region8: #{hiernet_forward.1} parent=1 // pred_region
      _
    $region9: #{hiernet_forward.1} parent=1 // pred_fallthru
      _
    // Predicated region
    $region10: #{hiernet_forward.1} parent=1 // pred_check
      _
    $region11: #{hiernet_forward.1} parent=1 // pred_check_branch
      %34 = sbr.rel (0) target = $region13
    $region12: #{hiernet_forward.1} parent=1 // pred_region
      _
    $region13: #{hiernet_forward.1} parent=1 // pred_fallthru
      _
    // Predicated region
    $region14: #{hiernet_forward.1} parent=1 // pred_check
      _
    $region15: #{hiernet_forward.1} parent=1 // pred_check_branch
      %36 = sbr.rel (0) target = $region17
    $region16: #{hiernet_forward.1} parent=1 // pred_region
      _
    $region17: #{hiernet_forward.1} parent=1 // pred_fallthru
      _
    // Predicated region
    $region18: #{hiernet_forward.1} parent=1 // pred_check
      _
    $region19: #{hiernet_forward.1} parent=1 // pred_check_branch
      %38 = sbr.rel (0) target = $region21
    $region20: #{hiernet_forward.1} parent=1 // pred_region
      _
    $region21: #{hiernet_forward.1} parent=1 // pred_fallthru
      _
    // Predicated region
    $region22: #{hiernet_forward.1} parent=1 // pred_check
      _
    $region23: #{hiernet_forward.1} parent=1 // pred_check_branch
      %40 = sbr.rel (0) target = $region25
    $region24: #{hiernet_forward.1} parent=1 // pred_region
      _
    $region25: #{hiernet_forward.1} parent=1 // pred_fallthru
      _
    // Predicated region
    $region26: #{hiernet_forward.1} parent=1 // pred_check
      _
    $region27: #{hiernet_forward.1} parent=1 // pred_check_branch
      %42 = sbr.rel (0) target = $region29
    $region28: #{hiernet_forward.1} parent=1 // pred_region
      _
    $region29: #{hiernet_forward.1} parent=1 // pred_fallthru
      _
    // Predicated region
    $region30: #{hiernet_forward.1} parent=1 // pred_check
      _
    $region31: #{hiernet_forward.1} parent=1 // pred_check_branch
      %44 = sbr.rel (0) target = $region33
    $region32: #{hiernet_forward.1} parent=1 // pred_region
      _
    $region33: #{hiernet_forward.1} parent=1 // pred_fallthru
      _
    // Predicated region
    $region34: #{hiernet_forward.1} parent=1 // pred_check
      _
    $region35: #{hiernet_forward.1} parent=1 // pred_check_branch
      %46 = sbr.rel (0) target = $region37
    $region36: #{hiernet_forward.1} parent=1 // pred_region
      _
    $region37: #{hiernet_forward.1} parent=1 // pred_fallthru
      _
    // Predicated region
    $region38: #{hiernet_forward.1} parent=1 // pred_check
      _
    $region39: #{hiernet_forward.1} parent=1 // pred_check_branch
      %48 = sbr.rel (0) target = $region41
    $region40: #{hiernet_forward.1} parent=1 // pred_region
      _
    $region41: #{hiernet_forward.1} parent=1 // pred_fallthru
      _
    // Predicated region
    $region42: #{hiernet_forward.1} parent=1 // pred_check
      _
    $region43: #{hiernet_forward.1} parent=1 // pred_check_branch
      %50 = sbr.rel (0) target = $region45
    $region44: #{hiernet_forward.1} parent=1 // pred_region
      _
    $region45: #{hiernet_forward.1} parent=1 // pred_fallthru
      _
    // Predicated region
    $region46: #{hiernet_forward.1} parent=1 // pred_check
      _
    $region47: #{hiernet_forward.1} parent=1 // pred_check_branch
      %52 = sbr.rel (0) target = $region49
    $region48: #{hiernet_forward.1} parent=1 // pred_region
      _
    $region49: #{hiernet_forward.1} parent=1 // pred_fallthru
      _
    // Predicated region
    $region50: #{hiernet_forward.1} parent=1 // pred_check
      _
    $region51: #{hiernet_forward.1} parent=1 // pred_check_branch
      %54 = sbr.rel (0) target = $region53
    $region52: #{hiernet_forward.1} parent=1 // pred_region
      _
    $region53: #{hiernet_forward.1} parent=1 // pred_fallthru
      _
    // Predicated region
    $region54: #{hiernet_forward.1} parent=1 // pred_check
      _
    $region55: #{hiernet_forward.1} parent=1 // pred_check_branch
      %56 = sbr.rel (0) target = $region57
    $region56: #{hiernet_forward.1} parent=1 // pred_region
      _
    $region57: #{hiernet_forward.1} parent=1 // pred_fallthru
      _
    // Predicated region
    $region58: #{hiernet_forward.1} parent=1 // pred_check
      _
    $region59: #{hiernet_forward.1} parent=1 // pred_check_branch
      %58 = sbr.rel (0) target = $region61
    $region60: #{hiernet_forward.1} parent=1 // pred_region
      _
    $region61: #{hiernet_forward.1} parent=1 // pred_fallthru
      _
    // Predicated region
    $region62: #{hiernet_forward.1} parent=1 // pred_check
      _
    $region63: #{hiernet_forward.1} parent=1 // pred_check_branch
      %60 = sbr.rel (0) target = $region65
    $region64: #{hiernet_forward.1} parent=1 // pred_region
      _
    $region65: #{hiernet_forward.1} parent=1 // pred_fallthru
      _
    // Predicated region
    $region66: #{hiernet_forward.1} parent=1 // pred_check
      _
    $region67: #{hiernet_forward.1} parent=1 // pred_check_branch
      %62 = sbr.rel (0) target = $region69
    $region68: #{hiernet_forward.1} parent=1 // pred_region
      _
    $region69: #{hiernet_forward.1} parent=1 // pred_fallthru
      _
    // Predicated region
    $region70: #{hiernet_forward.1} parent=1 // pred_check
      _
    $region71: #{hiernet_forward.1} parent=1 // pred_check_branch
      %64 = sbr.rel (0) target = $region73
    $region72: #{hiernet_forward.1} parent=1 // pred_region
      _
    $region73: #{hiernet_forward.1} parent=1 // pred_fallthru
      _
    // Predicated region
    $region74: #{hiernet_forward.1} parent=1 // pred_check
      _
    $region75: #{hiernet_forward.1} parent=1 // pred_check_branch
      %66 = sbr.rel (0) target = $region77
    $region76: #{hiernet_forward.1} parent=1 // pred_region
      _
    $region77: #{hiernet_forward.1} parent=1 // pred_fallthru
      _
    // Predicated region
    $region78: #{hiernet_forward.1} parent=1 // pred_check
      _
    $region79: #{hiernet_forward.1} parent=1 // pred_check_branch
      %68 = sbr.rel (0) target = $region81
    $region80: #{hiernet_forward.1} parent=1 // pred_region
      _
    $region81: #{hiernet_forward.1} parent=1 // pred_fallthru
      _
    // Predicated region
    $region82: #{hiernet_forward.1} parent=1 // pred_check
      _
    $region83: #{hiernet_forward.1} parent=1 // pred_check_branch
      %70 = sbr.rel (0) target = $region85
    $region84: #{hiernet_forward.1} parent=1 // pred_region
      _
    $region85: #{hiernet_forward.1} parent=1 // pred_fallthru
      _
    // Predicated region
    $region86: #{hiernet_forward.1} parent=1 // pred_check
      _
    $region87: #{hiernet_forward.1} parent=1 // pred_check_branch
      %72 = sbr.rel (0) target = $region89
    $region88: #{hiernet_forward.1} parent=1 // pred_region
      _
    $region89: #{hiernet_forward.1} parent=1 // pred_fallthru
      _
    // Predicated region
    $region90: #{hiernet_forward.1} parent=1 // pred_check
      _
    $region91: #{hiernet_forward.1} parent=1 // pred_check_branch
      %74 = sbr.rel (0) target = $region93
    $region92: #{hiernet_forward.1} parent=1 // pred_region
      %s76 = ssub.s32 16, 16
      %77 = vsyncadd [#allocation3], %s76
      %s79 = sshll.u32 %s22, 4
      %s80 = int_to_ptr.vmem [resolvable:$true] %s79
      %82 = dma.vmem_to_smem %s80, 16, [#allocation2], [#allocation3]
    $region93: #{hiernet_forward.1} parent=1 // pred_fallthru
      _
    // Predicated region
    $region94: #{hiernet_forward.1} parent=1 // pred_check
      _
    $region95: #{hiernet_forward.1} parent=1 // pred_check_branch
      %84 = sbr.rel (0) target = $region97
    $region96: #{hiernet_forward.1} parent=1 // pred_region
      %85 = dma.done [#allocation3], 16
    $region97: #{hiernet_forward.1} parent=1 // pred_fallthru
      _
    %86 = sfence
    %v88 = vld [vmem:[%s0] sm:$0xff]
    %v89 = vld [vmem:[%s0 + $0x8] sm:$0xff]
    %v90 = vpack.c.bf16 %v89, %v88
    %v91 = vld [vmem:[%s4] sm:$0xff]
    %v92 = vld [vmem:[%s4 + $0x8] sm:$0xff]
    %v93 = vld [vmem:[%s2] sm:$0x3]
    %v94 = vpack.c.bf16 %v93, %v93
    %v95 = vld [vmem:[%s3] sm:$0xff]
    %v96 = vld [vmem:[%s3 + $0x8] sm:$0xff]
    %v97 = vlaneseq
    %v98 = vshrl.u32 %v97, 7
    %v99 = vadd.s32 %v98, 8
    %v100 = vlaneseq
    %v101 = vand.u32 %v100, 127
    %vm102 = vcmp.lt.s32.totalorder %v101, %v98
    %vm103 = vcmp.lt.s32.totalorder %v101, %v99
    %v104 = vld [vmem:[%s1] sm:$0xff]
    %v105 = vld [vmem:[%s1 + $0x8] sm:$0xff]
    %vm106 = vcmask 130048
    %v108 = vsel %vm106, %v88, 0
    %v111 = vsel %vm106, %v89, 0
    %113 = vmatprep.subr.mxu0 0.0
    %114 = vmatpush1.msra.mxu0 1.0
    %115 = vmatprep.subr.mxu0 0.0
    %116 = vmatpush1.msra.mxu0 1.0
    %117 = vmatprep.subr.mxu0 0.0
    %118 = vmatpush1.msra.mxu0 0.0
    %119 = vmatprep.subr.mxu0 0.0
    %120 = vmatpush1.msra.mxu0 0.0
    %121 = vmatprep.subr.mxu0 0.0
    %122 = vmatpush1.msra.mxu0 0.0
    %123 = vmatprep.subr.mxu0 0.0
    %124 = vmatpush1.msra.mxu0 0.0
    %125 = vmatprep.subr.mxu0 0.0
    %126 = vmatpush1.msra.mxu0 0.0
    %127 = vmatprep.subr.mxu0 0.0
    %128 = vmatpush1.msra.mxu0 0.0
    %129 = vmatprep.subr.mxu0 0.0
    %130 = vmatpush1.msra.mxu0 0.0
    %131 = vmatprep.subr.mxu0 0.0
    %132 = vmatpush1.msra.mxu0 0.0
    %133 = vmatprep.subr.mxu0 0.0
    %134 = vmatpush1.msra.mxu0 0.0
    %135 = vmatprep.subr.mxu0 0.0
    %136 = vmatpush1.msra.mxu0 0.0
    %137 = vmatprep.subr.mxu0 0.0
    %138 = vmatpush1.msra.mxu0 0.0
    %139 = vmatprep.subr.mxu0 0.0
    %140 = vmatpush1.msra.mxu0 0.0
    %141 = vmatprep.subr.mxu0 0.0
    %142 = vmatpush1.msra.mxu0 0.0
    %143 = vmatprep.subr.mxu0 0.0
    %144 = vmatpush1.msra.mxu0 0.0
    %145 = vmatprep.subr.mxu0 0.0
    %146 = vmatpush1.msra.mxu0 0.0
    %147 = vmatprep.subr.mxu0 0.0
    %148 = vmatpush1.msra.mxu0 0.0
    %149 = vmatprep.subr.mxu0 0.0
    %150 = vmatpush1.msra.mxu0 0.0
    %151 = vmatprep.subr.mxu0 0.0
    %152 = vmatpush1.msra.mxu0 0.0
    %153 = vmatprep.subr.mxu0 0.0
    %154 = vmatpush1.msra.mxu0 0.0
    %155 = vmatprep.subr.mxu0 0.0
    %156 = vmatpush1.msra.mxu0 0.0
    %157 = vmatprep.subr.mxu0 0.0
    %158 = vmatpush1.msra.mxu0 0.0
    %159 = vmatprep.subr.mxu0 0.0
    %160 = vmatpush1.msra.mxu0 0.0
    %161 = vmatprep.subr.mxu0 0.0
    %162 = vmatpush1.msra.mxu0 0.0
    %163 = vmatprep.subr.mxu0 0.0
    %164 = vmatpush1.msra.mxu0 0.0
    %165 = vmatprep.subr.mxu0 0.0
    %166 = vmatpush1.msra.mxu0 0.0
    %167 = vmatprep.subr.mxu0 0.0
    %168 = vmatpush1.msra.mxu0 0.0
    %169 = vmatprep.subr.mxu0 0.0
    %170 = vmatpush1.msra.mxu0 0.0
    %171 = vmatprep.subr.mxu0 0.0
    %172 = vmatpush1.msra.mxu0 0.0
    %173 = vmatprep.subr.mxu0 0.0
    %174 = vmatpush1.msra.mxu0 0.0
    %175 = vmatprep.subr.mxu0 0.0
    %176 = vmatpush1.msra.mxu0 0.0
    %177 = vmatprep.mubr.f32.mxu0 0.0
    %178 = vmatmul.mubr.f32.gmra.mrb[0].mxu0 %v108
    %v179 = vpop.f32.mrb[0].mxu0
    %v180 = vadd.f32 1.0, %v179
    %v181 = vpop.f32.mrb[0].mxu0
    %182 = vmatprep.mubr.f32.mxu0 0.0
    %183 = vmatmul.mubr.f32.gmra.mrb[0].mxu0 %v111
    %v184 = vpop.f32.mrb[0].mxu0
    %v185 = vadd.f32 1.0, %v184
    %v186 = vpop.f32.mrb[0].mxu0
    %187 = vdwg.mxu0
    %vm188 = vcmp.gt.f32.partialorder %v180, 0.0
    %vm189 = vcmp.gt.f32.partialorder %v185, 0.0
    %v190 = vmax.f32 %v180, 1.0
    %v191 = vmax.f32 %v185, 1.0
    %v192 = vrsqrt.pop %v190
    %v193 = vrsqrt.pop %v191
    %v194 = vsel %vm188, %v192, 0.0
    %v195 = vsel %vm189, %v193, 0.0
    %v196 = vpack.c.bf16 %v105, %v104
    %v197 = vld [vmem:[%s6] sm:$0xf]
    %v198 = vpack.c.bf16 %v197, %v197
    %vm199 = vcmask 31744
    %v201 = vsel %vm199, %v196, 0
    %vm203 = vcmask 1041408
    %v205 = vsel %vm203, %v198, 0
    %207 = vmatprep.subr.bf16.mxu0 0
    %208 = vmatpush1.bf16.msra.mxu0 %v205
    %209 = vmatprep.subr.bf16.mxu0 0
    %210 = vmatpush1.bf16.msra.mxu0 0
    %211 = vmatprep.subr.bf16.mxu0 0
    %212 = vmatpush1.bf16.msra.mxu0 0
    %213 = vmatprep.subr.bf16.mxu0 0
    %214 = vmatpush1.bf16.msra.mxu0 0
    %215 = vmatprep.subr.bf16.mxu0 0
    %216 = vmatpush1.bf16.msra.mxu0 0
    %217 = vmatprep.subr.bf16.mxu0 0
    %218 = vmatpush1.bf16.msra.mxu0 0
    %219 = vmatprep.subr.bf16.mxu0 0
    %220 = vmatpush1.bf16.msra.mxu0 0
    %221 = vmatprep.subr.bf16.mxu0 0
    %222 = vmatpush1.bf16.msra.mxu0 0
    %223 = vmatprep.subr.bf16.mxu0 0
    %224 = vmatpush1.bf16.msra.mxu0 0
    %225 = vmatprep.subr.bf16.mxu0 0
    %226 = vmatpush1.bf16.msra.mxu0 0
    %227 = vmatprep.subr.bf16.mxu0 0
    %228 = vmatpush1.bf16.msra.mxu0 0
    %229 = vmatprep.subr.bf16.mxu0 0
    %230 = vmatpush1.bf16.msra.mxu0 0
    %231 = vmatprep.subr.bf16.mxu0 0
    %232 = vmatpush1.bf16.msra.mxu0 0
    %233 = vmatprep.subr.bf16.mxu0 0
    %234 = vmatpush1.bf16.msra.mxu0 0
    %235 = vmatprep.subr.bf16.mxu0 0
    %236 = vmatpush1.bf16.msra.mxu0 0
    %237 = vmatprep.subr.bf16.mxu0 0
    %238 = vmatpush1.bf16.msra.mxu0 0
    %239 = vmatprep.mubr.bf16.mxu0 0
    %240 = vmatmul.mubr.bf16.gmra.mrb[0].mxu0 %v201
    %v241 = vpop.f32.mrb[0].mxu0
    %v242 = vadd.f32 0.0, %v241
    %v243 = vpop.f32.mrb[0].mxu0
    %v244 = vpop.f32.mrb[0].mxu0
    %v245 = vadd.f32 0.0, %v244
    %v246 = vpop.f32.mrb[0].mxu0
    %247 = vdwg.mxu0
    %249 = vset.pattern.permute.xlu0 0
    %250 = vperm.xlu0 %249, %v194
    %v251 = vpop.permute.xlu0 %250
    %254 = vset.pattern.permute.xlu0 0
    %255 = vperm.xlu0 %254, %v195
    %v256 = vpop.permute.xlu0 %255
    %v258 = vmul.f32 %v251, %v242
    %v259 = vmul.f32 %v256, %v245
    %v260 = vpack.c.bf16 %v259, %v258
    %v262 = vsel %vm106, %v90, 0
    %264 = vmatprep.subr.bf16.mxu0 0
    %265 = vmatpush1.bf16.msra.mxu0 %v260
    %266 = vmatprep.subr.bf16.mxu0 0
    %267 = vmatpush1.bf16.msra.mxu0 0
    %268 = vmatprep.subr.bf16.mxu0 0
    %269 = vmatpush1.bf16.msra.mxu0 0
    %270 = vmatprep.subr.bf16.mxu0 0
    %271 = vmatpush1.bf16.msra.mxu0 0
    %272 = vmatprep.subr.bf16.mxu0 0
    %273 = vmatpush1.bf16.msra.mxu0 0
    %274 = vmatprep.subr.bf16.mxu0 0
    %275 = vmatpush1.bf16.msra.mxu0 0
    %276 = vmatprep.subr.bf16.mxu0 0
    %277 = vmatpush1.bf16.msra.mxu0 0
    %278 = vmatprep.subr.bf16.mxu0 0
    %279 = vmatpush1.bf16.msra.mxu0 0
    %280 = vmatprep.subr.bf16.mxu0 0
    %281 = vmatpush1.bf16.msra.mxu0 0
    %282 = vmatprep.subr.bf16.mxu0 0
    %283 = vmatpush1.bf16.msra.mxu0 0
    %284 = vmatprep.subr.bf16.mxu0 0
    %285 = vmatpush1.bf16.msra.mxu0 0
    %286 = vmatprep.subr.bf16.mxu0 0
    %287 = vmatpush1.bf16.msra.mxu0 0
    %288 = vmatprep.subr.bf16.mxu0 0
    %289 = vmatpush1.bf16.msra.mxu0 0
    %290 = vmatprep.subr.bf16.mxu0 0
    %291 = vmatpush1.bf16.msra.mxu0 0
    %292 = vmatprep.subr.bf16.mxu0 0
    %293 = vmatpush1.bf16.msra.mxu0 0
    %294 = vmatprep.subr.bf16.mxu0 0
    %295 = vmatpush1.bf16.msra.mxu0 0
    %296 = vmatprep.mubr.bf16.mxu0 0
    %297 = vmatmul.mubr.bf16.gmra.mrb[0].mxu0 %v262
    %v298 = vpop.f32.mrb[0].mxu0
    %v299 = vadd.f32 %v258, %v298
    %v300 = vpop.f32.mrb[0].mxu0
    %v301 = vpop.f32.mrb[0].mxu0
    %v302 = vadd.f32 %v259, %v301
    %v303 = vpop.f32.mrb[0].mxu0
    %304 = vdwg.mxu0
    %v305 = vmul.f32 %v251, %v299
    %v306 = vmul.f32 %v256, %v302
    %v307 = vld [vmem:[%s7] sm:$0x1]
    %v309 = vlaneseq
    %v310 = vshrl.u32 %v309, 7
    %v311 = vsub.s32 0, %v310
    %v312 = vrot.slane %v307, %v311
    %v314 = vadd.f32 %v305, %v312
    %v315 = vadd.f32 %v306, %v312
    %v316 = vmax.f32 %v314, 0.0
    %v317 = vmax.f32 %v315, 0.0
    %v318 = vpack.c.bf16 %v317, %v316
    %v319 = vld [vmem:[%s12] sm:$0xff]
    %v320 = vld [vmem:[%s12 + $0x8] sm:$0xff]
    %v321 = vld [vmem:[%s12 + $0x10] sm:$0xff]
    %v322 = vld [vmem:[%s12 + $0x18] sm:$0xff]
    %v323 = vpack.c.bf16 %v320, %v319
    %v324 = vpack.c.bf16 %v322, %v321
    %vm325 = vcmask 261120
    %v327 = vsel %vm325, %v318, 0
    %329 = vmatprep.subr.bf16.mxu0 0
    %330 = vmatpush1.bf16.msra.mxu0 %v323
    %331 = vmatprep.subr.bf16.mxu0 0
    %332 = vmatpush1.bf16.msra.mxu0 %v324
    %333 = vmatprep.subr.bf16.mxu0 0
    %334 = vmatpush1.bf16.msra.mxu0 0
    %335 = vmatprep.subr.bf16.mxu0 0
    %336 = vmatpush1.bf16.msra.mxu0 0
    %337 = vmatprep.subr.bf16.mxu0 0
    %338 = vmatpush1.bf16.msra.mxu0 0
    %339 = vmatprep.subr.bf16.mxu0 0
    %340 = vmatpush1.bf16.msra.mxu0 0
    %341 = vmatprep.subr.bf16.mxu0 0
    %342 = vmatpush1.bf16.msra.mxu0 0
    %343 = vmatprep.subr.bf16.mxu0 0
    %344 = vmatpush1.bf16.msra.mxu0 0
    %345 = vmatprep.subr.bf16.mxu0 0
    %346 = vmatpush1.bf16.msra.mxu0 0
    %347 = vmatprep.subr.bf16.mxu0 0
    %348 = vmatpush1.bf16.msra.mxu0 0
    %349 = vmatprep.subr.bf16.mxu0 0
    %350 = vmatpush1.bf16.msra.mxu0 0
    %351 = vmatprep.subr.bf16.mxu0 0
    %352 = vmatpush1.bf16.msra.mxu0 0
    %353 = vmatprep.subr.bf16.mxu0 0
    %354 = vmatpush1.bf16.msra.mxu0 0
    %355 = vmatprep.subr.bf16.mxu0 0
    %356 = vmatpush1.bf16.msra.mxu0 0
    %357 = vmatprep.subr.bf16.mxu0 0
    %358 = vmatpush1.bf16.msra.mxu0 0
    %359 = vmatprep.subr.bf16.mxu0 0
    %360 = vmatpush1.bf16.msra.mxu0 0
    %361 = vmatprep.mubr.bf16.mxu0 0
    %362 = vmatmul.mubr.bf16.gmra.mrb[0].mxu0 %v327
    %v363 = vpop.f32.mrb[0].mxu0
    %v364 = vadd.f32 0.0, %v363
    %v365 = vpop.f32.mrb[0].mxu0
    %v366 = vpop.f32.mrb[0].mxu0
    %v367 = vadd.f32 0.0, %v366
    %v368 = vpop.f32.mrb[0].mxu0
    %369 = vdwg.mxu0
    %v370 = vpack.c.bf16 %v367, %v364
    %s371 = sld [smem:[#allocation2]]
    %v372 = vstv %s371
    %373 = vmatprep.subr.bf16.mxu0 0
    %374 = vmatpush1.bf16.msra.mxu0 %v370
    %375 = vmatprep.subr.bf16.mxu0 0
    %376 = vmatpush1.bf16.msra.mxu0 0
    %377 = vmatprep.subr.bf16.mxu0 0
    %378 = vmatpush1.bf16.msra.mxu0 0
    %379 = vmatprep.subr.bf16.mxu0 0
    %380 = vmatpush1.bf16.msra.mxu0 0
    %381 = vmatprep.subr.bf16.mxu0 0
    %382 = vmatpush1.bf16.msra.mxu0 0
    %383 = vmatprep.subr.bf16.mxu0 0
    %384 = vmatpush1.bf16.msra.mxu0 0
    %385 = vmatprep.subr.bf16.mxu0 0
    %386 = vmatpush1.bf16.msra.mxu0 0
    %387 = vmatprep.subr.bf16.mxu0 0
    %388 = vmatpush1.bf16.msra.mxu0 0
    %389 = vmatprep.subr.bf16.mxu0 0
    %390 = vmatpush1.bf16.msra.mxu0 0
    %391 = vmatprep.subr.bf16.mxu0 0
    %392 = vmatpush1.bf16.msra.mxu0 0
    %393 = vmatprep.subr.bf16.mxu0 0
    %394 = vmatpush1.bf16.msra.mxu0 0
    %395 = vmatprep.subr.bf16.mxu0 0
    %396 = vmatpush1.bf16.msra.mxu0 0
    %397 = vmatprep.subr.bf16.mxu0 0
    %398 = vmatpush1.bf16.msra.mxu0 0
    %399 = vmatprep.subr.bf16.mxu0 0
    %400 = vmatpush1.bf16.msra.mxu0 0
    %401 = vmatprep.subr.bf16.mxu0 0
    %402 = vmatpush1.bf16.msra.mxu0 0
    %403 = vmatprep.subr.bf16.mxu0 0
    %404 = vmatpush1.bf16.msra.mxu0 0
    %405 = vmatprep.mubr.bf16.mxu0 0
    %406 = vmatmul.mubr.bf16.gmra.mrb[0].mxu0 %v262
    %v407 = vpop.f32.mrb[0].mxu0
    %v408 = vadd.f32 %v372, %v407
    %v409 = vpop.f32.mrb[0].mxu0
    %v410 = vpop.f32.mrb[0].mxu0
    %v411 = vadd.f32 %v372, %v410
    %v412 = vpop.f32.mrb[0].mxu0
    %413 = vdwg.mxu0
    %416 = vrot.lane.b32.xlu0 %v364, 127
    %v417 = vpop.permute.xlu0 %416
    %418 = vrot.lane.b32.xlu0 %v367, 127
    %v419 = vpop.permute.xlu0 %418
    %v422 = vadd.f32 %v408, %v417
    %v423 = vadd.f32 %v411, %v419
    %v424 = vtanh.pop %v422
    %v425 = vtanh.pop %v423
    %427 = vset.pattern.permute.xlu0 0
    %428 = vperm.xlu0 %427, %v424
    %v429 = vpop.permute.xlu0 %428
    %432 = vset.pattern.permute.xlu0 0
    %433 = vperm.xlu0 %432, %v425
    %v434 = vpop.permute.xlu0 %433
    %vm436 = vcmask 7168
    %v438 = vsel %vm436, 1.0, 0
    %v440 = vsel %vm436, %v424, 0
    %v442 = vsel %vm436, %v425, 0
    %444 = vmatprep.subr.mxu0 0.0
    %445 = vmatpush1.xpose.msra.mxu0 %v440
    %446 = vmatprep.subr.mxu0 0.0
    %447 = vmatpush1.xpose.msra.mxu0 %v442
    %448 = vmatprep.subr.mxu0 0.0
    %449 = vmatpush1.xpose.msra.mxu0 0.0
    %450 = vmatprep.subr.mxu0 0.0
    %451 = vmatpush1.xpose.msra.mxu0 0.0
    %452 = vmatprep.subr.mxu0 0.0
    %453 = vmatpush1.xpose.msra.mxu0 0.0
    %454 = vmatprep.subr.mxu0 0.0
    %455 = vmatpush1.xpose.msra.mxu0 0.0
    %456 = vmatprep.subr.mxu0 0.0
    %457 = vmatpush1.xpose.msra.mxu0 0.0
    %458 = vmatprep.subr.mxu0 0.0
    %459 = vmatpush1.xpose.msra.mxu0 0.0
    %460 = vmatprep.subr.mxu0 0.0
    %461 = vmatpush1.xpose.msra.mxu0 0.0
    %462 = vmatprep.subr.mxu0 0.0
    %463 = vmatpush1.xpose.msra.mxu0 0.0
    %464 = vmatprep.subr.mxu0 0.0
    %465 = vmatpush1.xpose.msra.mxu0 0.0
    %466 = vmatprep.subr.mxu0 0.0
    %467 = vmatpush1.xpose.msra.mxu0 0.0
    %468 = vmatprep.subr.mxu0 0.0
    %469 = vmatpush1.xpose.msra.mxu0 0.0
    %470 = vmatprep.subr.mxu0 0.0
    %471 = vmatpush1.xpose.msra.mxu0 0.0
    %472 = vmatprep.subr.mxu0 0.0
    %473 = vmatpush1.xpose.msra.mxu0 0.0
    %474 = vmatprep.subr.mxu0 0.0
    %475 = vmatpush1.xpose.msra.mxu0 0.0
    %476 = vmatprep.subr.mxu0 0.0
    %477 = vmatpush1.xpose.msra.mxu0 0.0
    %478 = vmatprep.subr.mxu0 0.0
    %479 = vmatpush1.xpose.msra.mxu0 0.0
    %480 = vmatprep.subr.mxu0 0.0
    %481 = vmatpush1.xpose.msra.mxu0 0.0
    %482 = vmatprep.subr.mxu0 0.0
    %483 = vmatpush1.xpose.msra.mxu0 0.0
    %484 = vmatprep.subr.mxu0 0.0
    %485 = vmatpush1.xpose.msra.mxu0 0.0
    %486 = vmatprep.subr.mxu0 0.0
    %487 = vmatpush1.xpose.msra.mxu0 0.0
    %488 = vmatprep.subr.mxu0 0.0
    %489 = vmatpush1.xpose.msra.mxu0 0.0
    %490 = vmatprep.subr.mxu0 0.0
    %491 = vmatpush1.xpose.msra.mxu0 0.0
    %492 = vmatprep.subr.mxu0 0.0
    %493 = vmatpush1.xpose.msra.mxu0 0.0
    %494 = vmatprep.subr.mxu0 0.0
    %495 = vmatpush1.xpose.msra.mxu0 0.0
    %496 = vmatprep.subr.mxu0 0.0
    %497 = vmatpush1.xpose.msra.mxu0 0.0
    %498 = vmatprep.subr.mxu0 0.0
    %499 = vmatpush1.xpose.msra.mxu0 0.0
    %500 = vmatprep.subr.mxu0 0.0
    %501 = vmatpush1.xpose.msra.mxu0 0.0
    %502 = vmatprep.subr.mxu0 0.0
    %503 = vmatpush1.xpose.msra.mxu0 0.0
    %504 = vmatprep.subr.mxu0 0.0
    %505 = vmatpush1.xpose.msra.mxu0 0.0
    %506 = vmatprep.subr.mxu0 0.0
    %507 = vmatpush1.xpose.msra.mxu0 0.0
    %508 = vmatprep.mubr.f32.mxu0 0.0
    %509 = vmatmul.mubr.f32.gmra.mrb[0].mxu0 %v438
    %v510 = vpop.f32.mrb[0].mxu0
    %v511 = vadd.f32 0.0, %v510
    %v512 = vpop.f32.mrb[0].mxu0
    %513 = vmatprep.mubr.f32.mxu0 0.0
    %514 = vmatmul.mubr.f32.gmra.mrb[0].mxu0 %v438
    %v515 = vpop.f32.mrb[0].mxu0
    %v516 = vadd.f32 0.0, %v515
    %v517 = vpop.f32.mrb[0].mxu0
    %518 = vdwg.mxu0
    %vm519 = vcmp.gt.f32.partialorder %v511, %v429
    %vm520 = vcmp.gt.f32.partialorder %v516, %v434
    %vm521 = vcmp.eq.f32.partialorder %v511, %v429
    %vm522 = vcmp.eq.f32.partialorder %v516, %v434
    %vm523 = vmand %vm521, %vm102
    %vm524 = vmand %vm522, %vm103
    %vm525 = vmor %vm519, %vm523
    %vm526 = vmor %vm520, %vm524
    %v527 = vsel %vm525, 1, 0
    %v528 = vsel %vm526, 1, 0
    %v529 = vcvt.s32.f32 %v527
    %v530 = vcvt.s32.f32 %v528
    %v531 = vmul.f32 %v91, %v529
    %v532 = vmul.f32 %v92, %v530
    %v534 = vsel %vm106, %v531, 0
    %v537 = vsel %vm106, %v532, 0
    %539 = vmatprep.subr.mxu0 0.0
    %540 = vmatpush1.msra.mxu0 1.0
    %541 = vmatprep.subr.mxu0 0.0
    %542 = vmatpush1.msra.mxu0 1.0
    %543 = vmatprep.subr.mxu0 0.0
    %544 = vmatpush1.msra.mxu0 0.0
    %545 = vmatprep.subr.mxu0 0.0
    %546 = vmatpush1.msra.mxu0 0.0
    %547 = vmatprep.subr.mxu0 0.0
    %548 = vmatpush1.msra.mxu0 0.0
    %549 = vmatprep.subr.mxu0 0.0
    %550 = vmatpush1.msra.mxu0 0.0
    %551 = vmatprep.subr.mxu0 0.0
    %552 = vmatpush1.msra.mxu0 0.0
    %553 = vmatprep.subr.mxu0 0.0
    %554 = vmatpush1.msra.mxu0 0.0
    %555 = vmatprep.subr.mxu0 0.0
    %556 = vmatpush1.msra.mxu0 0.0
    %557 = vmatprep.subr.mxu0 0.0
    %558 = vmatpush1.msra.mxu0 0.0
    %559 = vmatprep.subr.mxu0 0.0
    %560 = vmatpush1.msra.mxu0 0.0
    %561 = vmatprep.subr.mxu0 0.0
    %562 = vmatpush1.msra.mxu0 0.0
    %563 = vmatprep.subr.mxu0 0.0
    %564 = vmatpush1.msra.mxu0 0.0
    %565 = vmatprep.subr.mxu0 0.0
    %566 = vmatpush1.msra.mxu0 0.0
    %567 = vmatprep.subr.mxu0 0.0
    %568 = vmatpush1.msra.mxu0 0.0
    %569 = vmatprep.subr.mxu0 0.0
    %570 = vmatpush1.msra.mxu0 0.0
    %571 = vmatprep.subr.mxu0 0.0
    %572 = vmatpush1.msra.mxu0 0.0
    %573 = vmatprep.subr.mxu0 0.0
    %574 = vmatpush1.msra.mxu0 0.0
    %575 = vmatprep.subr.mxu0 0.0
    %576 = vmatpush1.msra.mxu0 0.0
    %577 = vmatprep.subr.mxu0 0.0
    %578 = vmatpush1.msra.mxu0 0.0
    %579 = vmatprep.subr.mxu0 0.0
    %580 = vmatpush1.msra.mxu0 0.0
    %581 = vmatprep.subr.mxu0 0.0
    %582 = vmatpush1.msra.mxu0 0.0
    %583 = vmatprep.subr.mxu0 0.0
    %584 = vmatpush1.msra.mxu0 0.0
    %585 = vmatprep.subr.mxu0 0.0
    %586 = vmatpush1.msra.mxu0 0.0
    %587 = vmatprep.subr.mxu0 0.0
    %588 = vmatpush1.msra.mxu0 0.0
    %589 = vmatprep.subr.mxu0 0.0
    %590 = vmatpush1.msra.mxu0 0.0
    %591 = vmatprep.subr.mxu0 0.0
    %592 = vmatpush1.msra.mxu0 0.0
    %593 = vmatprep.subr.mxu0 0.0
    %594 = vmatpush1.msra.mxu0 0.0
    %595 = vmatprep.subr.mxu0 0.0
    %596 = vmatpush1.msra.mxu0 0.0
    %597 = vmatprep.subr.mxu0 0.0
    %598 = vmatpush1.msra.mxu0 0.0
    %599 = vmatprep.subr.mxu0 0.0
    %600 = vmatpush1.msra.mxu0 0.0
    %601 = vmatprep.subr.mxu0 0.0
    %602 = vmatpush1.msra.mxu0 0.0
    %603 = vmatprep.mubr.f32.mxu0 0.0
    %604 = vmatmul.mubr.f32.gmra.mrb[0].mxu0 %v534
    %v605 = vpop.f32.mrb[0].mxu0
    %v606 = vadd.f32 0.0, %v605
    %v607 = vpop.f32.mrb[0].mxu0
    %608 = vmatprep.mubr.f32.mxu0 0.0
    %609 = vmatmul.mubr.f32.gmra.mrb[0].mxu0 %v537
    %v610 = vpop.f32.mrb[0].mxu0
    %v611 = vadd.f32 0.0, %v610
    %v612 = vpop.f32.mrb[0].mxu0
    %613 = vdwg.mxu0
    %v615 = vsel %vm106, %v91, 0
    %v618 = vsel %vm106, %v92, 0
    %620 = vmatprep.subr.mxu0 0.0
    %621 = vmatpush1.msra.mxu0 1.0
    %622 = vmatprep.subr.mxu0 0.0
    %623 = vmatpush1.msra.mxu0 1.0
    %624 = vmatprep.subr.mxu0 0.0
    %625 = vmatpush1.msra.mxu0 0.0
    %626 = vmatprep.subr.mxu0 0.0
    %627 = vmatpush1.msra.mxu0 0.0
    %628 = vmatprep.subr.mxu0 0.0
    %629 = vmatpush1.msra.mxu0 0.0
    %630 = vmatprep.subr.mxu0 0.0
    %631 = vmatpush1.msra.mxu0 0.0
    %632 = vmatprep.subr.mxu0 0.0
    %633 = vmatpush1.msra.mxu0 0.0
    %634 = vmatprep.subr.mxu0 0.0
    %635 = vmatpush1.msra.mxu0 0.0
    %636 = vmatprep.subr.mxu0 0.0
    %637 = vmatpush1.msra.mxu0 0.0
    %638 = vmatprep.subr.mxu0 0.0
    %639 = vmatpush1.msra.mxu0 0.0
    %640 = vmatprep.subr.mxu0 0.0
    %641 = vmatpush1.msra.mxu0 0.0
    %642 = vmatprep.subr.mxu0 0.0
    %643 = vmatpush1.msra.mxu0 0.0
    %644 = vmatprep.subr.mxu0 0.0
    %645 = vmatpush1.msra.mxu0 0.0
    %646 = vmatprep.subr.mxu0 0.0
    %647 = vmatpush1.msra.mxu0 0.0
    %648 = vmatprep.subr.mxu0 0.0
    %649 = vmatpush1.msra.mxu0 0.0
    %650 = vmatprep.subr.mxu0 0.0
    %651 = vmatpush1.msra.mxu0 0.0
    %652 = vmatprep.subr.mxu0 0.0
    %653 = vmatpush1.msra.mxu0 0.0
    %654 = vmatprep.subr.mxu0 0.0
    %655 = vmatpush1.msra.mxu0 0.0
    %656 = vmatprep.subr.mxu0 0.0
    %657 = vmatpush1.msra.mxu0 0.0
    %658 = vmatprep.subr.mxu0 0.0
    %659 = vmatpush1.msra.mxu0 0.0
    %660 = vmatprep.subr.mxu0 0.0
    %661 = vmatpush1.msra.mxu0 0.0
    %662 = vmatprep.subr.mxu0 0.0
    %663 = vmatpush1.msra.mxu0 0.0
    %664 = vmatprep.subr.mxu0 0.0
    %665 = vmatpush1.msra.mxu0 0.0
    %666 = vmatprep.subr.mxu0 0.0
    %667 = vmatpush1.msra.mxu0 0.0
    %668 = vmatprep.subr.mxu0 0.0
    %669 = vmatpush1.msra.mxu0 0.0
    %670 = vmatprep.subr.mxu0 0.0
    %671 = vmatpush1.msra.mxu0 0.0
    %672 = vmatprep.subr.mxu0 0.0
    %673 = vmatpush1.msra.mxu0 0.0
    %674 = vmatprep.subr.mxu0 0.0
    %675 = vmatpush1.msra.mxu0 0.0
    %676 = vmatprep.subr.mxu0 0.0
    %677 = vmatpush1.msra.mxu0 0.0
    %678 = vmatprep.subr.mxu0 0.0
    %679 = vmatpush1.msra.mxu0 0.0
    %680 = vmatprep.subr.mxu0 0.0
    %681 = vmatpush1.msra.mxu0 0.0
    %682 = vmatprep.subr.mxu0 0.0
    %683 = vmatpush1.msra.mxu0 0.0
    %684 = vmatprep.mubr.f32.mxu0 0.0
    %685 = vmatmul.mubr.f32.gmra.mrb[0].mxu0 %v615
    %v686 = vpop.f32.mrb[0].mxu0
    %v687 = vadd.f32 0.0, %v686
    %v688 = vpop.f32.mrb[0].mxu0
    %689 = vmatprep.mubr.f32.mxu0 0.0
    %690 = vmatmul.mubr.f32.gmra.mrb[0].mxu0 %v618
    %v691 = vpop.f32.mrb[0].mxu0
    %v692 = vadd.f32 0.0, %v691
    %v693 = vpop.f32.mrb[0].mxu0
    %694 = vdwg.mxu0
    %vm695 = vcmp.gt.f32.partialorder 1.0, 0.0
    %v696 = vmul.f32 %v687, 0.5
    %v697 = vmul.f32 %v692, 0.5
    %v698 = vceil.f32 %v696
    %v699 = vceil.f32 %v697
    %vm700 = vcmp.lt.f32.partialorder %v606, %v698
    %vm701 = vcmp.lt.f32.partialorder %v611, %v699
    %vm702 = vmand %vm695, %vm700
    %vm703 = vmand %vm695, %vm701
    %v704 = vsel %vm702, 1, 0
    %v705 = vsel %vm703, 1, 0
    %v706 = vcvt.s32.f32 %v704
    %v707 = vcvt.s32.f32 %v705
    %v708 = vmul.f32 %v316, %v429
    %v709 = vmul.f32 %v317, %v434
    %711 = vset.pattern.permute.xlu0 0
    %712 = vperm.xlu0 %711, %v706
    %v713 = vpop.permute.xlu0 %712
    %716 = vset.pattern.permute.xlu0 0
    %717 = vperm.xlu0 %716, %v707
    %v718 = vpop.permute.xlu0 %717
    %v720 = vmul.f32 %v708, %v713
    %v721 = vmul.f32 %v709, %v718
    %v722 = vpack.c.bf16 %v721, %v720
    %v723 = vmul.f32 %v95, %v713
    %v724 = vmul.f32 %v96, %v718
    %vm725 = vcmp.gt.f32.partialorder %v723, 0.0
    %vm726 = vcmp.gt.f32.partialorder %v724, 0.0
    %v727 = vsel %vm725, 1, 0
    %v728 = vsel %vm726, 1, 0
    %729 = vset.pattern.permute.xlu0 0
    %730 = vperm.xlu0 %729, %v727
    %v731 = vpop.permute.xlu0 %730
    %732 = vset.pattern.permute.xlu0 0
    %733 = vperm.xlu0 %732, %v728
    %v734 = vpop.permute.xlu0 %733
    %vm735 = vcmp.eq.s32.totalorder %v731, 1
    %vm736 = vcmp.eq.s32.totalorder %v734, 1
    %v737 = vsel %vm735, %v720, -1e+30
    %v738 = vsel %vm736, %v721, -1e+30
    %v739 = vsel %vm325, %v737, -inf
    %v740 = vsel %vm325, %v738, -inf
    %v741 = vmax.f32 %v739, %v740
    %v742 = vrot.slane %v741, 4
    %v743 = vmax.f32 %v741, %v742
    %v744 = vrot.slane %v743, 2
    %v745 = vmax.f32 %v743, %v744
    %v746 = vrot.slane %v745, 1
    %v747 = vmax.f32 %v745, %v746
    %vm748 = vcmp.eq.s32.totalorder %v98, 0
    %v749 = vsel %vm748, 1, 0
    %vm750 = vcmp.eq.s32.totalorder %v749, 1
    %v751 = vsel %vm750, %v747, 0.0
    %752 = vset.pattern.permute.xlu0 1
    %753 = vperm.xlu0 %752, %v727
    %v754 = vpop.permute.xlu0 %753
    %755 = vset.pattern.permute.xlu0 1
    %756 = vperm.xlu0 %755, %v728
    %v757 = vpop.permute.xlu0 %756
    %vm758 = vcmp.eq.s32.totalorder %v754, 1
    %vm759 = vcmp.eq.s32.totalorder %v757, 1
    %v760 = vsel %vm758, %v720, -1e+30
    %v761 = vsel %vm759, %v721, -1e+30
    %v762 = vsel %vm325, %v760, -inf
    %v763 = vsel %vm325, %v761, -inf
    %v764 = vmax.f32 %v762, %v763
    %v765 = vrot.slane %v764, 4
    %v766 = vmax.f32 %v764, %v765
    %v767 = vrot.slane %v766, 2
    %v768 = vmax.f32 %v766, %v767
    %v769 = vrot.slane %v768, 1
    %v770 = vmax.f32 %v768, %v769
    %vm771 = vcmp.eq.s32.totalorder %v98, 1
    %v772 = vsel %vm771, 1, 0
    %vm773 = vcmp.eq.s32.totalorder %v772, 1
    %v774 = vsel %vm773, %v770, %v751
    %v776 = vsel %vm106, %v93, 0
    %778 = vmatprep.subr.mxu0 0.0
    %779 = vmatpush1.msra.mxu0 %v706
    %780 = vmatprep.subr.mxu0 0.0
    %781 = vmatpush1.msra.mxu0 %v707
    %782 = vmatprep.subr.mxu0 0.0
    %783 = vmatpush1.msra.mxu0 0.0
    %784 = vmatprep.subr.mxu0 0.0
    %785 = vmatpush1.msra.mxu0 0.0
    %786 = vmatprep.subr.mxu0 0.0
    %787 = vmatpush1.msra.mxu0 0.0
    %788 = vmatprep.subr.mxu0 0.0
    %789 = vmatpush1.msra.mxu0 0.0
    %790 = vmatprep.subr.mxu0 0.0
    %791 = vmatpush1.msra.mxu0 0.0
    %792 = vmatprep.subr.mxu0 0.0
    %793 = vmatpush1.msra.mxu0 0.0
    %794 = vmatprep.subr.mxu0 0.0
    %795 = vmatpush1.msra.mxu0 0.0
    %796 = vmatprep.subr.mxu0 0.0
    %797 = vmatpush1.msra.mxu0 0.0
    %798 = vmatprep.subr.mxu0 0.0
    %799 = vmatpush1.msra.mxu0 0.0
    %800 = vmatprep.subr.mxu0 0.0
    %801 = vmatpush1.msra.mxu0 0.0
    %802 = vmatprep.subr.mxu0 0.0
    %803 = vmatpush1.msra.mxu0 0.0
    %804 = vmatprep.subr.mxu0 0.0
    %805 = vmatpush1.msra.mxu0 0.0
    %806 = vmatprep.subr.mxu0 0.0
    %807 = vmatpush1.msra.mxu0 0.0
    %808 = vmatprep.subr.mxu0 0.0
    %809 = vmatpush1.msra.mxu0 0.0
    %810 = vmatprep.subr.mxu0 0.0
    %811 = vmatpush1.msra.mxu0 0.0
    %812 = vmatprep.subr.mxu0 0.0
    %813 = vmatpush1.msra.mxu0 0.0
    %814 = vmatprep.subr.mxu0 0.0
    %815 = vmatpush1.msra.mxu0 0.0
    %816 = vmatprep.subr.mxu0 0.0
    %817 = vmatpush1.msra.mxu0 0.0
    %818 = vmatprep.subr.mxu0 0.0
    %819 = vmatpush1.msra.mxu0 0.0
    %820 = vmatprep.subr.mxu0 0.0
    %821 = vmatpush1.msra.mxu0 0.0
    %822 = vmatprep.subr.mxu0 0.0
    %823 = vmatpush1.msra.mxu0 0.0
    %824 = vmatprep.subr.mxu0 0.0
    %825 = vmatpush1.msra.mxu0 0.0
    %826 = vmatprep.subr.mxu0 0.0
    %827 = vmatpush1.msra.mxu0 0.0
    %828 = vmatprep.subr.mxu0 0.0
    %829 = vmatpush1.msra.mxu0 0.0
    %830 = vmatprep.subr.mxu0 0.0
    %831 = vmatpush1.msra.mxu0 0.0
    %832 = vmatprep.subr.mxu0 0.0
    %833 = vmatpush1.msra.mxu0 0.0
    %834 = vmatprep.subr.mxu0 0.0
    %835 = vmatpush1.msra.mxu0 0.0
    %836 = vmatprep.subr.mxu0 0.0
    %837 = vmatpush1.msra.mxu0 0.0
    %838 = vmatprep.subr.mxu0 0.0
    %839 = vmatpush1.msra.mxu0 0.0
    %840 = vmatprep.subr.mxu0 0.0
    %841 = vmatpush1.msra.mxu0 0.0
    %842 = vmatprep.mubr.f32.mxu0 0.0
    %843 = vmatmul.mubr.f32.gmra.mrb[0].mxu0 %v776
    %v844 = vpop.f32.mrb[0].mxu0
    %v845 = vadd.f32 0.0, %v844
    %v846 = vpop.f32.mrb[0].mxu0
    %847 = vdwg.mxu0
    %vm848 = vcmp.gt.f32.partialorder %v845, 0.0
    %v849 = vsel %vm848, 1, 0
    %850 = vset.pattern.permute.xlu0 0
    %851 = vperm.xlu0 %850, %v849
    %v852 = vpop.permute.xlu0 %851
    %vm853 = vcmp.eq.s32.totalorder %v852, 1
    %v854 = vsel %vm853, %v774, 0.0
    %v855 = vadd.f32 %v854, 0.0
    %856 = vmatprep.subr.mxu0 0.0
    %857 = vmatpush1.msra.mxu0 %v706
    %858 = vmatprep.subr.mxu0 0.0
    %859 = vmatpush1.msra.mxu0 %v707
    %860 = vmatprep.subr.mxu0 0.0
    %861 = vmatpush1.msra.mxu0 0.0
    %862 = vmatprep.subr.mxu0 0.0
    %863 = vmatpush1.msra.mxu0 0.0
    %864 = vmatprep.subr.mxu0 0.0
    %865 = vmatpush1.msra.mxu0 0.0
    %866 = vmatprep.subr.mxu0 0.0
    %867 = vmatpush1.msra.mxu0 0.0
    %868 = vmatprep.subr.mxu0 0.0
    %869 = vmatpush1.msra.mxu0 0.0
    %870 = vmatprep.subr.mxu0 0.0
    %871 = vmatpush1.msra.mxu0 0.0
    %872 = vmatprep.subr.mxu0 0.0
    %873 = vmatpush1.msra.mxu0 0.0
    %874 = vmatprep.subr.mxu0 0.0
    %875 = vmatpush1.msra.mxu0 0.0
    %876 = vmatprep.subr.mxu0 0.0
    %877 = vmatpush1.msra.mxu0 0.0
    %878 = vmatprep.subr.mxu0 0.0
    %879 = vmatpush1.msra.mxu0 0.0
    %880 = vmatprep.subr.mxu0 0.0
    %881 = vmatpush1.msra.mxu0 0.0
    %882 = vmatprep.subr.mxu0 0.0
    %883 = vmatpush1.msra.mxu0 0.0
    %884 = vmatprep.subr.mxu0 0.0
    %885 = vmatpush1.msra.mxu0 0.0
    %886 = vmatprep.subr.mxu0 0.0
    %887 = vmatpush1.msra.mxu0 0.0
    %888 = vmatprep.subr.mxu0 0.0
    %889 = vmatpush1.msra.mxu0 0.0
    %890 = vmatprep.subr.mxu0 0.0
    %891 = vmatpush1.msra.mxu0 0.0
    %892 = vmatprep.subr.mxu0 0.0
    %893 = vmatpush1.msra.mxu0 0.0
    %894 = vmatprep.subr.mxu0 0.0
    %895 = vmatpush1.msra.mxu0 0.0
    %896 = vmatprep.subr.mxu0 0.0
    %897 = vmatpush1.msra.mxu0 0.0
    %898 = vmatprep.subr.mxu0 0.0
    %899 = vmatpush1.msra.mxu0 0.0
    %900 = vmatprep.subr.mxu0 0.0
    %901 = vmatpush1.msra.mxu0 0.0
    %902 = vmatprep.subr.mxu0 0.0
    %903 = vmatpush1.msra.mxu0 0.0
    %904 = vmatprep.subr.mxu0 0.0
    %905 = vmatpush1.msra.mxu0 0.0
    %906 = vmatprep.subr.mxu0 0.0
    %907 = vmatpush1.msra.mxu0 0.0
    %908 = vmatprep.subr.mxu0 0.0
    %909 = vmatpush1.msra.mxu0 0.0
    %910 = vmatprep.subr.mxu0 0.0
    %911 = vmatpush1.msra.mxu0 0.0
    %912 = vmatprep.subr.mxu0 0.0
    %913 = vmatpush1.msra.mxu0 0.0
    %914 = vmatprep.subr.mxu0 0.0
    %915 = vmatpush1.msra.mxu0 0.0
    %916 = vmatprep.subr.mxu0 0.0
    %917 = vmatpush1.msra.mxu0 0.0
    %918 = vmatprep.subr.mxu0 0.0
    %919 = vmatpush1.msra.mxu0 0.0
    %920 = vmatprep.mubr.f32.mxu0 0.0
    %921 = vmatmul.mubr.f32.gmra.mrb[0].mxu0 %v108
    %v922 = vpop.f32.mrb[0].mxu0
    %v923 = vadd.f32 1.0, %v922
    %v924 = vpop.f32.mrb[0].mxu0
    %925 = vmatprep.mubr.f32.mxu0 0.0
    %926 = vmatmul.mubr.f32.gmra.mrb[0].mxu0 %v111
    %v927 = vpop.f32.mrb[0].mxu0
    %v928 = vadd.f32 1.0, %v927
    %v929 = vpop.f32.mrb[0].mxu0
    %930 = vdwg.mxu0
    %v931 = vmul.f32 %v706, %v923
    %v932 = vmul.f32 %v707, %v928
    %vm933 = vcmp.gt.f32.partialorder %v931, 0.0
    %vm934 = vcmp.gt.f32.partialorder %v932, 0.0
    %v935 = vmax.f32 %v931, 1.0
    %v936 = vmax.f32 %v932, 1.0
    %v937 = vrsqrt.pop %v935
    %v938 = vrsqrt.pop %v936
    %v939 = vsel %vm933, %v937, 0.0
    %v940 = vsel %vm934, %v938, 0.0
    %v941 = vld [vmem:[%s8] sm:$0xff]
    %v942 = vld [vmem:[%s8 + $0x8] sm:$0xff]
    %v943 = vld [vmem:[%s8 + $0x10] sm:$0xff]
    %v944 = vld [vmem:[%s8 + $0x18] sm:$0xff]
    %v945 = vpack.c.bf16 %v942, %v941
    %v946 = vpack.c.bf16 %v944, %v943
    %v948 = vsel %vm325, %v722, 0
    %950 = vmatprep.subr.bf16.mxu0 0
    %951 = vmatpush1.bf16.msra.mxu0 %v945
    %952 = vmatprep.subr.bf16.mxu0 0
    %953 = vmatpush1.bf16.msra.mxu0 %v946
    %954 = vmatprep.subr.bf16.mxu0 0
    %955 = vmatpush1.bf16.msra.mxu0 0
    %956 = vmatprep.subr.bf16.mxu0 0
    %957 = vmatpush1.bf16.msra.mxu0 0
    %958 = vmatprep.subr.bf16.mxu0 0
    %959 = vmatpush1.bf16.msra.mxu0 0
    %960 = vmatprep.subr.bf16.mxu0 0
    %961 = vmatpush1.bf16.msra.mxu0 0
    %962 = vmatprep.subr.bf16.mxu0 0
    %963 = vmatpush1.bf16.msra.mxu0 0
    %964 = vmatprep.subr.bf16.mxu0 0
    %965 = vmatpush1.bf16.msra.mxu0 0
    %966 = vmatprep.subr.bf16.mxu0 0
    %967 = vmatpush1.bf16.msra.mxu0 0
    %968 = vmatprep.subr.bf16.mxu0 0
    %969 = vmatpush1.bf16.msra.mxu0 0
    %970 = vmatprep.subr.bf16.mxu0 0
    %971 = vmatpush1.bf16.msra.mxu0 0
    %972 = vmatprep.subr.bf16.mxu0 0
    %973 = vmatpush1.bf16.msra.mxu0 0
    %974 = vmatprep.subr.bf16.mxu0 0
    %975 = vmatpush1.bf16.msra.mxu0 0
    %976 = vmatprep.subr.bf16.mxu0 0
    %977 = vmatpush1.bf16.msra.mxu0 0
    %978 = vmatprep.subr.bf16.mxu0 0
    %979 = vmatpush1.bf16.msra.mxu0 0
    %980 = vmatprep.subr.bf16.mxu0 0
    %981 = vmatpush1.bf16.msra.mxu0 0
    %982 = vmatprep.mubr.bf16.mxu0 0
    %983 = vmatmul.mubr.bf16.gmra.mrb[0].mxu0 %v948
    %v984 = vpop.f32.mrb[0].mxu0
    %v985 = vadd.f32 0.0, %v984
    %v986 = vpop.f32.mrb[0].mxu0
    %v987 = vpop.f32.mrb[0].mxu0
    %v988 = vadd.f32 0.0, %v987
    %v989 = vpop.f32.mrb[0].mxu0
    %990 = vdwg.mxu0
    %992 = vset.pattern.permute.xlu0 0
    %993 = vperm.xlu0 %992, %v939
    %v994 = vpop.permute.xlu0 %993
    %997 = vset.pattern.permute.xlu0 0
    %998 = vperm.xlu0 %997, %v940
    %v999 = vpop.permute.xlu0 %998
    %v1001 = vmul.f32 %v994, %v985
    %v1002 = vmul.f32 %v999, %v988
    %v1003 = vpack.c.bf16 %v1002, %v1001
    %1004 = vmatprep.subr.bf16.mxu0 0
    %1005 = vmatpush1.bf16.msra.mxu0 %v1003
    %1006 = vmatprep.subr.bf16.mxu0 0
    %1007 = vmatpush1.bf16.msra.mxu0 0
    %1008 = vmatprep.subr.bf16.mxu0 0
    %1009 = vmatpush1.bf16.msra.mxu0 0
    %1010 = vmatprep.subr.bf16.mxu0 0
    %1011 = vmatpush1.bf16.msra.mxu0 0
    %1012 = vmatprep.subr.bf16.mxu0 0
    %1013 = vmatpush1.bf16.msra.mxu0 0
    %1014 = vmatprep.subr.bf16.mxu0 0
    %1015 = vmatpush1.bf16.msra.mxu0 0
    %1016 = vmatprep.subr.bf16.mxu0 0
    %1017 = vmatpush1.bf16.msra.mxu0 0
    %1018 = vmatprep.subr.bf16.mxu0 0
    %1019 = vmatpush1.bf16.msra.mxu0 0
    %1020 = vmatprep.subr.bf16.mxu0 0
    %1021 = vmatpush1.bf16.msra.mxu0 0
    %1022 = vmatprep.subr.bf16.mxu0 0
    %1023 = vmatpush1.bf16.msra.mxu0 0
    %1024 = vmatprep.subr.bf16.mxu0 0
    %1025 = vmatpush1.bf16.msra.mxu0 0
    %1026 = vmatprep.subr.bf16.mxu0 0
    %1027 = vmatpush1.bf16.msra.mxu0 0
    %1028 = vmatprep.subr.bf16.mxu0 0
    %1029 = vmatpush1.bf16.msra.mxu0 0
    %1030 = vmatprep.subr.bf16.mxu0 0
    %1031 = vmatpush1.bf16.msra.mxu0 0
    %1032 = vmatprep.subr.bf16.mxu0 0
    %1033 = vmatpush1.bf16.msra.mxu0 0
    %1034 = vmatprep.subr.bf16.mxu0 0
    %1035 = vmatpush1.bf16.msra.mxu0 0
    %1036 = vmatprep.mubr.bf16.mxu0 0
    %1037 = vmatmul.mubr.bf16.gmra.mrb[0].mxu0 %v262
    %v1038 = vpop.f32.mrb[0].mxu0
    %v1039 = vadd.f32 %v1001, %v1038
    %v1040 = vpop.f32.mrb[0].mxu0
    %v1041 = vpop.f32.mrb[0].mxu0
    %v1042 = vadd.f32 %v1002, %v1041
    %v1043 = vpop.f32.mrb[0].mxu0
    %1044 = vdwg.mxu0
    %v1045 = vmul.f32 %v994, %v1039
    %v1046 = vmul.f32 %v999, %v1042
    %v1047 = vld [vmem:[%s9] sm:$0x1]
    %v1049 = vlaneseq
    %v1050 = vshrl.u32 %v1049, 7
    %v1051 = vsub.s32 0, %v1050
    %v1052 = vrot.slane %v1047, %v1051
    %v1054 = vadd.f32 %v1045, %v1052
    %v1055 = vadd.f32 %v1046, %v1052
    %v1056 = vmax.f32 %v1054, 0.0
    %v1057 = vmax.f32 %v1055, 0.0
    %v1058 = vpack.c.bf16 %v1057, %v1056
    %v1059 = vld [vmem:[%s13] sm:$0xff]
    %v1060 = vld [vmem:[%s13 + $0x8] sm:$0xff]
    %v1061 = vld [vmem:[%s13 + $0x10] sm:$0xff]
    %v1062 = vld [vmem:[%s13 + $0x18] sm:$0xff]
    %v1063 = vpack.c.bf16 %v1060, %v1059
    %v1064 = vpack.c.bf16 %v1062, %v1061
    %v1066 = vsel %vm325, %v1058, 0
    %1068 = vmatprep.subr.bf16.mxu0 0
    %1069 = vmatpush1.bf16.msra.mxu0 %v1063
    %1070 = vmatprep.subr.bf16.mxu0 0
    %1071 = vmatpush1.bf16.msra.mxu0 %v1064
    %1072 = vmatprep.subr.bf16.mxu0 0
    %1073 = vmatpush1.bf16.msra.mxu0 0
    %1074 = vmatprep.subr.bf16.mxu0 0
    %1075 = vmatpush1.bf16.msra.mxu0 0
    %1076 = vmatprep.subr.bf16.mxu0 0
    %1077 = vmatpush1.bf16.msra.mxu0 0
    %1078 = vmatprep.subr.bf16.mxu0 0
    %1079 = vmatpush1.bf16.msra.mxu0 0
    %1080 = vmatprep.subr.bf16.mxu0 0
    %1081 = vmatpush1.bf16.msra.mxu0 0
    %1082 = vmatprep.subr.bf16.mxu0 0
    %1083 = vmatpush1.bf16.msra.mxu0 0
    %1084 = vmatprep.subr.bf16.mxu0 0
    %1085 = vmatpush1.bf16.msra.mxu0 0
    %1086 = vmatprep.subr.bf16.mxu0 0
    %1087 = vmatpush1.bf16.msra.mxu0 0
    %1088 = vmatprep.subr.bf16.mxu0 0
    %1089 = vmatpush1.bf16.msra.mxu0 0
    %1090 = vmatprep.subr.bf16.mxu0 0
    %1091 = vmatpush1.bf16.msra.mxu0 0
    %1092 = vmatprep.subr.bf16.mxu0 0
    %1093 = vmatpush1.bf16.msra.mxu0 0
    %1094 = vmatprep.subr.bf16.mxu0 0
    %1095 = vmatpush1.bf16.msra.mxu0 0
    %1096 = vmatprep.subr.bf16.mxu0 0
    %1097 = vmatpush1.bf16.msra.mxu0 0
    %1098 = vmatprep.subr.bf16.mxu0 0
    %1099 = vmatpush1.bf16.msra.mxu0 0
    %1100 = vmatprep.mubr.bf16.mxu0 0
    %1101 = vmatmul.mubr.bf16.gmra.mrb[0].mxu0 %v1066
    %v1102 = vpop.f32.mrb[0].mxu0
    %v1103 = vadd.f32 0.0, %v1102
    %v1104 = vpop.f32.mrb[0].mxu0
    %v1105 = vpop.f32.mrb[0].mxu0
    %v1106 = vadd.f32 0.0, %v1105
    %v1107 = vpop.f32.mrb[0].mxu0
    %1108 = vdwg.mxu0
    %v1109 = vmul.f32 %v706, %v1103
    %v1110 = vmul.f32 %v707, %v1106
    %v1111 = vpack.c.bf16 %v1110, %v1109
    %1112 = vmatprep.subr.bf16.mxu0 0
    %1113 = vmatpush1.bf16.msra.mxu0 %v1111
    %1114 = vmatprep.subr.bf16.mxu0 0
    %1115 = vmatpush1.bf16.msra.mxu0 0
    %1116 = vmatprep.subr.bf16.mxu0 0
    %1117 = vmatpush1.bf16.msra.mxu0 0
    %1118 = vmatprep.subr.bf16.mxu0 0
    %1119 = vmatpush1.bf16.msra.mxu0 0
    %1120 = vmatprep.subr.bf16.mxu0 0
    %1121 = vmatpush1.bf16.msra.mxu0 0
    %1122 = vmatprep.subr.bf16.mxu0 0
    %1123 = vmatpush1.bf16.msra.mxu0 0
    %1124 = vmatprep.subr.bf16.mxu0 0
    %1125 = vmatpush1.bf16.msra.mxu0 0
    %1126 = vmatprep.subr.bf16.mxu0 0
    %1127 = vmatpush1.bf16.msra.mxu0 0
    %1128 = vmatprep.subr.bf16.mxu0 0
    %1129 = vmatpush1.bf16.msra.mxu0 0
    %1130 = vmatprep.subr.bf16.mxu0 0
    %1131 = vmatpush1.bf16.msra.mxu0 0
    %1132 = vmatprep.subr.bf16.mxu0 0
    %1133 = vmatpush1.bf16.msra.mxu0 0
    %1134 = vmatprep.subr.bf16.mxu0 0
    %1135 = vmatpush1.bf16.msra.mxu0 0
    %1136 = vmatprep.subr.bf16.mxu0 0
    %1137 = vmatpush1.bf16.msra.mxu0 0
    %1138 = vmatprep.subr.bf16.mxu0 0
    %1139 = vmatpush1.bf16.msra.mxu0 0
    %1140 = vmatprep.subr.bf16.mxu0 0
    %1141 = vmatpush1.bf16.msra.mxu0 0
    %1142 = vmatprep.subr.bf16.mxu0 0
    %1143 = vmatpush1.bf16.msra.mxu0 0
    %1144 = vmatprep.mubr.bf16.mxu0 0
    %1145 = vmatmul.mubr.bf16.gmra.mrb[0].mxu0 %v262
    %v1146 = vpop.f32.mrb[0].mxu0
    %v1147 = vadd.f32 0.0, %v1146
    %v1148 = vpop.f32.mrb[0].mxu0
    %v1149 = vpop.f32.mrb[0].mxu0
    %v1150 = vadd.f32 0.0, %v1149
    %v1151 = vpop.f32.mrb[0].mxu0
    %1152 = vdwg.mxu0
    %v1153 = vmul.f32 %v706, %v1147
    %v1154 = vmul.f32 %v707, %v1150
    %s1155 = sld [smem:[#allocation2 + $0x1]]
    %v1156 = vstv %s1155
    %v1157 = vadd.f32 %v1153, %v1156
    %v1158 = vadd.f32 %v1154, %v1156
    %1161 = vrot.lane.b32.xlu0 %v1103, 127
    %v1162 = vpop.permute.xlu0 %1161
    %1163 = vrot.lane.b32.xlu0 %v1106, 127
    %v1164 = vpop.permute.xlu0 %1163
    %v1167 = vadd.f32 %v1157, %v1162
    %v1168 = vadd.f32 %v1158, %v1164
    %v1169 = vtanh.pop %v1167
    %v1170 = vtanh.pop %v1168
    %1172 = vset.pattern.permute.xlu0 0
    %1173 = vperm.xlu0 %1172, %v1169
    %v1174 = vpop.permute.xlu0 %1173
    %1177 = vset.pattern.permute.xlu0 0
    %1178 = vperm.xlu0 %1177, %v1170
    %v1179 = vpop.permute.xlu0 %1178
    %v1181 = vsel %vm436, %v1169, 0
    %v1183 = vsel %vm436, %v1170, 0
    %1185 = vmatprep.subr.mxu0 0.0
    %1186 = vmatpush1.xpose.msra.mxu0 %v1181
    %1187 = vmatprep.subr.mxu0 0.0
    %1188 = vmatpush1.xpose.msra.mxu0 %v1183
    %1189 = vmatprep.subr.mxu0 0.0
    %1190 = vmatpush1.xpose.msra.mxu0 0.0
    %1191 = vmatprep.subr.mxu0 0.0
    %1192 = vmatpush1.xpose.msra.mxu0 0.0
    %1193 = vmatprep.subr.mxu0 0.0
    %1194 = vmatpush1.xpose.msra.mxu0 0.0
    %1195 = vmatprep.subr.mxu0 0.0
    %1196 = vmatpush1.xpose.msra.mxu0 0.0
    %1197 = vmatprep.subr.mxu0 0.0
    %1198 = vmatpush1.xpose.msra.mxu0 0.0
    %1199 = vmatprep.subr.mxu0 0.0
    %1200 = vmatpush1.xpose.msra.mxu0 0.0
    %1201 = vmatprep.subr.mxu0 0.0
    %1202 = vmatpush1.xpose.msra.mxu0 0.0
    %1203 = vmatprep.subr.mxu0 0.0
    %1204 = vmatpush1.xpose.msra.mxu0 0.0
    %1205 = vmatprep.subr.mxu0 0.0
    %1206 = vmatpush1.xpose.msra.mxu0 0.0
    %1207 = vmatprep.subr.mxu0 0.0
    %1208 = vmatpush1.xpose.msra.mxu0 0.0
    %1209 = vmatprep.subr.mxu0 0.0
    %1210 = vmatpush1.xpose.msra.mxu0 0.0
    %1211 = vmatprep.subr.mxu0 0.0
    %1212 = vmatpush1.xpose.msra.mxu0 0.0
    %1213 = vmatprep.subr.mxu0 0.0
    %1214 = vmatpush1.xpose.msra.mxu0 0.0
    %1215 = vmatprep.subr.mxu0 0.0
    %1216 = vmatpush1.xpose.msra.mxu0 0.0
    %1217 = vmatprep.subr.mxu0 0.0
    %1218 = vmatpush1.xpose.msra.mxu0 0.0
    %1219 = vmatprep.subr.mxu0 0.0
    %1220 = vmatpush1.xpose.msra.mxu0 0.0
    %1221 = vmatprep.subr.mxu0 0.0
    %1222 = vmatpush1.xpose.msra.mxu0 0.0
    %1223 = vmatprep.subr.mxu0 0.0
    %1224 = vmatpush1.xpose.msra.mxu0 0.0
    %1225 = vmatprep.subr.mxu0 0.0
    %1226 = vmatpush1.xpose.msra.mxu0 0.0
    %1227 = vmatprep.subr.mxu0 0.0
    %1228 = vmatpush1.xpose.msra.mxu0 0.0
    %1229 = vmatprep.subr.mxu0 0.0
    %1230 = vmatpush1.xpose.msra.mxu0 0.0
    %1231 = vmatprep.subr.mxu0 0.0
    %1232 = vmatpush1.xpose.msra.mxu0 0.0
    %1233 = vmatprep.subr.mxu0 0.0
    %1234 = vmatpush1.xpose.msra.mxu0 0.0
    %1235 = vmatprep.subr.mxu0 0.0
    %1236 = vmatpush1.xpose.msra.mxu0 0.0
    %1237 = vmatprep.subr.mxu0 0.0
    %1238 = vmatpush1.xpose.msra.mxu0 0.0
    %1239 = vmatprep.subr.mxu0 0.0
    %1240 = vmatpush1.xpose.msra.mxu0 0.0
    %1241 = vmatprep.subr.mxu0 0.0
    %1242 = vmatpush1.xpose.msra.mxu0 0.0
    %1243 = vmatprep.subr.mxu0 0.0
    %1244 = vmatpush1.xpose.msra.mxu0 0.0
    %1245 = vmatprep.subr.mxu0 0.0
    %1246 = vmatpush1.xpose.msra.mxu0 0.0
    %1247 = vmatprep.subr.mxu0 0.0
    %1248 = vmatpush1.xpose.msra.mxu0 0.0
    %1249 = vmatprep.mubr.f32.mxu0 0.0
    %1250 = vmatmul.mubr.f32.gmra.mrb[0].mxu0 %v438
    %v1251 = vpop.f32.mrb[0].mxu0
    %v1252 = vadd.f32 0.0, %v1251
    %v1253 = vpop.f32.mrb[0].mxu0
    %1254 = vmatprep.mubr.f32.mxu0 0.0
    %1255 = vmatmul.mubr.f32.gmra.mrb[0].mxu0 %v438
    %v1256 = vpop.f32.mrb[0].mxu0
    %v1257 = vadd.f32 0.0, %v1256
    %v1258 = vpop.f32.mrb[0].mxu0
    %1259 = vdwg.mxu0
    %vm1260 = vcmp.gt.f32.partialorder %v1252, %v1174
    %vm1261 = vcmp.gt.f32.partialorder %v1257, %v1179
    %vm1262 = vcmp.eq.f32.partialorder %v1252, %v1174
    %vm1263 = vcmp.eq.f32.partialorder %v1257, %v1179
    %vm1264 = vmand %vm1262, %vm102
    %vm1265 = vmand %vm1263, %vm103
    %vm1266 = vmor %vm1260, %vm1264
    %vm1267 = vmor %vm1261, %vm1265
    %v1268 = vsel %vm1266, 1, 0
    %v1269 = vsel %vm1267, 1, 0
    %v1270 = vcvt.s32.f32 %v1268
    %v1271 = vcvt.s32.f32 %v1269
    %v1272 = vmul.f32 %v91, %v1270
    %v1273 = vmul.f32 %v92, %v1271
    %v1275 = vsel %vm106, %v1272, 0
    %v1278 = vsel %vm106, %v1273, 0
    %1280 = vmatprep.subr.mxu0 0.0
    %1281 = vmatpush1.msra.mxu0 %v706
    %1282 = vmatprep.subr.mxu0 0.0
    %1283 = vmatpush1.msra.mxu0 %v707
    %1284 = vmatprep.subr.mxu0 0.0
    %1285 = vmatpush1.msra.mxu0 0.0
    %1286 = vmatprep.subr.mxu0 0.0
    %1287 = vmatpush1.msra.mxu0 0.0
    %1288 = vmatprep.subr.mxu0 0.0
    %1289 = vmatpush1.msra.mxu0 0.0
    %1290 = vmatprep.subr.mxu0 0.0
    %1291 = vmatpush1.msra.mxu0 0.0
    %1292 = vmatprep.subr.mxu0 0.0
    %1293 = vmatpush1.msra.mxu0 0.0
    %1294 = vmatprep.subr.mxu0 0.0
    %1295 = vmatpush1.msra.mxu0 0.0
    %1296 = vmatprep.subr.mxu0 0.0
    %1297 = vmatpush1.msra.mxu0 0.0
    %1298 = vmatprep.subr.mxu0 0.0
    %1299 = vmatpush1.msra.mxu0 0.0
    %1300 = vmatprep.subr.mxu0 0.0
    %1301 = vmatpush1.msra.mxu0 0.0
    %1302 = vmatprep.subr.mxu0 0.0
    %1303 = vmatpush1.msra.mxu0 0.0
    %1304 = vmatprep.subr.mxu0 0.0
    %1305 = vmatpush1.msra.mxu0 0.0
    %1306 = vmatprep.subr.mxu0 0.0
    %1307 = vmatpush1.msra.mxu0 0.0
    %1308 = vmatprep.subr.mxu0 0.0
    %1309 = vmatpush1.msra.mxu0 0.0
    %1310 = vmatprep.subr.mxu0 0.0
    %1311 = vmatpush1.msra.mxu0 0.0
    %1312 = vmatprep.subr.mxu0 0.0
    %1313 = vmatpush1.msra.mxu0 0.0
    %1314 = vmatprep.subr.mxu0 0.0
    %1315 = vmatpush1.msra.mxu0 0.0
    %1316 = vmatprep.subr.mxu0 0.0
    %1317 = vmatpush1.msra.mxu0 0.0
    %1318 = vmatprep.subr.mxu0 0.0
    %1319 = vmatpush1.msra.mxu0 0.0
    %1320 = vmatprep.subr.mxu0 0.0
    %1321 = vmatpush1.msra.mxu0 0.0
    %1322 = vmatprep.subr.mxu0 0.0
    %1323 = vmatpush1.msra.mxu0 0.0
    %1324 = vmatprep.subr.mxu0 0.0
    %1325 = vmatpush1.msra.mxu0 0.0
    %1326 = vmatprep.subr.mxu0 0.0
    %1327 = vmatpush1.msra.mxu0 0.0
    %1328 = vmatprep.subr.mxu0 0.0
    %1329 = vmatpush1.msra.mxu0 0.0
    %1330 = vmatprep.subr.mxu0 0.0
    %1331 = vmatpush1.msra.mxu0 0.0
    %1332 = vmatprep.subr.mxu0 0.0
    %1333 = vmatpush1.msra.mxu0 0.0
    %1334 = vmatprep.subr.mxu0 0.0
    %1335 = vmatpush1.msra.mxu0 0.0
    %1336 = vmatprep.subr.mxu0 0.0
    %1337 = vmatpush1.msra.mxu0 0.0
    %1338 = vmatprep.subr.mxu0 0.0
    %1339 = vmatpush1.msra.mxu0 0.0
    %1340 = vmatprep.subr.mxu0 0.0
    %1341 = vmatpush1.msra.mxu0 0.0
    %1342 = vmatprep.subr.mxu0 0.0
    %1343 = vmatpush1.msra.mxu0 0.0
    %1344 = vmatprep.mubr.f32.mxu0 0.0
    %1345 = vmatmul.mubr.f32.gmra.mrb[0].mxu0 %v1275
    %v1346 = vpop.f32.mrb[0].mxu0
    %v1347 = vadd.f32 0.0, %v1346
    %v1348 = vpop.f32.mrb[0].mxu0
    %1349 = vmatprep.mubr.f32.mxu0 0.0
    %1350 = vmatmul.mubr.f32.gmra.mrb[0].mxu0 %v1278
    %v1351 = vpop.f32.mrb[0].mxu0
    %v1352 = vadd.f32 0.0, %v1351
    %v1353 = vpop.f32.mrb[0].mxu0
    %1354 = vdwg.mxu0
    %1355 = vmatprep.subr.mxu0 0.0
    %1356 = vmatpush1.msra.mxu0 %v706
    %1357 = vmatprep.subr.mxu0 0.0
    %1358 = vmatpush1.msra.mxu0 %v707
    %1359 = vmatprep.subr.mxu0 0.0
    %1360 = vmatpush1.msra.mxu0 0.0
    %1361 = vmatprep.subr.mxu0 0.0
    %1362 = vmatpush1.msra.mxu0 0.0
    %1363 = vmatprep.subr.mxu0 0.0
    %1364 = vmatpush1.msra.mxu0 0.0
    %1365 = vmatprep.subr.mxu0 0.0
    %1366 = vmatpush1.msra.mxu0 0.0
    %1367 = vmatprep.subr.mxu0 0.0
    %1368 = vmatpush1.msra.mxu0 0.0
    %1369 = vmatprep.subr.mxu0 0.0
    %1370 = vmatpush1.msra.mxu0 0.0
    %1371 = vmatprep.subr.mxu0 0.0
    %1372 = vmatpush1.msra.mxu0 0.0
    %1373 = vmatprep.subr.mxu0 0.0
    %1374 = vmatpush1.msra.mxu0 0.0
    %1375 = vmatprep.subr.mxu0 0.0
    %1376 = vmatpush1.msra.mxu0 0.0
    %1377 = vmatprep.subr.mxu0 0.0
    %1378 = vmatpush1.msra.mxu0 0.0
    %1379 = vmatprep.subr.mxu0 0.0
    %1380 = vmatpush1.msra.mxu0 0.0
    %1381 = vmatprep.subr.mxu0 0.0
    %1382 = vmatpush1.msra.mxu0 0.0
    %1383 = vmatprep.subr.mxu0 0.0
    %1384 = vmatpush1.msra.mxu0 0.0
    %1385 = vmatprep.subr.mxu0 0.0
    %1386 = vmatpush1.msra.mxu0 0.0
    %1387 = vmatprep.subr.mxu0 0.0
    %1388 = vmatpush1.msra.mxu0 0.0
    %1389 = vmatprep.subr.mxu0 0.0
    %1390 = vmatpush1.msra.mxu0 0.0
    %1391 = vmatprep.subr.mxu0 0.0
    %1392 = vmatpush1.msra.mxu0 0.0
    %1393 = vmatprep.subr.mxu0 0.0
    %1394 = vmatpush1.msra.mxu0 0.0
    %1395 = vmatprep.subr.mxu0 0.0
    %1396 = vmatpush1.msra.mxu0 0.0
    %1397 = vmatprep.subr.mxu0 0.0
    %1398 = vmatpush1.msra.mxu0 0.0
    %1399 = vmatprep.subr.mxu0 0.0
    %1400 = vmatpush1.msra.mxu0 0.0
    %1401 = vmatprep.subr.mxu0 0.0
    %1402 = vmatpush1.msra.mxu0 0.0
    %1403 = vmatprep.subr.mxu0 0.0
    %1404 = vmatpush1.msra.mxu0 0.0
    %1405 = vmatprep.subr.mxu0 0.0
    %1406 = vmatpush1.msra.mxu0 0.0
    %1407 = vmatprep.subr.mxu0 0.0
    %1408 = vmatpush1.msra.mxu0 0.0
    %1409 = vmatprep.subr.mxu0 0.0
    %1410 = vmatpush1.msra.mxu0 0.0
    %1411 = vmatprep.subr.mxu0 0.0
    %1412 = vmatpush1.msra.mxu0 0.0
    %1413 = vmatprep.subr.mxu0 0.0
    %1414 = vmatpush1.msra.mxu0 0.0
    %1415 = vmatprep.subr.mxu0 0.0
    %1416 = vmatpush1.msra.mxu0 0.0
    %1417 = vmatprep.subr.mxu0 0.0
    %1418 = vmatpush1.msra.mxu0 0.0
    %1419 = vmatprep.mubr.f32.mxu0 0.0
    %1420 = vmatmul.mubr.f32.gmra.mrb[0].mxu0 %v615
    %v1421 = vpop.f32.mrb[0].mxu0
    %v1422 = vadd.f32 0.0, %v1421
    %v1423 = vpop.f32.mrb[0].mxu0
    %1424 = vmatprep.mubr.f32.mxu0 0.0
    %1425 = vmatmul.mubr.f32.gmra.mrb[0].mxu0 %v618
    %v1426 = vpop.f32.mrb[0].mxu0
    %v1427 = vadd.f32 0.0, %v1426
    %v1428 = vpop.f32.mrb[0].mxu0
    %1429 = vdwg.mxu0
    %vm1430 = vcmp.gt.f32.partialorder %v706, 0.0
    %vm1431 = vcmp.gt.f32.partialorder %v707, 0.0
    %v1432 = vmul.f32 %v1422, 0.5
    %v1433 = vmul.f32 %v1427, 0.5
    %v1434 = vceil.f32 %v1432
    %v1435 = vceil.f32 %v1433
    %vm1436 = vcmp.lt.f32.partialorder %v1347, %v1434
    %vm1437 = vcmp.lt.f32.partialorder %v1352, %v1435
    %vm1438 = vmand %vm1430, %vm1436
    %vm1439 = vmand %vm1431, %vm1437
    %v1440 = vsel %vm1438, 1, 0
    %v1441 = vsel %vm1439, 1, 0
    %v1442 = vcvt.s32.f32 %v1440
    %v1443 = vcvt.s32.f32 %v1441
    %v1444 = vmul.f32 %v1056, %v1174
    %v1445 = vmul.f32 %v1057, %v1179
    %1447 = vset.pattern.permute.xlu0 0
    %1448 = vperm.xlu0 %1447, %v1442
    %v1449 = vpop.permute.xlu0 %1448
    %1452 = vset.pattern.permute.xlu0 0
    %1453 = vperm.xlu0 %1452, %v1443
    %v1454 = vpop.permute.xlu0 %1453
    %v1456 = vmul.f32 %v1444, %v1449
    %v1457 = vmul.f32 %v1445, %v1454
    %v1458 = vpack.c.bf16 %v1457, %v1456
    %v1460 = vsel %vm106, %v94, 0
    %1462 = vmatprep.subr.bf16.mxu0 0
    %1463 = vmatpush1.bf16.msra.mxu0 %v1458
    %1464 = vmatprep.subr.bf16.mxu0 0
    %1465 = vmatpush1.bf16.msra.mxu0 0
    %1466 = vmatprep.subr.bf16.mxu0 0
    %1467 = vmatpush1.bf16.msra.mxu0 0
    %1468 = vmatprep.subr.bf16.mxu0 0
    %1469 = vmatpush1.bf16.msra.mxu0 0
    %1470 = vmatprep.subr.bf16.mxu0 0
    %1471 = vmatpush1.bf16.msra.mxu0 0
    %1472 = vmatprep.subr.bf16.mxu0 0
    %1473 = vmatpush1.bf16.msra.mxu0 0
    %1474 = vmatprep.subr.bf16.mxu0 0
    %1475 = vmatpush1.bf16.msra.mxu0 0
    %1476 = vmatprep.subr.bf16.mxu0 0
    %1477 = vmatpush1.bf16.msra.mxu0 0
    %1478 = vmatprep.subr.bf16.mxu0 0
    %1479 = vmatpush1.bf16.msra.mxu0 0
    %1480 = vmatprep.subr.bf16.mxu0 0
    %1481 = vmatpush1.bf16.msra.mxu0 0
    %1482 = vmatprep.subr.bf16.mxu0 0
    %1483 = vmatpush1.bf16.msra.mxu0 0
    %1484 = vmatprep.subr.bf16.mxu0 0
    %1485 = vmatpush1.bf16.msra.mxu0 0
    %1486 = vmatprep.subr.bf16.mxu0 0
    %1487 = vmatpush1.bf16.msra.mxu0 0
    %1488 = vmatprep.subr.bf16.mxu0 0
    %1489 = vmatpush1.bf16.msra.mxu0 0
    %1490 = vmatprep.subr.bf16.mxu0 0
    %1491 = vmatpush1.bf16.msra.mxu0 0
    %1492 = vmatprep.subr.bf16.mxu0 0
    %1493 = vmatpush1.bf16.msra.mxu0 0
    %1494 = vmatprep.mubr.bf16.mxu0 0
    %1495 = vmatmul.mubr.bf16.gmra.mrb[0].mxu0 %v1460
    %v1496 = vpop.f32.mrb[0].mxu0
    %v1497 = vadd.f32 0.0, %v1496
    %v1498 = vpop.f32.mrb[0].mxu0
    %v1499 = vpop.f32.mrb[0].mxu0
    %v1500 = vpop.f32.mrb[0].mxu0
    %1501 = vdwg.mxu0
    %v1502 = vmul.f32 %v95, %v1449
    %v1503 = vmul.f32 %v96, %v1454
    %vm1504 = vcmp.gt.f32.partialorder %v1502, 0.0
    %vm1505 = vcmp.gt.f32.partialorder %v1503, 0.0
    %v1506 = vsel %vm1504, 1, 0
    %v1507 = vsel %vm1505, 1, 0
    %1508 = vset.pattern.permute.xlu0 0
    %1509 = vperm.xlu0 %1508, %v1506
    %v1510 = vpop.permute.xlu0 %1509
    %1511 = vset.pattern.permute.xlu0 0
    %1512 = vperm.xlu0 %1511, %v1507
    %v1513 = vpop.permute.xlu0 %1512
    %vm1514 = vcmp.eq.s32.totalorder %v1510, 1
    %vm1515 = vcmp.eq.s32.totalorder %v1513, 1
    %v1516 = vsel %vm1514, %v1456, -1e+30
    %v1517 = vsel %vm1515, %v1457, -1e+30
    %v1518 = vsel %vm325, %v1516, -inf
    %v1519 = vsel %vm325, %v1517, -inf
    %v1520 = vmax.f32 %v1518, %v1519
    %v1521 = vrot.slane %v1520, 4
    %v1522 = vmax.f32 %v1520, %v1521
    %v1523 = vrot.slane %v1522, 2
    %v1524 = vmax.f32 %v1522, %v1523
    %v1525 = vrot.slane %v1524, 1
    %v1526 = vmax.f32 %v1524, %v1525
    %v1527 = vsel %vm750, %v1526, 0.0
    %1528 = vset.pattern.permute.xlu0 1
    %1529 = vperm.xlu0 %1528, %v1506
    %v1530 = vpop.permute.xlu0 %1529
    %1531 = vset.pattern.permute.xlu0 1
    %1532 = vperm.xlu0 %1531, %v1507
    %v1533 = vpop.permute.xlu0 %1532
    %vm1534 = vcmp.eq.s32.totalorder %v1530, 1
    %vm1535 = vcmp.eq.s32.totalorder %v1533, 1
    %v1536 = vsel %vm1534, %v1456, -1e+30
    %v1537 = vsel %vm1535, %v1457, -1e+30
    %v1538 = vsel %vm325, %v1536, -inf
    %v1539 = vsel %vm325, %v1537, -inf
    %v1540 = vmax.f32 %v1538, %v1539
    %v1541 = vrot.slane %v1540, 4
    %v1542 = vmax.f32 %v1540, %v1541
    %v1543 = vrot.slane %v1542, 2
    %v1544 = vmax.f32 %v1542, %v1543
    %v1545 = vrot.slane %v1544, 1
    %v1546 = vmax.f32 %v1544, %v1545
    %v1547 = vsel %vm773, %v1546, %v1527
    %1548 = vmatprep.subr.mxu0 0.0
    %1549 = vmatpush1.msra.mxu0 %v1442
    %1550 = vmatprep.subr.mxu0 0.0
    %1551 = vmatpush1.msra.mxu0 %v1443
    %1552 = vmatprep.subr.mxu0 0.0
    %1553 = vmatpush1.msra.mxu0 0.0
    %1554 = vmatprep.subr.mxu0 0.0
    %1555 = vmatpush1.msra.mxu0 0.0
    %1556 = vmatprep.subr.mxu0 0.0
    %1557 = vmatpush1.msra.mxu0 0.0
    %1558 = vmatprep.subr.mxu0 0.0
    %1559 = vmatpush1.msra.mxu0 0.0
    %1560 = vmatprep.subr.mxu0 0.0
    %1561 = vmatpush1.msra.mxu0 0.0
    %1562 = vmatprep.subr.mxu0 0.0
    %1563 = vmatpush1.msra.mxu0 0.0
    %1564 = vmatprep.subr.mxu0 0.0
    %1565 = vmatpush1.msra.mxu0 0.0
    %1566 = vmatprep.subr.mxu0 0.0
    %1567 = vmatpush1.msra.mxu0 0.0
    %1568 = vmatprep.subr.mxu0 0.0
    %1569 = vmatpush1.msra.mxu0 0.0
    %1570 = vmatprep.subr.mxu0 0.0
    %1571 = vmatpush1.msra.mxu0 0.0
    %1572 = vmatprep.subr.mxu0 0.0
    %1573 = vmatpush1.msra.mxu0 0.0
    %1574 = vmatprep.subr.mxu0 0.0
    %1575 = vmatpush1.msra.mxu0 0.0
    %1576 = vmatprep.subr.mxu0 0.0
    %1577 = vmatpush1.msra.mxu0 0.0
    %1578 = vmatprep.subr.mxu0 0.0
    %1579 = vmatpush1.msra.mxu0 0.0
    %1580 = vmatprep.subr.mxu0 0.0
    %1581 = vmatpush1.msra.mxu0 0.0
    %1582 = vmatprep.subr.mxu0 0.0
    %1583 = vmatpush1.msra.mxu0 0.0
    %1584 = vmatprep.subr.mxu0 0.0
    %1585 = vmatpush1.msra.mxu0 0.0
    %1586 = vmatprep.subr.mxu0 0.0
    %1587 = vmatpush1.msra.mxu0 0.0
    %1588 = vmatprep.subr.mxu0 0.0
    %1589 = vmatpush1.msra.mxu0 0.0
    %1590 = vmatprep.subr.mxu0 0.0
    %1591 = vmatpush1.msra.mxu0 0.0
    %1592 = vmatprep.subr.mxu0 0.0
    %1593 = vmatpush1.msra.mxu0 0.0
    %1594 = vmatprep.subr.mxu0 0.0
    %1595 = vmatpush1.msra.mxu0 0.0
    %1596 = vmatprep.subr.mxu0 0.0
    %1597 = vmatpush1.msra.mxu0 0.0
    %1598 = vmatprep.subr.mxu0 0.0
    %1599 = vmatpush1.msra.mxu0 0.0
    %1600 = vmatprep.subr.mxu0 0.0
    %1601 = vmatpush1.msra.mxu0 0.0
    %1602 = vmatprep.subr.mxu0 0.0
    %1603 = vmatpush1.msra.mxu0 0.0
    %1604 = vmatprep.subr.mxu0 0.0
    %1605 = vmatpush1.msra.mxu0 0.0
    %1606 = vmatprep.subr.mxu0 0.0
    %1607 = vmatpush1.msra.mxu0 0.0
    %1608 = vmatprep.subr.mxu0 0.0
    %1609 = vmatpush1.msra.mxu0 0.0
    %1610 = vmatprep.subr.mxu0 0.0
    %1611 = vmatpush1.msra.mxu0 0.0
    %1612 = vmatprep.mubr.f32.mxu0 0.0
    %1613 = vmatmul.mubr.f32.gmra.mrb[0].mxu0 %v776
    %v1614 = vpop.f32.mrb[0].mxu0
    %v1615 = vadd.f32 0.0, %v1614
    %v1616 = vpop.f32.mrb[0].mxu0
    %1617 = vdwg.mxu0
    %vm1618 = vcmp.gt.f32.partialorder %v1615, 0.0
    %v1619 = vsel %vm1618, 1, 0
    %1620 = vset.pattern.permute.xlu0 0
    %1621 = vperm.xlu0 %1620, %v1619
    %v1622 = vpop.permute.xlu0 %1621
    %vm1623 = vcmp.eq.s32.totalorder %v1622, 1
    %v1624 = vsel %vm1623, %v1547, 0.0
    %v1625 = vadd.f32 %v855, %v1624
    %1626 = vmatprep.subr.bf16.mxu0 0
    %1627 = vmatpush1.bf16.msra.mxu0 %v722
    %1628 = vmatprep.subr.bf16.mxu0 0
    %1629 = vmatpush1.bf16.msra.mxu0 0
    %1630 = vmatprep.subr.bf16.mxu0 0
    %1631 = vmatpush1.bf16.msra.mxu0 0
    %1632 = vmatprep.subr.bf16.mxu0 0
    %1633 = vmatpush1.bf16.msra.mxu0 0
    %1634 = vmatprep.subr.bf16.mxu0 0
    %1635 = vmatpush1.bf16.msra.mxu0 0
    %1636 = vmatprep.subr.bf16.mxu0 0
    %1637 = vmatpush1.bf16.msra.mxu0 0
    %1638 = vmatprep.subr.bf16.mxu0 0
    %1639 = vmatpush1.bf16.msra.mxu0 0
    %1640 = vmatprep.subr.bf16.mxu0 0
    %1641 = vmatpush1.bf16.msra.mxu0 0
    %1642 = vmatprep.subr.bf16.mxu0 0
    %1643 = vmatpush1.bf16.msra.mxu0 0
    %1644 = vmatprep.subr.bf16.mxu0 0
    %1645 = vmatpush1.bf16.msra.mxu0 0
    %1646 = vmatprep.subr.bf16.mxu0 0
    %1647 = vmatpush1.bf16.msra.mxu0 0
    %1648 = vmatprep.subr.bf16.mxu0 0
    %1649 = vmatpush1.bf16.msra.mxu0 0
    %1650 = vmatprep.subr.bf16.mxu0 0
    %1651 = vmatpush1.bf16.msra.mxu0 0
    %1652 = vmatprep.subr.bf16.mxu0 0
    %1653 = vmatpush1.bf16.msra.mxu0 0
    %1654 = vmatprep.subr.bf16.mxu0 0
    %1655 = vmatpush1.bf16.msra.mxu0 0
    %1656 = vmatprep.subr.bf16.mxu0 0
    %1657 = vmatpush1.bf16.msra.mxu0 0
    %1658 = vmatprep.mubr.bf16.mxu0 0
    %1659 = vmatmul.mubr.bf16.gmra.mrb[0].mxu0 %v1460
    %v1660 = vpop.f32.mrb[0].mxu0
    %v1661 = vadd.f32 %v1497, %v1660
    %v1662 = vpop.f32.mrb[0].mxu0
    %v1663 = vpop.f32.mrb[0].mxu0
    %v1664 = vpop.f32.mrb[0].mxu0
    %1665 = vdwg.mxu0
    %1666 = vmatprep.subr.mxu0 0.0
    %1667 = vmatpush1.msra.mxu0 %v1442
    %1668 = vmatprep.subr.mxu0 0.0
    %1669 = vmatpush1.msra.mxu0 %v1443
    %1670 = vmatprep.subr.mxu0 0.0
    %1671 = vmatpush1.msra.mxu0 0.0
    %1672 = vmatprep.subr.mxu0 0.0
    %1673 = vmatpush1.msra.mxu0 0.0
    %1674 = vmatprep.subr.mxu0 0.0
    %1675 = vmatpush1.msra.mxu0 0.0
    %1676 = vmatprep.subr.mxu0 0.0
    %1677 = vmatpush1.msra.mxu0 0.0
    %1678 = vmatprep.subr.mxu0 0.0
    %1679 = vmatpush1.msra.mxu0 0.0
    %1680 = vmatprep.subr.mxu0 0.0
    %1681 = vmatpush1.msra.mxu0 0.0
    %1682 = vmatprep.subr.mxu0 0.0
    %1683 = vmatpush1.msra.mxu0 0.0
    %1684 = vmatprep.subr.mxu0 0.0
    %1685 = vmatpush1.msra.mxu0 0.0
    %1686 = vmatprep.subr.mxu0 0.0
    %1687 = vmatpush1.msra.mxu0 0.0
    %1688 = vmatprep.subr.mxu0 0.0
    %1689 = vmatpush1.msra.mxu0 0.0
    %1690 = vmatprep.subr.mxu0 0.0
    %1691 = vmatpush1.msra.mxu0 0.0
    %1692 = vmatprep.subr.mxu0 0.0
    %1693 = vmatpush1.msra.mxu0 0.0
    %1694 = vmatprep.subr.mxu0 0.0
    %1695 = vmatpush1.msra.mxu0 0.0
    %1696 = vmatprep.subr.mxu0 0.0
    %1697 = vmatpush1.msra.mxu0 0.0
    %1698 = vmatprep.subr.mxu0 0.0
    %1699 = vmatpush1.msra.mxu0 0.0
    %1700 = vmatprep.subr.mxu0 0.0
    %1701 = vmatpush1.msra.mxu0 0.0
    %1702 = vmatprep.subr.mxu0 0.0
    %1703 = vmatpush1.msra.mxu0 0.0
    %1704 = vmatprep.subr.mxu0 0.0
    %1705 = vmatpush1.msra.mxu0 0.0
    %1706 = vmatprep.subr.mxu0 0.0
    %1707 = vmatpush1.msra.mxu0 0.0
    %1708 = vmatprep.subr.mxu0 0.0
    %1709 = vmatpush1.msra.mxu0 0.0
    %1710 = vmatprep.subr.mxu0 0.0
    %1711 = vmatpush1.msra.mxu0 0.0
    %1712 = vmatprep.subr.mxu0 0.0
    %1713 = vmatpush1.msra.mxu0 0.0
    %1714 = vmatprep.subr.mxu0 0.0
    %1715 = vmatpush1.msra.mxu0 0.0
    %1716 = vmatprep.subr.mxu0 0.0
    %1717 = vmatpush1.msra.mxu0 0.0
    %1718 = vmatprep.subr.mxu0 0.0
    %1719 = vmatpush1.msra.mxu0 0.0
    %1720 = vmatprep.subr.mxu0 0.0
    %1721 = vmatpush1.msra.mxu0 0.0
    %1722 = vmatprep.subr.mxu0 0.0
    %1723 = vmatpush1.msra.mxu0 0.0
    %1724 = vmatprep.subr.mxu0 0.0
    %1725 = vmatpush1.msra.mxu0 0.0
    %1726 = vmatprep.subr.mxu0 0.0
    %1727 = vmatpush1.msra.mxu0 0.0
    %1728 = vmatprep.subr.mxu0 0.0
    %1729 = vmatpush1.msra.mxu0 0.0
    %1730 = vmatprep.mubr.f32.mxu0 0.0
    %1731 = vmatmul.mubr.f32.gmra.mrb[0].mxu0 %v108
    %v1732 = vpop.f32.mrb[0].mxu0
    %v1733 = vadd.f32 1.0, %v1732
    %v1734 = vpop.f32.mrb[0].mxu0
    %1735 = vmatprep.mubr.f32.mxu0 0.0
    %1736 = vmatmul.mubr.f32.gmra.mrb[0].mxu0 %v111
    %v1737 = vpop.f32.mrb[0].mxu0
    %v1738 = vadd.f32 1.0, %v1737
    %v1739 = vpop.f32.mrb[0].mxu0
    %1740 = vdwg.mxu0
    %v1741 = vmul.f32 %v1442, %v1733
    %v1742 = vmul.f32 %v1443, %v1738
    %vm1743 = vcmp.gt.f32.partialorder %v1741, 0.0
    %vm1744 = vcmp.gt.f32.partialorder %v1742, 0.0
    %v1745 = vmax.f32 %v1741, 1.0
    %v1746 = vmax.f32 %v1742, 1.0
    %v1747 = vrsqrt.pop %v1745
    %v1748 = vrsqrt.pop %v1746
    %v1749 = vsel %vm1743, %v1747, 0.0
    %v1750 = vsel %vm1744, %v1748, 0.0
    %v1751 = vld [vmem:[%s10] sm:$0xff]
    %v1752 = vld [vmem:[%s10 + $0x8] sm:$0xff]
    %v1753 = vld [vmem:[%s10 + $0x10] sm:$0xff]
    %v1754 = vld [vmem:[%s10 + $0x18] sm:$0xff]
    %v1755 = vpack.c.bf16 %v1752, %v1751
    %v1756 = vpack.c.bf16 %v1754, %v1753
    %v1758 = vsel %vm325, %v1458, 0
    %1760 = vmatprep.subr.bf16.mxu0 0
    %1761 = vmatpush1.bf16.msra.mxu0 %v1755
    %1762 = vmatprep.subr.bf16.mxu0 0
    %1763 = vmatpush1.bf16.msra.mxu0 %v1756
    %1764 = vmatprep.subr.bf16.mxu0 0
    %1765 = vmatpush1.bf16.msra.mxu0 0
    %1766 = vmatprep.subr.bf16.mxu0 0
    %1767 = vmatpush1.bf16.msra.mxu0 0
    %1768 = vmatprep.subr.bf16.mxu0 0
    %1769 = vmatpush1.bf16.msra.mxu0 0
    %1770 = vmatprep.subr.bf16.mxu0 0
    %1771 = vmatpush1.bf16.msra.mxu0 0
    %1772 = vmatprep.subr.bf16.mxu0 0
    %1773 = vmatpush1.bf16.msra.mxu0 0
    %1774 = vmatprep.subr.bf16.mxu0 0
    %1775 = vmatpush1.bf16.msra.mxu0 0
    %1776 = vmatprep.subr.bf16.mxu0 0
    %1777 = vmatpush1.bf16.msra.mxu0 0
    %1778 = vmatprep.subr.bf16.mxu0 0
    %1779 = vmatpush1.bf16.msra.mxu0 0
    %1780 = vmatprep.subr.bf16.mxu0 0
    %1781 = vmatpush1.bf16.msra.mxu0 0
    %1782 = vmatprep.subr.bf16.mxu0 0
    %1783 = vmatpush1.bf16.msra.mxu0 0
    %1784 = vmatprep.subr.bf16.mxu0 0
    %1785 = vmatpush1.bf16.msra.mxu0 0
    %1786 = vmatprep.subr.bf16.mxu0 0
    %1787 = vmatpush1.bf16.msra.mxu0 0
    %1788 = vmatprep.subr.bf16.mxu0 0
    %1789 = vmatpush1.bf16.msra.mxu0 0
    %1790 = vmatprep.subr.bf16.mxu0 0
    %1791 = vmatpush1.bf16.msra.mxu0 0
    %1792 = vmatprep.mubr.bf16.mxu0 0
    %1793 = vmatmul.mubr.bf16.gmra.mrb[0].mxu0 %v1758
    %v1794 = vpop.f32.mrb[0].mxu0
    %v1795 = vadd.f32 0.0, %v1794
    %v1796 = vpop.f32.mrb[0].mxu0
    %v1797 = vpop.f32.mrb[0].mxu0
    %v1798 = vadd.f32 0.0, %v1797
    %v1799 = vpop.f32.mrb[0].mxu0
    %1800 = vdwg.mxu0
    %1802 = vset.pattern.permute.xlu0 0
    %1803 = vperm.xlu0 %1802, %v1749
    %v1804 = vpop.permute.xlu0 %1803
    %1807 = vset.pattern.permute.xlu0 0
    %1808 = vperm.xlu0 %1807, %v1750
    %v1809 = vpop.permute.xlu0 %1808
    %v1811 = vmul.f32 %v1804, %v1795
    %v1812 = vmul.f32 %v1809, %v1798
    %v1813 = vpack.c.bf16 %v1812, %v1811
    %1814 = vmatprep.subr.bf16.mxu0 0
    %1815 = vmatpush1.bf16.msra.mxu0 %v1813
    %1816 = vmatprep.subr.bf16.mxu0 0
    %1817 = vmatpush1.bf16.msra.mxu0 0
    %1818 = vmatprep.subr.bf16.mxu0 0
    %1819 = vmatpush1.bf16.msra.mxu0 0
    %1820 = vmatprep.subr.bf16.mxu0 0
    %1821 = vmatpush1.bf16.msra.mxu0 0
    %1822 = vmatprep.subr.bf16.mxu0 0
    %1823 = vmatpush1.bf16.msra.mxu0 0
    %1824 = vmatprep.subr.bf16.mxu0 0
    %1825 = vmatpush1.bf16.msra.mxu0 0
    %1826 = vmatprep.subr.bf16.mxu0 0
    %1827 = vmatpush1.bf16.msra.mxu0 0
    %1828 = vmatprep.subr.bf16.mxu0 0
    %1829 = vmatpush1.bf16.msra.mxu0 0
    %1830 = vmatprep.subr.bf16.mxu0 0
    %1831 = vmatpush1.bf16.msra.mxu0 0
    %1832 = vmatprep.subr.bf16.mxu0 0
    %1833 = vmatpush1.bf16.msra.mxu0 0
    %1834 = vmatprep.subr.bf16.mxu0 0
    %1835 = vmatpush1.bf16.msra.mxu0 0
    %1836 = vmatprep.subr.bf16.mxu0 0
    %1837 = vmatpush1.bf16.msra.mxu0 0
    %1838 = vmatprep.subr.bf16.mxu0 0
    %1839 = vmatpush1.bf16.msra.mxu0 0
    %1840 = vmatprep.subr.bf16.mxu0 0
    %1841 = vmatpush1.bf16.msra.mxu0 0
    %1842 = vmatprep.subr.bf16.mxu0 0
    %1843 = vmatpush1.bf16.msra.mxu0 0
    %1844 = vmatprep.subr.bf16.mxu0 0
    %1845 = vmatpush1.bf16.msra.mxu0 0
    %1846 = vmatprep.mubr.bf16.mxu0 0
    %1847 = vmatmul.mubr.bf16.gmra.mrb[0].mxu0 %v262
    %v1848 = vpop.f32.mrb[0].mxu0
    %v1849 = vadd.f32 %v1811, %v1848
    %v1850 = vpop.f32.mrb[0].mxu0
    %v1851 = vpop.f32.mrb[0].mxu0
    %v1852 = vadd.f32 %v1812, %v1851
    %v1853 = vpop.f32.mrb[0].mxu0
    %1854 = vdwg.mxu0
    %v1855 = vmul.f32 %v1804, %v1849
    %v1856 = vmul.f32 %v1809, %v1852
    %v1857 = vld [vmem:[%s11] sm:$0x1]
    %v1859 = vlaneseq
    %v1860 = vshrl.u32 %v1859, 7
    %v1861 = vsub.s32 0, %v1860
    %v1862 = vrot.slane %v1857, %v1861
    %v1864 = vadd.f32 %v1855, %v1862
    %v1865 = vadd.f32 %v1856, %v1862
    %v1866 = vmax.f32 %v1864, 0.0
    %v1867 = vmax.f32 %v1865, 0.0
    %v1868 = vpack.c.bf16 %v1867, %v1866
    %v1869 = vld [vmem:[%s14] sm:$0xff]
    %v1870 = vld [vmem:[%s14 + $0x8] sm:$0xff]
    %v1871 = vld [vmem:[%s14 + $0x10] sm:$0xff]
    %v1872 = vld [vmem:[%s14 + $0x18] sm:$0xff]
    %v1873 = vpack.c.bf16 %v1870, %v1869
    %v1874 = vpack.c.bf16 %v1872, %v1871
    %v1876 = vsel %vm325, %v1868, 0
    %1878 = vmatprep.subr.bf16.mxu0 0
    %1879 = vmatpush1.bf16.msra.mxu0 %v1873
    %1880 = vmatprep.subr.bf16.mxu0 0
    %1881 = vmatpush1.bf16.msra.mxu0 %v1874
    %1882 = vmatprep.subr.bf16.mxu0 0
    %1883 = vmatpush1.bf16.msra.mxu0 0
    %1884 = vmatprep.subr.bf16.mxu0 0
    %1885 = vmatpush1.bf16.msra.mxu0 0
    %1886 = vmatprep.subr.bf16.mxu0 0
    %1887 = vmatpush1.bf16.msra.mxu0 0
    %1888 = vmatprep.subr.bf16.mxu0 0
    %1889 = vmatpush1.bf16.msra.mxu0 0
    %1890 = vmatprep.subr.bf16.mxu0 0
    %1891 = vmatpush1.bf16.msra.mxu0 0
    %1892 = vmatprep.subr.bf16.mxu0 0
    %1893 = vmatpush1.bf16.msra.mxu0 0
    %1894 = vmatprep.subr.bf16.mxu0 0
    %1895 = vmatpush1.bf16.msra.mxu0 0
    %1896 = vmatprep.subr.bf16.mxu0 0
    %1897 = vmatpush1.bf16.msra.mxu0 0
    %1898 = vmatprep.subr.bf16.mxu0 0
    %1899 = vmatpush1.bf16.msra.mxu0 0
    %1900 = vmatprep.subr.bf16.mxu0 0
    %1901 = vmatpush1.bf16.msra.mxu0 0
    %1902 = vmatprep.subr.bf16.mxu0 0
    %1903 = vmatpush1.bf16.msra.mxu0 0
    %1904 = vmatprep.subr.bf16.mxu0 0
    %1905 = vmatpush1.bf16.msra.mxu0 0
    %1906 = vmatprep.subr.bf16.mxu0 0
    %1907 = vmatpush1.bf16.msra.mxu0 0
    %1908 = vmatprep.subr.bf16.mxu0 0
    %1909 = vmatpush1.bf16.msra.mxu0 0
    %1910 = vmatprep.mubr.bf16.mxu0 0
    %1911 = vmatmul.mubr.bf16.gmra.mrb[0].mxu0 %v1876
    %v1912 = vpop.f32.mrb[0].mxu0
    %v1913 = vadd.f32 0.0, %v1912
    %v1914 = vpop.f32.mrb[0].mxu0
    %v1915 = vpop.f32.mrb[0].mxu0
    %v1916 = vadd.f32 0.0, %v1915
    %v1917 = vpop.f32.mrb[0].mxu0
    %1918 = vdwg.mxu0
    %v1919 = vmul.f32 %v1442, %v1913
    %v1920 = vmul.f32 %v1443, %v1916
    %v1921 = vpack.c.bf16 %v1920, %v1919
    %1922 = vmatprep.subr.bf16.mxu0 0
    %1923 = vmatpush1.bf16.msra.mxu0 %v1921
    %1924 = vmatprep.subr.bf16.mxu0 0
    %1925 = vmatpush1.bf16.msra.mxu0 0
    %1926 = vmatprep.subr.bf16.mxu0 0
    %1927 = vmatpush1.bf16.msra.mxu0 0
    %1928 = vmatprep.subr.bf16.mxu0 0
    %1929 = vmatpush1.bf16.msra.mxu0 0
    %1930 = vmatprep.subr.bf16.mxu0 0
    %1931 = vmatpush1.bf16.msra.mxu0 0
    %1932 = vmatprep.subr.bf16.mxu0 0
    %1933 = vmatpush1.bf16.msra.mxu0 0
    %1934 = vmatprep.subr.bf16.mxu0 0
    %1935 = vmatpush1.bf16.msra.mxu0 0
    %1936 = vmatprep.subr.bf16.mxu0 0
    %1937 = vmatpush1.bf16.msra.mxu0 0
    %1938 = vmatprep.subr.bf16.mxu0 0
    %1939 = vmatpush1.bf16.msra.mxu0 0
    %1940 = vmatprep.subr.bf16.mxu0 0
    %1941 = vmatpush1.bf16.msra.mxu0 0
    %1942 = vmatprep.subr.bf16.mxu0 0
    %1943 = vmatpush1.bf16.msra.mxu0 0
    %1944 = vmatprep.subr.bf16.mxu0 0
    %1945 = vmatpush1.bf16.msra.mxu0 0
    %1946 = vmatprep.subr.bf16.mxu0 0
    %1947 = vmatpush1.bf16.msra.mxu0 0
    %1948 = vmatprep.subr.bf16.mxu0 0
    %1949 = vmatpush1.bf16.msra.mxu0 0
    %1950 = vmatprep.subr.bf16.mxu0 0
    %1951 = vmatpush1.bf16.msra.mxu0 0
    %1952 = vmatprep.subr.bf16.mxu0 0
    %1953 = vmatpush1.bf16.msra.mxu0 0
    %1954 = vmatprep.mubr.bf16.mxu0 0
    %1955 = vmatmul.mubr.bf16.gmra.mrb[0].mxu0 %v262
    %v1956 = vpop.f32.mrb[0].mxu0
    %v1957 = vadd.f32 0.0, %v1956
    %v1958 = vpop.f32.mrb[0].mxu0
    %v1959 = vpop.f32.mrb[0].mxu0
    %v1960 = vadd.f32 0.0, %v1959
    %v1961 = vpop.f32.mrb[0].mxu0
    %1962 = vdwg.mxu0
    %v1963 = vmul.f32 %v1442, %v1957
    %v1964 = vmul.f32 %v1443, %v1960
    %s1965 = sld [smem:[#allocation2 + $0x2]]
    %v1966 = vstv %s1965
    %v1967 = vadd.f32 %v1963, %v1966
    %v1968 = vadd.f32 %v1964, %v1966
    %1971 = vrot.lane.b32.xlu0 %v1913, 127
    %v1972 = vpop.permute.xlu0 %1971
    %1973 = vrot.lane.b32.xlu0 %v1916, 127
    %v1974 = vpop.permute.xlu0 %1973
    %v1977 = vadd.f32 %v1967, %v1972
    %v1978 = vadd.f32 %v1968, %v1974
    %v1979 = vtanh.pop %v1977
    %v1980 = vtanh.pop %v1978
    %1982 = vset.pattern.permute.xlu0 0
    %1983 = vperm.xlu0 %1982, %v1979
    %v1984 = vpop.permute.xlu0 %1983
    %1987 = vset.pattern.permute.xlu0 0
    %1988 = vperm.xlu0 %1987, %v1980
    %v1989 = vpop.permute.xlu0 %1988
    %v1991 = vsel %vm436, %v1979, 0
    %v1993 = vsel %vm436, %v1980, 0
    %1995 = vmatprep.subr.mxu0 0.0
    %1996 = vmatpush1.xpose.msra.mxu0 %v1991
    %1997 = vmatprep.subr.mxu0 0.0
    %1998 = vmatpush1.xpose.msra.mxu0 %v1993
    %1999 = vmatprep.subr.mxu0 0.0
    %2000 = vmatpush1.xpose.msra.mxu0 0.0
    %2001 = vmatprep.subr.mxu0 0.0
    %2002 = vmatpush1.xpose.msra.mxu0 0.0
    %2003 = vmatprep.subr.mxu0 0.0
    %2004 = vmatpush1.xpose.msra.mxu0 0.0
    %2005 = vmatprep.subr.mxu0 0.0
    %2006 = vmatpush1.xpose.msra.mxu0 0.0
    %2007 = vmatprep.subr.mxu0 0.0
    %2008 = vmatpush1.xpose.msra.mxu0 0.0
    %2009 = vmatprep.subr.mxu0 0.0
    %2010 = vmatpush1.xpose.msra.mxu0 0.0
    %2011 = vmatprep.subr.mxu0 0.0
    %2012 = vmatpush1.xpose.msra.mxu0 0.0
    %2013 = vmatprep.subr.mxu0 0.0
    %2014 = vmatpush1.xpose.msra.mxu0 0.0
    %2015 = vmatprep.subr.mxu0 0.0
    %2016 = vmatpush1.xpose.msra.mxu0 0.0
    %2017 = vmatprep.subr.mxu0 0.0
    %2018 = vmatpush1.xpose.msra.mxu0 0.0
    %2019 = vmatprep.subr.mxu0 0.0
    %2020 = vmatpush1.xpose.msra.mxu0 0.0
    %2021 = vmatprep.subr.mxu0 0.0
    %2022 = vmatpush1.xpose.msra.mxu0 0.0
    %2023 = vmatprep.subr.mxu0 0.0
    %2024 = vmatpush1.xpose.msra.mxu0 0.0
    %2025 = vmatprep.subr.mxu0 0.0
    %2026 = vmatpush1.xpose.msra.mxu0 0.0
    %2027 = vmatprep.subr.mxu0 0.0
    %2028 = vmatpush1.xpose.msra.mxu0 0.0
    %2029 = vmatprep.subr.mxu0 0.0
    %2030 = vmatpush1.xpose.msra.mxu0 0.0
    %2031 = vmatprep.subr.mxu0 0.0
    %2032 = vmatpush1.xpose.msra.mxu0 0.0
    %2033 = vmatprep.subr.mxu0 0.0
    %2034 = vmatpush1.xpose.msra.mxu0 0.0
    %2035 = vmatprep.subr.mxu0 0.0
    %2036 = vmatpush1.xpose.msra.mxu0 0.0
    %2037 = vmatprep.subr.mxu0 0.0
    %2038 = vmatpush1.xpose.msra.mxu0 0.0
    %2039 = vmatprep.subr.mxu0 0.0
    %2040 = vmatpush1.xpose.msra.mxu0 0.0
    %2041 = vmatprep.subr.mxu0 0.0
    %2042 = vmatpush1.xpose.msra.mxu0 0.0
    %2043 = vmatprep.subr.mxu0 0.0
    %2044 = vmatpush1.xpose.msra.mxu0 0.0
    %2045 = vmatprep.subr.mxu0 0.0
    %2046 = vmatpush1.xpose.msra.mxu0 0.0
    %2047 = vmatprep.subr.mxu0 0.0
    %2048 = vmatpush1.xpose.msra.mxu0 0.0
    %2049 = vmatprep.subr.mxu0 0.0
    %2050 = vmatpush1.xpose.msra.mxu0 0.0
    %2051 = vmatprep.subr.mxu0 0.0
    %2052 = vmatpush1.xpose.msra.mxu0 0.0
    %2053 = vmatprep.subr.mxu0 0.0
    %2054 = vmatpush1.xpose.msra.mxu0 0.0
    %2055 = vmatprep.subr.mxu0 0.0
    %2056 = vmatpush1.xpose.msra.mxu0 0.0
    %2057 = vmatprep.subr.mxu0 0.0
    %2058 = vmatpush1.xpose.msra.mxu0 0.0
    %2059 = vmatprep.mubr.f32.mxu0 0.0
    %2060 = vmatmul.mubr.f32.gmra.mrb[0].mxu0 %v438
    %v2061 = vpop.f32.mrb[0].mxu0
    %v2062 = vadd.f32 0.0, %v2061
    %v2063 = vpop.f32.mrb[0].mxu0
    %2064 = vmatprep.mubr.f32.mxu0 0.0
    %2065 = vmatmul.mubr.f32.gmra.mrb[0].mxu0 %v438
    %v2066 = vpop.f32.mrb[0].mxu0
    %v2067 = vadd.f32 0.0, %v2066
    %v2068 = vpop.f32.mrb[0].mxu0
    %2069 = vdwg.mxu0
    %vm2070 = vcmp.gt.f32.partialorder %v2062, %v1984
    %vm2071 = vcmp.gt.f32.partialorder %v2067, %v1989
    %vm2072 = vcmp.eq.f32.partialorder %v2062, %v1984
    %vm2073 = vcmp.eq.f32.partialorder %v2067, %v1989
    %vm2074 = vmand %vm2072, %vm102
    %vm2075 = vmand %vm2073, %vm103
    %vm2076 = vmor %vm2070, %vm2074
    %vm2077 = vmor %vm2071, %vm2075
    %v2078 = vsel %vm2076, 1, 0
    %v2079 = vsel %vm2077, 1, 0
    %v2080 = vcvt.s32.f32 %v2078
    %v2081 = vcvt.s32.f32 %v2079
    %v2082 = vmul.f32 %v91, %v2080
    %v2083 = vmul.f32 %v92, %v2081
    %v2085 = vsel %vm106, %v2082, 0
    %v2088 = vsel %vm106, %v2083, 0
    %2090 = vmatprep.subr.mxu0 0.0
    %2091 = vmatpush1.msra.mxu0 %v1442
    %2092 = vmatprep.subr.mxu0 0.0
    %2093 = vmatpush1.msra.mxu0 %v1443
    %2094 = vmatprep.subr.mxu0 0.0
    %2095 = vmatpush1.msra.mxu0 0.0
    %2096 = vmatprep.subr.mxu0 0.0
    %2097 = vmatpush1.msra.mxu0 0.0
    %2098 = vmatprep.subr.mxu0 0.0
    %2099 = vmatpush1.msra.mxu0 0.0
    %2100 = vmatprep.subr.mxu0 0.0
    %2101 = vmatpush1.msra.mxu0 0.0
    %2102 = vmatprep.subr.mxu0 0.0
    %2103 = vmatpush1.msra.mxu0 0.0
    %2104 = vmatprep.subr.mxu0 0.0
    %2105 = vmatpush1.msra.mxu0 0.0
    %2106 = vmatprep.subr.mxu0 0.0
    %2107 = vmatpush1.msra.mxu0 0.0
    %2108 = vmatprep.subr.mxu0 0.0
    %2109 = vmatpush1.msra.mxu0 0.0
    %2110 = vmatprep.subr.mxu0 0.0
    %2111 = vmatpush1.msra.mxu0 0.0
    %2112 = vmatprep.subr.mxu0 0.0
    %2113 = vmatpush1.msra.mxu0 0.0
    %2114 = vmatprep.subr.mxu0 0.0
    %2115 = vmatpush1.msra.mxu0 0.0
    %2116 = vmatprep.subr.mxu0 0.0
    %2117 = vmatpush1.msra.mxu0 0.0
    %2118 = vmatprep.subr.mxu0 0.0
    %2119 = vmatpush1.msra.mxu0 0.0
    %2120 = vmatprep.subr.mxu0 0.0
    %2121 = vmatpush1.msra.mxu0 0.0
    %2122 = vmatprep.subr.mxu0 0.0
    %2123 = vmatpush1.msra.mxu0 0.0
    %2124 = vmatprep.subr.mxu0 0.0
    %2125 = vmatpush1.msra.mxu0 0.0
    %2126 = vmatprep.subr.mxu0 0.0
    %2127 = vmatpush1.msra.mxu0 0.0
    %2128 = vmatprep.subr.mxu0 0.0
    %2129 = vmatpush1.msra.mxu0 0.0
    %2130 = vmatprep.subr.mxu0 0.0
    %2131 = vmatpush1.msra.mxu0 0.0
    %2132 = vmatprep.subr.mxu0 0.0
    %2133 = vmatpush1.msra.mxu0 0.0
    %2134 = vmatprep.subr.mxu0 0.0
    %2135 = vmatpush1.msra.mxu0 0.0
    %2136 = vmatprep.subr.mxu0 0.0
    %2137 = vmatpush1.msra.mxu0 0.0
    %2138 = vmatprep.subr.mxu0 0.0
    %2139 = vmatpush1.msra.mxu0 0.0
    %2140 = vmatprep.subr.mxu0 0.0
    %2141 = vmatpush1.msra.mxu0 0.0
    %2142 = vmatprep.subr.mxu0 0.0
    %2143 = vmatpush1.msra.mxu0 0.0
    %2144 = vmatprep.subr.mxu0 0.0
    %2145 = vmatpush1.msra.mxu0 0.0
    %2146 = vmatprep.subr.mxu0 0.0
    %2147 = vmatpush1.msra.mxu0 0.0
    %2148 = vmatprep.subr.mxu0 0.0
    %2149 = vmatpush1.msra.mxu0 0.0
    %2150 = vmatprep.subr.mxu0 0.0
    %2151 = vmatpush1.msra.mxu0 0.0
    %2152 = vmatprep.subr.mxu0 0.0
    %2153 = vmatpush1.msra.mxu0 0.0
    %2154 = vmatprep.mubr.f32.mxu0 0.0
    %2155 = vmatmul.mubr.f32.gmra.mrb[0].mxu0 %v2085
    %v2156 = vpop.f32.mrb[0].mxu0
    %v2157 = vadd.f32 0.0, %v2156
    %v2158 = vpop.f32.mrb[0].mxu0
    %2159 = vmatprep.mubr.f32.mxu0 0.0
    %2160 = vmatmul.mubr.f32.gmra.mrb[0].mxu0 %v2088
    %v2161 = vpop.f32.mrb[0].mxu0
    %v2162 = vadd.f32 0.0, %v2161
    %v2163 = vpop.f32.mrb[0].mxu0
    %2164 = vdwg.mxu0
    %2165 = vmatprep.subr.mxu0 0.0
    %2166 = vmatpush1.msra.mxu0 %v1442
    %2167 = vmatprep.subr.mxu0 0.0
    %2168 = vmatpush1.msra.mxu0 %v1443
    %2169 = vmatprep.subr.mxu0 0.0
    %2170 = vmatpush1.msra.mxu0 0.0
    %2171 = vmatprep.subr.mxu0 0.0
    %2172 = vmatpush1.msra.mxu0 0.0
    %2173 = vmatprep.subr.mxu0 0.0
    %2174 = vmatpush1.msra.mxu0 0.0
    %2175 = vmatprep.subr.mxu0 0.0
    %2176 = vmatpush1.msra.mxu0 0.0
    %2177 = vmatprep.subr.mxu0 0.0
    %2178 = vmatpush1.msra.mxu0 0.0
    %2179 = vmatprep.subr.mxu0 0.0
    %2180 = vmatpush1.msra.mxu0 0.0
    %2181 = vmatprep.subr.mxu0 0.0
    %2182 = vmatpush1.msra.mxu0 0.0
    %2183 = vmatprep.subr.mxu0 0.0
    %2184 = vmatpush1.msra.mxu0 0.0
    %2185 = vmatprep.subr.mxu0 0.0
    %2186 = vmatpush1.msra.mxu0 0.0
    %2187 = vmatprep.subr.mxu0 0.0
    %2188 = vmatpush1.msra.mxu0 0.0
    %2189 = vmatprep.subr.mxu0 0.0
    %2190 = vmatpush1.msra.mxu0 0.0
    %2191 = vmatprep.subr.mxu0 0.0
    %2192 = vmatpush1.msra.mxu0 0.0
    %2193 = vmatprep.subr.mxu0 0.0
    %2194 = vmatpush1.msra.mxu0 0.0
    %2195 = vmatprep.subr.mxu0 0.0
    %2196 = vmatpush1.msra.mxu0 0.0
    %2197 = vmatprep.subr.mxu0 0.0
    %2198 = vmatpush1.msra.mxu0 0.0
    %2199 = vmatprep.subr.mxu0 0.0
    %2200 = vmatpush1.msra.mxu0 0.0
    %2201 = vmatprep.subr.mxu0 0.0
    %2202 = vmatpush1.msra.mxu0 0.0
    %2203 = vmatprep.subr.mxu0 0.0
    %2204 = vmatpush1.msra.mxu0 0.0
    %2205 = vmatprep.subr.mxu0 0.0
    %2206 = vmatpush1.msra.mxu0 0.0
    %2207 = vmatprep.subr.mxu0 0.0
    %2208 = vmatpush1.msra.mxu0 0.0
    %2209 = vmatprep.subr.mxu0 0.0
    %2210 = vmatpush1.msra.mxu0 0.0
    %2211 = vmatprep.subr.mxu0 0.0
    %2212 = vmatpush1.msra.mxu0 0.0
    %2213 = vmatprep.subr.mxu0 0.0
    %2214 = vmatpush1.msra.mxu0 0.0
    %2215 = vmatprep.subr.mxu0 0.0
    %2216 = vmatpush1.msra.mxu0 0.0
    %2217 = vmatprep.subr.mxu0 0.0
    %2218 = vmatpush1.msra.mxu0 0.0
    %2219 = vmatprep.subr.mxu0 0.0
    %2220 = vmatpush1.msra.mxu0 0.0
    %2221 = vmatprep.subr.mxu0 0.0
    %2222 = vmatpush1.msra.mxu0 0.0
    %2223 = vmatprep.subr.mxu0 0.0
    %2224 = vmatpush1.msra.mxu0 0.0
    %2225 = vmatprep.subr.mxu0 0.0
    %2226 = vmatpush1.msra.mxu0 0.0
    %2227 = vmatprep.subr.mxu0 0.0
    %2228 = vmatpush1.msra.mxu0 0.0
    %2229 = vmatprep.mubr.f32.mxu0 0.0
    %2230 = vmatmul.mubr.f32.gmra.mrb[0].mxu0 %v615
    %v2231 = vpop.f32.mrb[0].mxu0
    %v2232 = vadd.f32 0.0, %v2231
    %v2233 = vpop.f32.mrb[0].mxu0
    %2234 = vmatprep.mubr.f32.mxu0 0.0
    %2235 = vmatmul.mubr.f32.gmra.mrb[0].mxu0 %v618
    %v2236 = vpop.f32.mrb[0].mxu0
    %v2237 = vadd.f32 0.0, %v2236
    %v2238 = vpop.f32.mrb[0].mxu0
    %2239 = vdwg.mxu0
    %vm2240 = vcmp.gt.f32.partialorder %v1442, 0.0
    %vm2241 = vcmp.gt.f32.partialorder %v1443, 0.0
    %v2242 = vmul.f32 %v2232, 0.5
    %v2243 = vmul.f32 %v2237, 0.5
    %v2244 = vceil.f32 %v2242
    %v2245 = vceil.f32 %v2243
    %vm2246 = vcmp.lt.f32.partialorder %v2157, %v2244
    %vm2247 = vcmp.lt.f32.partialorder %v2162, %v2245
    %vm2248 = vmand %vm2240, %vm2246
    %vm2249 = vmand %vm2241, %vm2247
    %v2250 = vsel %vm2248, 1, 0
    %v2251 = vsel %vm2249, 1, 0
    %v2252 = vcvt.s32.f32 %v2250
    %v2253 = vcvt.s32.f32 %v2251
    %v2254 = vmul.f32 %v1866, %v1984
    %v2255 = vmul.f32 %v1867, %v1989
    %2257 = vset.pattern.permute.xlu0 0
    %2258 = vperm.xlu0 %2257, %v2252
    %v2259 = vpop.permute.xlu0 %2258
    %2262 = vset.pattern.permute.xlu0 0
    %2263 = vperm.xlu0 %2262, %v2253
    %v2264 = vpop.permute.xlu0 %2263
    %v2266 = vmul.f32 %v2254, %v2259
    %v2267 = vmul.f32 %v2255, %v2264
    %v2268 = vpack.c.bf16 %v2267, %v2266
    %2269 = vmatprep.subr.bf16.mxu0 0
    %2270 = vmatpush1.bf16.msra.mxu0 %v2268
    %2271 = vmatprep.subr.bf16.mxu0 0
    %2272 = vmatpush1.bf16.msra.mxu0 0
    %2273 = vmatprep.subr.bf16.mxu0 0
    %2274 = vmatpush1.bf16.msra.mxu0 0
    %2275 = vmatprep.subr.bf16.mxu0 0
    %2276 = vmatpush1.bf16.msra.mxu0 0
    %2277 = vmatprep.subr.bf16.mxu0 0
    %2278 = vmatpush1.bf16.msra.mxu0 0
    %2279 = vmatprep.subr.bf16.mxu0 0
    %2280 = vmatpush1.bf16.msra.mxu0 0
    %2281 = vmatprep.subr.bf16.mxu0 0
    %2282 = vmatpush1.bf16.msra.mxu0 0
    %2283 = vmatprep.subr.bf16.mxu0 0
    %2284 = vmatpush1.bf16.msra.mxu0 0
    %2285 = vmatprep.subr.bf16.mxu0 0
    %2286 = vmatpush1.bf16.msra.mxu0 0
    %2287 = vmatprep.subr.bf16.mxu0 0
    %2288 = vmatpush1.bf16.msra.mxu0 0
    %2289 = vmatprep.subr.bf16.mxu0 0
    %2290 = vmatpush1.bf16.msra.mxu0 0
    %2291 = vmatprep.subr.bf16.mxu0 0
    %2292 = vmatpush1.bf16.msra.mxu0 0
    %2293 = vmatprep.subr.bf16.mxu0 0
    %2294 = vmatpush1.bf16.msra.mxu0 0
    %2295 = vmatprep.subr.bf16.mxu0 0
    %2296 = vmatpush1.bf16.msra.mxu0 0
    %2297 = vmatprep.subr.bf16.mxu0 0
    %2298 = vmatpush1.bf16.msra.mxu0 0
    %2299 = vmatprep.subr.bf16.mxu0 0
    %2300 = vmatpush1.bf16.msra.mxu0 0
    %2301 = vmatprep.mubr.bf16.mxu0 0
    %2302 = vmatmul.mubr.bf16.gmra.mrb[0].mxu0 %v1460
    %v2303 = vpop.f32.mrb[0].mxu0
    %v2304 = vadd.f32 0.0, %v2303
    %v2305 = vpop.f32.mrb[0].mxu0
    %v2306 = vpop.f32.mrb[0].mxu0
    %v2307 = vpop.f32.mrb[0].mxu0
    %2308 = vdwg.mxu0
    %v2309 = vmul.f32 %v95, %v2259
    %v2310 = vmul.f32 %v96, %v2264
    %vm2311 = vcmp.gt.f32.partialorder %v2309, 0.0
    %vm2312 = vcmp.gt.f32.partialorder %v2310, 0.0
    %v2313 = vsel %vm2311, 1, 0
    %v2314 = vsel %vm2312, 1, 0
    %2315 = vset.pattern.permute.xlu0 0
    %2316 = vperm.xlu0 %2315, %v2313
    %v2317 = vpop.permute.xlu0 %2316
    %2318 = vset.pattern.permute.xlu0 0
    %2319 = vperm.xlu0 %2318, %v2314
    %v2320 = vpop.permute.xlu0 %2319
    %vm2321 = vcmp.eq.s32.totalorder %v2317, 1
    %vm2322 = vcmp.eq.s32.totalorder %v2320, 1
    %v2323 = vsel %vm2321, %v2266, -1e+30
    %v2324 = vsel %vm2322, %v2267, -1e+30
    %v2325 = vsel %vm325, %v2323, -inf
    %v2326 = vsel %vm325, %v2324, -inf
    %v2327 = vmax.f32 %v2325, %v2326
    %v2328 = vrot.slane %v2327, 4
    %v2329 = vmax.f32 %v2327, %v2328
    %v2330 = vrot.slane %v2329, 2
    %v2331 = vmax.f32 %v2329, %v2330
    %v2332 = vrot.slane %v2331, 1
    %v2333 = vmax.f32 %v2331, %v2332
    %v2334 = vsel %vm750, %v2333, 0.0
    %2335 = vset.pattern.permute.xlu0 1
    %2336 = vperm.xlu0 %2335, %v2313
    %v2337 = vpop.permute.xlu0 %2336
    %2338 = vset.pattern.permute.xlu0 1
    %2339 = vperm.xlu0 %2338, %v2314
    %v2340 = vpop.permute.xlu0 %2339
    %vm2341 = vcmp.eq.s32.totalorder %v2337, 1
    %vm2342 = vcmp.eq.s32.totalorder %v2340, 1
    %v2343 = vsel %vm2341, %v2266, -1e+30
    %v2344 = vsel %vm2342, %v2267, -1e+30
    %v2345 = vsel %vm325, %v2343, -inf
    %v2346 = vsel %vm325, %v2344, -inf
    %v2347 = vmax.f32 %v2345, %v2346
    %v2348 = vrot.slane %v2347, 4
    %v2349 = vmax.f32 %v2347, %v2348
    %v2350 = vrot.slane %v2349, 2
    %v2351 = vmax.f32 %v2349, %v2350
    %v2352 = vrot.slane %v2351, 1
    %v2353 = vmax.f32 %v2351, %v2352
    %v2354 = vsel %vm773, %v2353, %v2334
    %2355 = vmatprep.subr.mxu0 0.0
    %2356 = vmatpush1.msra.mxu0 %v2252
    %2357 = vmatprep.subr.mxu0 0.0
    %2358 = vmatpush1.msra.mxu0 %v2253
    %2359 = vmatprep.subr.mxu0 0.0
    %2360 = vmatpush1.msra.mxu0 0.0
    %2361 = vmatprep.subr.mxu0 0.0
    %2362 = vmatpush1.msra.mxu0 0.0
    %2363 = vmatprep.subr.mxu0 0.0
    %2364 = vmatpush1.msra.mxu0 0.0
    %2365 = vmatprep.subr.mxu0 0.0
    %2366 = vmatpush1.msra.mxu0 0.0
    %2367 = vmatprep.subr.mxu0 0.0
    %2368 = vmatpush1.msra.mxu0 0.0
    %2369 = vmatprep.subr.mxu0 0.0
    %2370 = vmatpush1.msra.mxu0 0.0
    %2371 = vmatprep.subr.mxu0 0.0
    %2372 = vmatpush1.msra.mxu0 0.0
    %2373 = vmatprep.subr.mxu0 0.0
    %2374 = vmatpush1.msra.mxu0 0.0
    %2375 = vmatprep.subr.mxu0 0.0
    %2376 = vmatpush1.msra.mxu0 0.0
    %2377 = vmatprep.subr.mxu0 0.0
    %2378 = vmatpush1.msra.mxu0 0.0
    %2379 = vmatprep.subr.mxu0 0.0
    %2380 = vmatpush1.msra.mxu0 0.0
    %2381 = vmatprep.subr.mxu0 0.0
    %2382 = vmatpush1.msra.mxu0 0.0
    %2383 = vmatprep.subr.mxu0 0.0
    %2384 = vmatpush1.msra.mxu0 0.0
    %2385 = vmatprep.subr.mxu0 0.0
    %2386 = vmatpush1.msra.mxu0 0.0
    %2387 = vmatprep.subr.mxu0 0.0
    %2388 = vmatpush1.msra.mxu0 0.0
    %2389 = vmatprep.subr.mxu0 0.0
    %2390 = vmatpush1.msra.mxu0 0.0
    %2391 = vmatprep.subr.mxu0 0.0
    %2392 = vmatpush1.msra.mxu0 0.0
    %2393 = vmatprep.subr.mxu0 0.0
    %2394 = vmatpush1.msra.mxu0 0.0
    %2395 = vmatprep.subr.mxu0 0.0
    %2396 = vmatpush1.msra.mxu0 0.0
    %2397 = vmatprep.subr.mxu0 0.0
    %2398 = vmatpush1.msra.mxu0 0.0
    %2399 = vmatprep.subr.mxu0 0.0
    %2400 = vmatpush1.msra.mxu0 0.0
    %2401 = vmatprep.subr.mxu0 0.0
    %2402 = vmatpush1.msra.mxu0 0.0
    %2403 = vmatprep.subr.mxu0 0.0
    %2404 = vmatpush1.msra.mxu0 0.0
    %2405 = vmatprep.subr.mxu0 0.0
    %2406 = vmatpush1.msra.mxu0 0.0
    %2407 = vmatprep.subr.mxu0 0.0
    %2408 = vmatpush1.msra.mxu0 0.0
    %2409 = vmatprep.subr.mxu0 0.0
    %2410 = vmatpush1.msra.mxu0 0.0
    %2411 = vmatprep.subr.mxu0 0.0
    %2412 = vmatpush1.msra.mxu0 0.0
    %2413 = vmatprep.subr.mxu0 0.0
    %2414 = vmatpush1.msra.mxu0 0.0
    %2415 = vmatprep.subr.mxu0 0.0
    %2416 = vmatpush1.msra.mxu0 0.0
    %2417 = vmatprep.subr.mxu0 0.0
    %2418 = vmatpush1.msra.mxu0 0.0
    %2419 = vmatprep.mubr.f32.mxu0 0.0
    %2420 = vmatmul.mubr.f32.gmra.mrb[0].mxu0 %v776
    %v2421 = vpop.f32.mrb[0].mxu0
    %v2422 = vadd.f32 0.0, %v2421
    %v2423 = vpop.f32.mrb[0].mxu0
    %2424 = vdwg.mxu0
    %vm2425 = vcmp.gt.f32.partialorder %v2422, 0.0
    %v2426 = vsel %vm2425, 1, 0
    %2427 = vset.pattern.permute.xlu0 0
    %2428 = vperm.xlu0 %2427, %v2426
    %v2429 = vpop.permute.xlu0 %2428
    %vm2430 = vcmp.eq.s32.totalorder %v2429, 1
    %v2431 = vsel %vm2430, %v2354, 0.0
    %v2432 = vadd.f32 %v1625, %v2431
    %v2433 = vadd.f32 %v1661, %v2304
    %v2434 = vpack.c.bf16 %v2432, %v2432
    %v2435 = vld [vmem:[%s15] sm:$0xff]
    %v2436 = vld [vmem:[%s15 + $0x8] sm:$0xff]
    %v2437 = vld [vmem:[%s15 + $0x10] sm:$0xff]
    %v2438 = vld [vmem:[%s15 + $0x18] sm:$0xff]
    %v2439 = vpack.c.bf16 %v2436, %v2435
    %v2440 = vpack.c.bf16 %v2438, %v2437
    %v2441 = vpack.c.bf16 %v2433, %v2433
    %v2442 = vld [vmem:[%s16] sm:$0xff]
    %v2443 = vld [vmem:[%s16 + $0x8] sm:$0xff]
    %v2444 = vld [vmem:[%s16 + $0x10] sm:$0xff]
    %v2445 = vld [vmem:[%s16 + $0x18] sm:$0xff]
    %v2446 = vpack.c.bf16 %v2443, %v2442
    %v2447 = vpack.c.bf16 %v2445, %v2444
    %v2449 = vsel %vm325, %v2441, 0
    %2451 = vmatprep.subr.bf16.mxu0 0
    %2452 = vmatpush1.bf16.msra.mxu0 %v2446
    %2453 = vmatprep.subr.bf16.mxu0 0
    %2454 = vmatpush1.bf16.msra.mxu0 %v2447
    %2455 = vmatprep.subr.bf16.mxu0 0
    %2456 = vmatpush1.bf16.msra.mxu0 0
    %2457 = vmatprep.subr.bf16.mxu0 0
    %2458 = vmatpush1.bf16.msra.mxu0 0
    %2459 = vmatprep.subr.bf16.mxu0 0
    %2460 = vmatpush1.bf16.msra.mxu0 0
    %2461 = vmatprep.subr.bf16.mxu0 0
    %2462 = vmatpush1.bf16.msra.mxu0 0
    %2463 = vmatprep.subr.bf16.mxu0 0
    %2464 = vmatpush1.bf16.msra.mxu0 0
    %2465 = vmatprep.subr.bf16.mxu0 0
    %2466 = vmatpush1.bf16.msra.mxu0 0
    %2467 = vmatprep.subr.bf16.mxu0 0
    %2468 = vmatpush1.bf16.msra.mxu0 0
    %2469 = vmatprep.subr.bf16.mxu0 0
    %2470 = vmatpush1.bf16.msra.mxu0 0
    %2471 = vmatprep.subr.bf16.mxu0 0
    %2472 = vmatpush1.bf16.msra.mxu0 0
    %2473 = vmatprep.subr.bf16.mxu0 0
    %2474 = vmatpush1.bf16.msra.mxu0 0
    %2475 = vmatprep.subr.bf16.mxu0 0
    %2476 = vmatpush1.bf16.msra.mxu0 0
    %2477 = vmatprep.subr.bf16.mxu0 0
    %2478 = vmatpush1.bf16.msra.mxu0 0
    %2479 = vmatprep.subr.bf16.mxu0 0
    %2480 = vmatpush1.bf16.msra.mxu0 0
    %2481 = vmatprep.subr.bf16.mxu0 0
    %2482 = vmatpush1.bf16.msra.mxu0 0
    %2483 = vmatprep.mubr.bf16.mxu0 0
    %2484 = vmatmul.mubr.bf16.gmra.mrb[0].mxu0 %v2449
    %v2485 = vpop.f32.mrb[0].mxu0
    %v2486 = vadd.f32 0.0, %v2485
    %v2487 = vpop.f32.mrb[0].mxu0
    %v2488 = vpop.f32.mrb[0].mxu0
    %v2489 = vpop.f32.mrb[0].mxu0
    %2490 = vdwg.mxu0
    %v2492 = vsel %vm325, %v2434, 0
    %2494 = vmatprep.subr.bf16.mxu0 0
    %2495 = vmatpush1.bf16.msra.mxu0 %v2439
    %2496 = vmatprep.subr.bf16.mxu0 0
    %2497 = vmatpush1.bf16.msra.mxu0 %v2440
    %2498 = vmatprep.subr.bf16.mxu0 0
    %2499 = vmatpush1.bf16.msra.mxu0 0
    %2500 = vmatprep.subr.bf16.mxu0 0
    %2501 = vmatpush1.bf16.msra.mxu0 0
    %2502 = vmatprep.subr.bf16.mxu0 0
    %2503 = vmatpush1.bf16.msra.mxu0 0
    %2504 = vmatprep.subr.bf16.mxu0 0
    %2505 = vmatpush1.bf16.msra.mxu0 0
    %2506 = vmatprep.subr.bf16.mxu0 0
    %2507 = vmatpush1.bf16.msra.mxu0 0
    %2508 = vmatprep.subr.bf16.mxu0 0
    %2509 = vmatpush1.bf16.msra.mxu0 0
    %2510 = vmatprep.subr.bf16.mxu0 0
    %2511 = vmatpush1.bf16.msra.mxu0 0
    %2512 = vmatprep.subr.bf16.mxu0 0
    %2513 = vmatpush1.bf16.msra.mxu0 0
    %2514 = vmatprep.subr.bf16.mxu0 0
    %2515 = vmatpush1.bf16.msra.mxu0 0
    %2516 = vmatprep.subr.bf16.mxu0 0
    %2517 = vmatpush1.bf16.msra.mxu0 0
    %2518 = vmatprep.subr.bf16.mxu0 0
    %2519 = vmatpush1.bf16.msra.mxu0 0
    %2520 = vmatprep.subr.bf16.mxu0 0
    %2521 = vmatpush1.bf16.msra.mxu0 0
    %2522 = vmatprep.subr.bf16.mxu0 0
    %2523 = vmatpush1.bf16.msra.mxu0 0
    %2524 = vmatprep.subr.bf16.mxu0 0
    %2525 = vmatpush1.bf16.msra.mxu0 0
    %2526 = vmatprep.mubr.bf16.mxu0 0
    %2527 = vmatmul.mubr.bf16.gmra.mrb[0].mxu0 %v2492
    %v2528 = vpop.f32.mrb[0].mxu0
    %v2529 = vadd.f32 %v2486, %v2528
    %v2530 = vpop.f32.mrb[0].mxu0
    %v2531 = vpop.f32.mrb[0].mxu0
    %v2532 = vpop.f32.mrb[0].mxu0
    %2533 = vdwg.mxu0
    %v2534 = vld [vmem:[%s5] sm:$0x3]
    %v2535 = vpack.c.bf16 %v2534, %v2534
    %v2536 = vld [vmem:[%s17] sm:$0xff]
    %v2537 = vpack.c.bf16 %v2536, %v2536
    %vm2538 = vcmask 64512
    %v2540 = vsel %vm2538, %v2535, 0
    %vm2542 = vcmask 1043456
    %v2544 = vsel %vm2542, %v2537, 0
    %2546 = vmatprep.subr.bf16.mxu0 0
    %2547 = vmatpush1.bf16.msra.mxu0 %v2544
    %2548 = vmatprep.subr.bf16.mxu0 0
    %2549 = vmatpush1.bf16.msra.mxu0 0
    %2550 = vmatprep.subr.bf16.mxu0 0
    %2551 = vmatpush1.bf16.msra.mxu0 0
    %2552 = vmatprep.subr.bf16.mxu0 0
    %2553 = vmatpush1.bf16.msra.mxu0 0
    %2554 = vmatprep.subr.bf16.mxu0 0
    %2555 = vmatpush1.bf16.msra.mxu0 0
    %2556 = vmatprep.subr.bf16.mxu0 0
    %2557 = vmatpush1.bf16.msra.mxu0 0
    %2558 = vmatprep.subr.bf16.mxu0 0
    %2559 = vmatpush1.bf16.msra.mxu0 0
    %2560 = vmatprep.subr.bf16.mxu0 0
    %2561 = vmatpush1.bf16.msra.mxu0 0
    %2562 = vmatprep.subr.bf16.mxu0 0
    %2563 = vmatpush1.bf16.msra.mxu0 0
    %2564 = vmatprep.subr.bf16.mxu0 0
    %2565 = vmatpush1.bf16.msra.mxu0 0
    %2566 = vmatprep.subr.bf16.mxu0 0
    %2567 = vmatpush1.bf16.msra.mxu0 0
    %2568 = vmatprep.subr.bf16.mxu0 0
    %2569 = vmatpush1.bf16.msra.mxu0 0
    %2570 = vmatprep.subr.bf16.mxu0 0
    %2571 = vmatpush1.bf16.msra.mxu0 0
    %2572 = vmatprep.subr.bf16.mxu0 0
    %2573 = vmatpush1.bf16.msra.mxu0 0
    %2574 = vmatprep.subr.bf16.mxu0 0
    %2575 = vmatpush1.bf16.msra.mxu0 0
    %2576 = vmatprep.subr.bf16.mxu0 0
    %2577 = vmatpush1.bf16.msra.mxu0 0
    %2578 = vmatprep.mubr.bf16.mxu0 0
    %2579 = vmatmul.mubr.bf16.gmra.mrb[0].mxu0 %v2540
    %v2580 = vpop.f32.mrb[0].mxu0
    %v2581 = vadd.f32 0.0, %v2580
    %v2582 = vpop.f32.mrb[0].mxu0
    %v2583 = vpop.f32.mrb[0].mxu0
    %v2584 = vpop.f32.mrb[0].mxu0
    %2585 = vdwg.mxu0
    %v2586 = vadd.f32 %v2529, %v2581
    %v2587 = vld [vmem:[%s18] sm:$0x1]
    %v2589 = vlaneseq
    %v2590 = vshrl.u32 %v2589, 7
    %v2591 = vsub.s32 0, %v2590
    %v2592 = vrot.slane %v2587, %v2591
    %v2594 = vadd.f32 %v2586, %v2592
    %v2595 = vmax.f32 %v2594, 0.0
    %v2596 = vpack.c.bf16 %v2595, %v2595
    %v2597 = vld [vmem:[%s19] sm:$0xff]
    %v2598 = vld [vmem:[%s19 + $0x8] sm:$0xff]
    %v2599 = vld [vmem:[%s19 + $0x10] sm:$0xff]
    %v2600 = vld [vmem:[%s19 + $0x18] sm:$0xff]
    %v2601 = vld [vmem:[%s19 + $0x20] sm:$0xff]
    %v2602 = vld [vmem:[%s19 + $0x28] sm:$0xff]
    %v2603 = vld [vmem:[%s19 + $0x30] sm:$0xff]
    %v2604 = vld [vmem:[%s19 + $0x38] sm:$0xff]
    %v2605 = vpack.c.bf16 %v2598, %v2597
    %v2606 = vpack.c.bf16 %v2600, %v2599
    %v2607 = vpack.c.bf16 %v2602, %v2601
    %v2608 = vpack.c.bf16 %v2604, %v2603
    %v2609 = vld [vmem:[%s20] sm:$0x1]
    %v2611 = vlaneseq
    %v2612 = vshrl.u32 %v2611, 7
    %v2613 = vsub.s32 0, %v2612
    %v2614 = vrot.slane %v2609, %v2613
    %vm2616 = vcmask 523264
    %v2618 = vsel %vm2616, %v2596, 0
    %2620 = vmatprep.subr.bf16.mxu0 0
    %2621 = vmatpush1.bf16.msra.mxu0 %v2605
    %2622 = vmatprep.subr.bf16.mxu0 0
    %2623 = vmatpush1.bf16.msra.mxu0 %v2606
    %2624 = vmatprep.subr.bf16.mxu0 0
    %2625 = vmatpush1.bf16.msra.mxu0 %v2607
    %2626 = vmatprep.subr.bf16.mxu0 0
    %2627 = vmatpush1.bf16.msra.mxu0 %v2608
    %2628 = vmatprep.subr.bf16.mxu0 0
    %2629 = vmatpush1.bf16.msra.mxu0 0
    %2630 = vmatprep.subr.bf16.mxu0 0
    %2631 = vmatpush1.bf16.msra.mxu0 0
    %2632 = vmatprep.subr.bf16.mxu0 0
    %2633 = vmatpush1.bf16.msra.mxu0 0
    %2634 = vmatprep.subr.bf16.mxu0 0
    %2635 = vmatpush1.bf16.msra.mxu0 0
    %2636 = vmatprep.subr.bf16.mxu0 0
    %2637 = vmatpush1.bf16.msra.mxu0 0
    %2638 = vmatprep.subr.bf16.mxu0 0
    %2639 = vmatpush1.bf16.msra.mxu0 0
    %2640 = vmatprep.subr.bf16.mxu0 0
    %2641 = vmatpush1.bf16.msra.mxu0 0
    %2642 = vmatprep.subr.bf16.mxu0 0
    %2643 = vmatpush1.bf16.msra.mxu0 0
    %2644 = vmatprep.subr.bf16.mxu0 0
    %2645 = vmatpush1.bf16.msra.mxu0 0
    %2646 = vmatprep.subr.bf16.mxu0 0
    %2647 = vmatpush1.bf16.msra.mxu0 0
    %2648 = vmatprep.subr.bf16.mxu0 0
    %2649 = vmatpush1.bf16.msra.mxu0 0
    %2650 = vmatprep.subr.bf16.mxu0 0
    %2651 = vmatpush1.bf16.msra.mxu0 0
    %2652 = vmatprep.mubr.bf16.mxu0 0
    %2653 = vmatmul.mubr.bf16.gmra.mrb[0].mxu0 %v2618
    %v2654 = vpop.f32.mrb[0].mxu0
    %v2655 = vadd.f32 %v2614, %v2654
    %v2656 = vpop.f32.mrb[0].mxu0
    %v2657 = vpop.f32.mrb[0].mxu0
    %v2658 = vpop.f32.mrb[0].mxu0
    %2659 = vdwg.mxu0
    %v2660 = vmax.f32 %v2655, 0.0
    %v2661 = vpack.c.bf16 %v2660, %v2660
    %v2662 = vld [vmem:[%s21] sm:$0xff]
    %v2663 = vld [vmem:[%s21 + $0x8] sm:$0xff]
    %v2664 = vld [vmem:[%s21 + $0x10] sm:$0xff]
    %v2665 = vld [vmem:[%s21 + $0x18] sm:$0xff]
    %v2666 = vld [vmem:[%s21 + $0x20] sm:$0xff]
    %v2667 = vld [vmem:[%s21 + $0x28] sm:$0xff]
    %v2668 = vld [vmem:[%s21 + $0x30] sm:$0xff]
    %v2669 = vld [vmem:[%s21 + $0x38] sm:$0xff]
    %v2670 = vpack.c.bf16 %v2663, %v2662
    %v2671 = vpack.c.bf16 %v2665, %v2664
    %v2672 = vpack.c.bf16 %v2667, %v2666
    %v2673 = vpack.c.bf16 %v2669, %v2668
    %s2674 = sld [smem:[#allocation2 + $0x3]]
    %v2675 = vstv %s2674
    %v2677 = vsel %vm2616, %v2661, 0
    %2679 = vmatprep.subr.bf16.mxu0 0
    %2680 = vmatpush1.bf16.msra.mxu0 %v2670
    %2681 = vmatprep.subr.bf16.mxu0 0
    %2682 = vmatpush1.bf16.msra.mxu0 %v2671
    %2683 = vmatprep.subr.bf16.mxu0 0
    %2684 = vmatpush1.bf16.msra.mxu0 %v2672
    %2685 = vmatprep.subr.bf16.mxu0 0
    %2686 = vmatpush1.bf16.msra.mxu0 %v2673
    %2687 = vmatprep.subr.bf16.mxu0 0
    %2688 = vmatpush1.bf16.msra.mxu0 0
    %2689 = vmatprep.subr.bf16.mxu0 0
    %2690 = vmatpush1.bf16.msra.mxu0 0
    %2691 = vmatprep.subr.bf16.mxu0 0
    %2692 = vmatpush1.bf16.msra.mxu0 0
    %2693 = vmatprep.subr.bf16.mxu0 0
    %2694 = vmatpush1.bf16.msra.mxu0 0
    %2695 = vmatprep.subr.bf16.mxu0 0
    %2696 = vmatpush1.bf16.msra.mxu0 0
    %2697 = vmatprep.subr.bf16.mxu0 0
    %2698 = vmatpush1.bf16.msra.mxu0 0
    %2699 = vmatprep.subr.bf16.mxu0 0
    %2700 = vmatpush1.bf16.msra.mxu0 0
    %2701 = vmatprep.subr.bf16.mxu0 0
    %2702 = vmatpush1.bf16.msra.mxu0 0
    %2703 = vmatprep.subr.bf16.mxu0 0
    %2704 = vmatpush1.bf16.msra.mxu0 0
    %2705 = vmatprep.subr.bf16.mxu0 0
    %2706 = vmatpush1.bf16.msra.mxu0 0
    %2707 = vmatprep.subr.bf16.mxu0 0
    %2708 = vmatpush1.bf16.msra.mxu0 0
    %2709 = vmatprep.subr.bf16.mxu0 0
    %2710 = vmatpush1.bf16.msra.mxu0 0
    %2711 = vmatprep.mubr.bf16.mxu0 0
    %2712 = vmatmul.mubr.bf16.gmra.mrb[0].mxu0 %v2677
    %v2713 = vpop.f32.mrb[0].mxu0
    %v2714 = vadd.f32 %v2675, %v2713
    %v2715 = vpop.f32.mrb[0].mxu0
    %v2716 = vpop.f32.mrb[0].mxu0
    %v2717 = vpop.f32.mrb[0].mxu0
    %2718 = vdwg.mxu0
    %vm2719 = vcmask 1024
    %2720 = vst.msk [vmem:[%s23] sm:$0x3] %vm2719, %v2714
    // Predicated region
    $region98: #{hiernet_forward.1} parent=1 // pred_check
      _
    $region99: #{hiernet_forward.1} parent=1 // pred_check_branch
      %2722 = sbr.rel (0) target = $region101
    $region100: #{hiernet_forward.1} parent=1 // pred_region
      _
    $region101: #{hiernet_forward.1} parent=1 // pred_fallthru
      _
    // Predicated region
    $region102: #{hiernet_forward.1} parent=1 // pred_check
      _
    $region103: #{hiernet_forward.1} parent=1 // pred_check_branch
      %2724 = sbr.rel (0) target = $region105
    $region104: #{hiernet_forward.1} parent=1 // pred_region
      _
    $region105: #{hiernet_forward.1} parent=1 // pred_fallthru
      _
    %2725 = vsyncpa [#allocation3], 1

</llo_original>
